<compile_context>
chip_gen: v6e
topology: v6e:2x2x1
jax: 0.10.0
libtpu: 0.0.40
codegen_flags: <defaults>
</compile_context>

<pallas_src>
import functools

import jax
import jax.numpy as jnp
from jax.experimental import pallas as pl
from jax.experimental.pallas import tpu as pltpu

NEG_SLOPE = 0.01   # nn.LeakyReLU default negative slope
EPS = 1e-6


def _leaky(x):
    return jnp.where(x >= 0, x, NEG_SLOPE * x)


def _rms(x, g):
    ms = jnp.mean(x * x, axis=-1, keepdims=True)
    return x * jax.lax.rsqrt(ms + EPS) * g


# ---------------------------------------------------------------------------
# Fused kernel: one grid step = one (batch, output-depth-plane).
#   xc_ref  : (H, W, C)           input plane d            (residual + priming)
#   xn_ref  : (H, W, C)           input plane min(d+1,D-1) (next h1 plane)
#   w1_ref  : (C, C2)   bf16      conv1 weight
#   w2_ref  : (9, 3*C2, C2) bf16  conv2 weight with the 3 kw taps folded into K
#   w3_ref  : (C2, C)   bf16      conv3 weight (no bias)
#   h1p_ref : (3, H+2, W+2, C2) bf16  carried h1 ring (zero H/W halo borders)
#   u_ref   : (H+2, W, 3*C2)   bf16  W-unfolded h1 plane (K = 3*C2)
# ---------------------------------------------------------------------------
def _resblock_fused_kernel(xc_ref, xn_ref, w1_ref, b1_ref, g1_ref, w2_ref,
                           b2_ref, g2_ref, w3_ref, o_ref, h1p_ref, u_ref,
                           *, D, H, W, C, C2):
    d = pl.program_id(1)
    bf16 = jnp.bfloat16

    def conv1_norm_act(x_plane):
        # (H, W, C) f32 -> (H, W, C2) bf16
        xin = x_plane.reshape(H * W, C).astype(bf16)
        h = jnp.dot(xin, w1_ref[...], preferred_element_type=jnp.float32)
        h = h + b1_ref[...]
        h = _leaky(_rms(h, g1_ref[...]))
        return h.reshape(H, W, C2).astype(bf16)

    def write_plane(slot, h3):
        # interior write; 1-voxel H/W halo borders stay zero (zeroed at d==0)
        h1p_ref[pl.ds(slot, 1), 1:H + 1, 1:W + 1, :] = h3.reshape(1, H, W, C2)

    # ---- stage 1: maintain the h1 ring (slot of plane p = (p+1) % 3) -----------
    @pl.when(d == 0)
    def _prime():
        # once per batch: zero ring (halo borders + the "plane -1" slot), then
        # prime h1 for planes 0 and 1.
        h1p_ref[...] = jnp.zeros_like(h1p_ref)
        write_plane(1, conv1_norm_act(xc_ref[...]))
        if D > 1:
            write_plane(2, conv1_norm_act(xn_ref[...]))

    @pl.when(d > 0)
    def _advance():
        slot = (d + 2) % 3            # slot of plane d+1

        @pl.when(d + 1 <= D - 1)
        def _():
            write_plane(slot, conv1_norm_act(xn_ref[...]))

        @pl.when(d + 1 > D - 1)
        def _():
            # past the end of the volume: depth zero-padding
            h1p_ref[pl.ds(slot, 1), 1:H + 1, 1:W + 1, :] = jnp.zeros(
                (1, H, W, C2), bf16)

    # ---- stage 2: 3x3x3 grouped conv (block-diag densified + kw-folded) --------
    # kw taps folded into the contraction dim: 9 matmuls with K = 3*C2 per plane.
    acc = jnp.zeros((H * W, C2), jnp.float32)
    for kd in range(3):               # plane d-1+kd lives in slot (d+kd) % 3
        slot = (d + kd) % 3
        for kw in range(3):           # 3 sublane-shift copies per plane
            u_ref[:, :, kw * C2:(kw + 1) * C2] = (
                h1p_ref[pl.ds(slot, 1), :, kw:kw + W, :].reshape(H + 2, W, C2))
        for kh in range(3):
            patch = u_ref[kh:kh + H, :, :].reshape(H * W, 3 * C2)
            acc = acc + jnp.dot(patch, w2_ref[kd * 3 + kh],
                                preferred_element_type=jnp.float32)
    acc = acc + b2_ref[...]
    h2 = _leaky(_rms(acc, g2_ref[...]))

    # ---- stage 3: conv3 (1x1x1, no bias) + residual add -------------------------
    y = jnp.dot(h2.astype(bf16), w3_ref[...], preferred_element_type=jnp.float32)
    y = y + xc_ref[...].reshape(H * W, C)
    o_ref[...] = y.reshape(H, W, C).astype(o_ref.dtype)


def resblock3d_forward(x_cl, p):
    B, D, H, W, C = x_cl.shape
    C2 = p["w1"].shape[1]

    # bf16 weights for the MXU; biases / norm gains stay f32.  Fold the 3 kw taps
    # of conv2 into the contraction dim: (27, C2, C2) -> (9, 3*C2, C2) with rows
    # ordered (kw, c_in).
    w1 = p["w1"].astype(jnp.bfloat16)
    w2f = p["w2"].reshape(9, 3 * C2, C2).astype(jnp.bfloat16)
    w3 = p["w3"].astype(jnp.bfloat16)

    # explicit VMEM budget from the buffer footprint (double-buffered pipeline
    # blocks + single-buffered scratches) with generous headroom.
    pipelined = (2 * H * W * C * 4               # x_cur + x_next planes (f32)
                 + C * C2 * 2 + 9 * 3 * C2 * C2 * 2 + C2 * C * 2   # bf16 weights
                 + 4 * C2 * 4                    # biases / gains
                 + H * W * C * 4)                # output plane
    scratch = 3 * (H + 2) * (W + 2) * C2 * 2 + (H + 2) * W * 3 * C2 * 2
    vmem_limit = int(min(112 << 20, max(4 * (2 * pipelined + scratch), 16 << 20)))

    kern = functools.partial(_resblock_fused_kernel, D=D, H=H, W=W, C=C, C2=C2)
    const = lambda shape: pl.BlockSpec(shape, lambda b, d: (0,) * len(shape))

    return pl.pallas_call(
        kern,
        out_shape=jax.ShapeDtypeStruct((B, D, H, W, C), jnp.float32),
        grid=(B, D),
        in_specs=[
            # plane d (residual + h1 priming)
            pl.BlockSpec((None, None, H, W, C), lambda b, d: (b, d, 0, 0, 0)),
            # plane d+1 (clamped; unused at the last step)
            pl.BlockSpec((None, None, H, W, C),
                         lambda b, d: (b, jnp.minimum(d + 1, D - 1), 0, 0, 0)),
            const((C, C2)),
            const((1, C2)),
            const((1, C2)),
            const((9, 3 * C2, C2)),
            const((1, C2)),
            const((1, C2)),
            const((C2, C)),
        ],
        out_specs=pl.BlockSpec((None, None, H, W, C),
                               lambda b, d: (b, d, 0, 0, 0)),
        scratch_shapes=[
            pltpu.VMEM((3, H + 2, W + 2, C2), jnp.bfloat16),   # carried h1 ring
            pltpu.VMEM((H + 2, W, 3 * C2), jnp.bfloat16),      # W-unfolded plane
        ],
        compiler_params=pltpu.CompilerParams(
            # d carries the h1 ring state -> must stay sequential ("arbitrary");
            # b is independent -> "parallel" for megacore (v7x) sharding.
            dimension_semantics=("parallel", "arbitrary"),
            vmem_limit_bytes=vmem_limit),
    )(x_cl, x_cl, w1, p["b1"], p["g1"], w2f, p["b2"], p["g2"], w3)


# ---------------------------------------------------------------------------
# Pure-JAX reference (same math, same bf16 matmul inputs / f32 accumulation).
# ---------------------------------------------------------------------------
def reference_forward(x_cl, p):
    bf = jnp.bfloat16
    f32 = jnp.float32
    B, D, H, W, C = x_cl.shape
    h = jnp.einsum("bdhwc,ck->bdhwk", x_cl.astype(bf), p["w1"].astype(bf),
                   preferred_element_type=f32) + p["b1"]
    h = _leaky(_rms(h, p["g1"]))
    hp = jnp.pad(h, ((0, 0), (1, 1), (1, 1), (1, 1), (0, 0)))
    acc = jnp.zeros(h.shape, f32)
    for kd in range(3):
        for kh in range(3):
            for kw in range(3):
                patch = hp[:, kd:kd + D, kh:kh + H, kw:kw + W, :]
                acc = acc + jnp.einsum(
                    "bdhwc,ck->bdhwk", patch.astype(bf),
                    p["w2"][kd * 9 + kh * 3 + kw].astype(bf),
                    preferred_element_type=f32)
    acc = acc + p["b2"]
    y = _leaky(_rms(acc, p["g2"]))
    return jnp.einsum("bdhwc,ck->bdhwk", y.astype(bf), p["w3"].astype(bf),
                      preferred_element_type=f32) + x_cl


def make_params(key, ch, total_res_blocks):
    C, C2 = ch, 2 * ch
    grp = 16
    n_grps = C2 // grp
    scale = total_res_blocks ** (-0.25)
    k1, k2, k3 = jax.random.split(key, 3)

    # conv1: kaiming-uniform-like bound, scaled; zero bias (channel-last (Cin, Cout))
    bound1 = (6.0 / C) ** 0.5
    w1 = scale * jax.random.uniform(k1, (C, C2), jnp.float32, -bound1, bound1)
    b1 = jnp.zeros((1, C2), jnp.float32)
    g1 = jnp.ones((1, C2), jnp.float32)

    # conv2: grouped 3x3x3 -> block-diagonal dense weight, shape (27, C2, C2).
    # (kept grouped semantically; densified only because C2 is tiny here)
    bound2 = (6.0 / (grp * 27)) ** 0.5
    w2g = scale * jax.random.uniform(
        k2, (27, n_grps, grp, grp), jnp.float32, -bound2, bound2)
    w2 = jnp.zeros((27, C2, C2), jnp.float32)
    for g in range(n_grps):
        w2 = w2.at[:, g * grp:(g + 1) * grp, g * grp:(g + 1) * grp].set(w2g[:, g])
    b2 = jnp.zeros((1, C2), jnp.float32)
    g2 = jnp.ones((1, C2), jnp.float32)

    # conv3: zero-init in the original module (making the block an identity);
    # use small deterministic random values here so the kernel path is exercised.
    bound3 = (6.0 / C2) ** 0.5
    w3 = 0.1 * jax.random.uniform(k3, (C2, C), jnp.float32, -bound3, bound3)

    return dict(w1=w1, b1=b1, g1=g1, w2=w2, b2=b2, g2=g2, w3=w3)


if __name__ == "__main__":
    key = jax.random.PRNGKey(0)
    kparam, kx = jax.random.split(key)

    B, ch, D, H, W = 2, 16, 4, 8, 8          # PyTorch input would be (B, ch, D, H, W)
    total_res_blocks = 4

    params = make_params(kparam, ch, total_res_blocks)

    x_ncdhw = jax.random.normal(kx, (B, ch, D, H, W), jnp.float32)   # NCDHW
    x_cl = jnp.transpose(x_ncdhw, (0, 2, 3, 4, 1))                   # (B, D, H, W, C)

    out_cl = jax.jit(resblock3d_forward)(x_cl, params)
    jax.block_until_ready(out_cl)
    out_ncdhw = jnp.transpose(out_cl, (0, 4, 1, 2, 3))               # back to NCDHW

    ref_cl = reference_forward(x_cl, params)
    assert out_ncdhw.shape == (B, ch, D, H, W)
    # tolerance accounts for bf16 MXU inputs + different f32 reduction order
    err = float(jnp.max(jnp.abs(out_cl - ref_cl)))
    assert jnp.allclose(out_cl, ref_cl, atol=5e-3, rtol=5e-3), err

    print("KERNEL_OK")
</pallas_src>

<mosaic_0001>
module attributes {stable_mosaic.version = 11 : i64} {
  func.func @_resblock_fused_kernel(%arg0: i32, %arg1: i32, %arg2: memref<1x1x8x8x16xf32, #tpu.memory_space<vmem>>, %arg3: memref<1x1x8x8x16xf32, #tpu.memory_space<vmem>>, %arg4: memref<16x32xbf16, #tpu.memory_space<vmem>>, %arg5: memref<1x32xf32, #tpu.memory_space<vmem>>, %arg6: memref<1x32xf32, #tpu.memory_space<vmem>>, %arg7: memref<9x96x32xbf16, #tpu.memory_space<vmem>>, %arg8: memref<1x32xf32, #tpu.memory_space<vmem>>, %arg9: memref<1x32xf32, #tpu.memory_space<vmem>>, %arg10: memref<32x16xbf16, #tpu.memory_space<vmem>>, %arg11: memref<1x1x8x8x16xf32, #tpu.memory_space<vmem>>, %arg12: memref<3x10x10x32xbf16, #tpu.memory_space<vmem>>, %arg13: memref<10x8x96xbf16, #tpu.memory_space<vmem>>) attributes {dimension_semantics = [#tpu.dimension_semantics<parallel>, #tpu.dimension_semantics<arbitrary>], iteration_bounds = array<i64: 2, 4>, scalar_prefetch = 0 : i64, scratch_operands = 2 : i64, tpu.core_type = #tpu.core_type<tc>, window_params = [{transform_indices = @transform_0, window_bounds = array<i64: 1, 1, 8, 8, 16>}, {transform_indices = @transform_1, window_bounds = array<i64: 1, 1, 8, 8, 16>}, {pipeline_mode = #tpu.pipeline_mode<synchronous>, transform_indices = @transform_2, window_bounds = array<i64: 16, 32>}, {pipeline_mode = #tpu.pipeline_mode<synchronous>, transform_indices = @transform_3, window_bounds = array<i64: 1, 32>}, {pipeline_mode = #tpu.pipeline_mode<synchronous>, transform_indices = @transform_4, window_bounds = array<i64: 1, 32>}, {pipeline_mode = #tpu.pipeline_mode<synchronous>, transform_indices = @transform_5, window_bounds = array<i64: 9, 96, 32>}, {pipeline_mode = #tpu.pipeline_mode<synchronous>, transform_indices = @transform_6, window_bounds = array<i64: 1, 32>}, {pipeline_mode = #tpu.pipeline_mode<synchronous>, transform_indices = @transform_7, window_bounds = array<i64: 1, 32>}, {pipeline_mode = #tpu.pipeline_mode<synchronous>, transform_indices = @transform_8, window_bounds = array<i64: 32, 16>}, {transform_indices = @transform_9, window_bounds = array<i64: 1, 1, 8, 8, 16>}]} {
    %c0_i32 = arith.constant 0 : i32
    %0 = arith.cmpi eq, %arg1, %c0_i32 : i32
    %1 = arith.extui %0 : i1 to i32
    %c0_i32_0 = arith.constant 0 : i32
    %2 = arith.cmpi ne, %1, %c0_i32_0 : i32
    scf.if %2 {
      %cst_149 = arith.constant 0.000000e+00 : bf16
      %162 = vector.broadcast %cst_149 : bf16 to vector<3x10x10x32xbf16>
      %c0_150 = arith.constant 0 : index
      %c0_151 = arith.constant 0 : index
      %c0_152 = arith.constant 0 : index
      %c0_153 = arith.constant 0 : index
      %163 = vector.load %arg12[%c0_150, %c0_151, %c0_152, %c0_153] : memref<3x10x10x32xbf16, #tpu.memory_space<vmem>>, vector<3x10x10x32xbf16>
      tpu.vector_store %arg12[%c0_150, %c0_151, %c0_152, %c0_153], %162 {strides = array<i32>} : memref<3x10x10x32xbf16, #tpu.memory_space<vmem>>, vector<3x10x10x32xbf16>,
      %c0_154 = arith.constant 0 : index
      %c0_155 = arith.constant 0 : index
      %c0_156 = arith.constant 0 : index
      %c0_157 = arith.constant 0 : index
      %c0_158 = arith.constant 0 : index
      %164 = vector.load %arg2[%c0_154, %c0_155, %c0_156, %c0_157, %c0_158] : memref<1x1x8x8x16xf32, #tpu.memory_space<vmem>>, vector<1x1x8x8x16xf32>
      %165 = vector.shape_cast %164 : vector<1x1x8x8x16xf32> to vector<8x8x16xf32>
      %166 = vector.shape_cast %165 : vector<8x8x16xf32> to vector<64x16xf32>
      %167 = arith.truncf %166 : vector<64x16xf32> to vector<64x16xbf16>
      %c0_159 = arith.constant 0 : index
      %c0_160 = arith.constant 0 : index
      %168 = vector.load %arg4[%c0_159, %c0_160] : memref<16x32xbf16, #tpu.memory_space<vmem>>, vector<16x32xbf16>
      %cst_161 = arith.constant dense<0.000000e+00> : vector<64x32xf32>
      %169 = tpu.matmul %167, %168, %cst_161 {dimension_numbers = #tpu.dot_dimension_numbers<[1], [0], [0], [1], [0, 0, 1, 1], [], []>} : vector<64x16xbf16>, vector<16x32xbf16>, vector<64x32xf32> -> vector<64x32xf32>
      %c0_162 = arith.constant 0 : index
      %c0_163 = arith.constant 0 : index
      %170 = vector.load %arg5[%c0_162, %c0_163] : memref<1x32xf32, #tpu.memory_space<vmem>>, vector<1x32xf32>
      %171 = vector.broadcast %170 : vector<1x32xf32> to vector<64x32xf32>
      %172 = arith.addf %169, %171 : vector<64x32xf32>
      %c0_164 = arith.constant 0 : index
      %c0_165 = arith.constant 0 : index
      %173 = vector.load %arg6[%c0_164, %c0_165] : memref<1x32xf32, #tpu.memory_space<vmem>>, vector<1x32xf32>
      %174 = arith.mulf %172, %172 : vector<64x32xf32>
      %cst_166 = arith.constant dense<0.000000e+00> : vector<64xf32>
      %175 = vector.multi_reduction <add>, %174, %cst_166 [1] : vector<64x32xf32> to vector<64xf32>
      %176 = vector.shape_cast %175 : vector<64xf32> to vector<64x1xf32>
      %cst_167 = arith.constant 3.200000e+01 : f32
      %177 = vector.broadcast %cst_167 : f32 to vector<64x1xf32>
      %178 = arith.divf %176, %177 : vector<64x1xf32>
      %cst_168 = arith.constant 9.99999997E-7 : f32
      %179 = vector.broadcast %cst_168 : f32 to vector<64x1xf32>
      %180 = arith.addf %178, %179 : vector<64x1xf32>
      %181 = math.rsqrt %180 : vector<64x1xf32>
      %182 = vector.broadcast %181 : vector<64x1xf32> to vector<64x32xf32>
      %183 = arith.mulf %172, %182 : vector<64x32xf32>
      %184 = vector.broadcast %173 : vector<1x32xf32> to vector<64x32xf32>
      %185 = arith.mulf %183, %184 : vector<64x32xf32>
      %cst_169 = arith.constant 0.000000e+00 : f32
      %186 = vector.broadcast %cst_169 : f32 to vector<64x32xf32>
      %187 = arith.cmpf oge, %185, %186 : vector<64x32xf32>
      %cst_170 = arith.constant 0.00999999977 : f32
      %188 = vector.broadcast %cst_170 : f32 to vector<64x32xf32>
      %189 = arith.mulf %188, %185 : vector<64x32xf32>
      %190 = arith.select %187, %185, %189 : vector<64x32xi1>, vector<64x32xf32>
      %191 = vector.shape_cast %190 : vector<64x32xf32> to vector<8x8x32xf32>
      %192 = arith.truncf %191 : vector<8x8x32xf32> to vector<8x8x32xbf16>
      %193 = vector.shape_cast %192 : vector<8x8x32xbf16> to vector<1x8x8x32xbf16>
      %c1_171 = arith.constant 1 : index
      %c1_172 = arith.constant 1 : index
      %c1_173 = arith.constant 1 : index
      %c0_174 = arith.constant 0 : index
      %194 = vector.load %arg12[%c1_171, %c1_172, %c1_173, %c0_174] : memref<3x10x10x32xbf16, #tpu.memory_space<vmem>>, vector<1x8x8x32xbf16>
      tpu.vector_store %arg12[%c1_171, %c1_172, %c1_173, %c0_174], %193 {strides = array<i32>} : memref<3x10x10x32xbf16, #tpu.memory_space<vmem>>, vector<1x8x8x32xbf16>,
      %c0_175 = arith.constant 0 : index
      %c0_176 = arith.constant 0 : index
      %c0_177 = arith.constant 0 : index
      %c0_178 = arith.constant 0 : index
      %c0_179 = arith.constant 0 : index
      %195 = vector.load %arg3[%c0_175, %c0_176, %c0_177, %c0_178, %c0_179] : memref<1x1x8x8x16xf32, #tpu.memory_space<vmem>>, vector<1x1x8x8x16xf32>
      %196 = vector.shape_cast %195 : vector<1x1x8x8x16xf32> to vector<8x8x16xf32>
      %197 = vector.shape_cast %196 : vector<8x8x16xf32> to vector<64x16xf32>
      %198 = arith.truncf %197 : vector<64x16xf32> to vector<64x16xbf16>
      %c0_180 = arith.constant 0 : index
      %c0_181 = arith.constant 0 : index
      %199 = vector.load %arg4[%c0_180, %c0_181] : memref<16x32xbf16, #tpu.memory_space<vmem>>, vector<16x32xbf16>
      %cst_182 = arith.constant dense<0.000000e+00> : vector<64x32xf32>
      %200 = tpu.matmul %198, %199, %cst_182 {dimension_numbers = #tpu.dot_dimension_numbers<[1], [0], [0], [1], [0, 0, 1, 1], [], []>} : vector<64x16xbf16>, vector<16x32xbf16>, vector<64x32xf32> -> vector<64x32xf32>
      %c0_183 = arith.constant 0 : index
      %c0_184 = arith.constant 0 : index
      %201 = vector.load %arg5[%c0_183, %c0_184] : memref<1x32xf32, #tpu.memory_space<vmem>>, vector<1x32xf32>
      %202 = vector.broadcast %201 : vector<1x32xf32> to vector<64x32xf32>
      %203 = arith.addf %200, %202 : vector<64x32xf32>
      %c0_185 = arith.constant 0 : index
      %c0_186 = arith.constant 0 : index
      %204 = vector.load %arg6[%c0_185, %c0_186] : memref<1x32xf32, #tpu.memory_space<vmem>>, vector<1x32xf32>
      %205 = arith.mulf %203, %203 : vector<64x32xf32>
      %cst_187 = arith.constant dense<0.000000e+00> : vector<64xf32>
      %206 = vector.multi_reduction <add>, %205, %cst_187 [1] : vector<64x32xf32> to vector<64xf32>
      %207 = vector.shape_cast %206 : vector<64xf32> to vector<64x1xf32>
      %cst_188 = arith.constant 3.200000e+01 : f32
      %208 = vector.broadcast %cst_188 : f32 to vector<64x1xf32>
      %209 = arith.divf %207, %208 : vector<64x1xf32>
      %cst_189 = arith.constant 9.99999997E-7 : f32
      %210 = vector.broadcast %cst_189 : f32 to vector<64x1xf32>
      %211 = arith.addf %209, %210 : vector<64x1xf32>
      %212 = math.rsqrt %211 : vector<64x1xf32>
      %213 = vector.broadcast %212 : vector<64x1xf32> to vector<64x32xf32>
      %214 = arith.mulf %203, %213 : vector<64x32xf32>
      %215 = vector.broadcast %204 : vector<1x32xf32> to vector<64x32xf32>
      %216 = arith.mulf %214, %215 : vector<64x32xf32>
      %cst_190 = arith.constant 0.000000e+00 : f32
      %217 = vector.broadcast %cst_190 : f32 to vector<64x32xf32>
      %218 = arith.cmpf oge, %216, %217 : vector<64x32xf32>
      %cst_191 = arith.constant 0.00999999977 : f32
      %219 = vector.broadcast %cst_191 : f32 to vector<64x32xf32>
      %220 = arith.mulf %219, %216 : vector<64x32xf32>
      %221 = arith.select %218, %216, %220 : vector<64x32xi1>, vector<64x32xf32>
      %222 = vector.shape_cast %221 : vector<64x32xf32> to vector<8x8x32xf32>
      %223 = arith.truncf %222 : vector<8x8x32xf32> to vector<8x8x32xbf16>
      %224 = vector.shape_cast %223 : vector<8x8x32xbf16> to vector<1x8x8x32xbf16>
      %c2_192 = arith.constant 2 : index
      %c1_193 = arith.constant 1 : index
      %c1_194 = arith.constant 1 : index
      %c0_195 = arith.constant 0 : index
      %225 = vector.load %arg12[%c2_192, %c1_193, %c1_194, %c0_195] : memref<3x10x10x32xbf16, #tpu.memory_space<vmem>>, vector<1x8x8x32xbf16>
      tpu.vector_store %arg12[%c2_192, %c1_193, %c1_194, %c0_195], %224 {strides = array<i32>} : memref<3x10x10x32xbf16, #tpu.memory_space<vmem>>, vector<1x8x8x32xbf16>,
    } else {
    }
    %c0_i32_1 = arith.constant 0 : i32
    %3 = arith.cmpi sgt, %arg1, %c0_i32_1 : i32
    %4 = arith.extui %3 : i1 to i32
    %c0_i32_2 = arith.constant 0 : i32
    %5 = arith.cmpi ne, %4, %c0_i32_2 : i32
    scf.if %5 {
      %c2_i32_149 = arith.constant 2 : i32
      %162 = arith.addi %arg1, %c2_i32_149 : i32
      %c3_i32_150 = arith.constant 3 : i32
      %c0_i32_151 = arith.constant 0 : i32
      %163 = arith.cmpi eq, %c3_i32_150, %c0_i32_151 : i32
      %c1_i32_152 = arith.constant 1 : i32
      %164 = arith.select %163, %c1_i32_152, %c3_i32_150 : i32
      %165 = arith.remsi %162, %164 : i32
      %c0_i32_153 = arith.constant 0 : i32
      %166 = arith.cmpi ne, %165, %c0_i32_153 : i32
      %c0_i32_154 = arith.constant 0 : i32
      %167 = arith.cmpi slt, %165, %c0_i32_154 : i32
      %c0_i32_155 = arith.constant 0 : i32
      %168 = arith.cmpi slt, %164, %c0_i32_155 : i32
      %169 = arith.xori %167, %168 : i1
      %170 = arith.andi %169, %166 : i1
      %171 = arith.addi %165, %164 : i32
      %172 = arith.select %170, %171, %165 : i32
      %c1_i32_156 = arith.constant 1 : i32
      %173 = arith.addi %arg1, %c1_i32_156 : i32
      %c3_i32_157 = arith.constant 3 : i32
      %174 = arith.cmpi sle, %173, %c3_i32_157 : i32
      %175 = arith.extui %174 : i1 to i32
      %c0_i32_158 = arith.constant 0 : i32
      %176 = arith.cmpi ne, %175, %c0_i32_158 : i32
      scf.if %176 {
        %c0_162 = arith.constant 0 : index
        %c0_163 = arith.constant 0 : index
        %c0_164 = arith.constant 0 : index
        %c0_165 = arith.constant 0 : index
        %c0_166 = arith.constant 0 : index
        %181 = vector.load %arg3[%c0_162, %c0_163, %c0_164, %c0_165, %c0_166] : memref<1x1x8x8x16xf32, #tpu.memory_space<vmem>>, vector<1x1x8x8x16xf32>
        %182 = vector.shape_cast %181 : vector<1x1x8x8x16xf32> to vector<8x8x16xf32>
        %183 = vector.shape_cast %182 : vector<8x8x16xf32> to vector<64x16xf32>
        %184 = arith.truncf %183 : vector<64x16xf32> to vector<64x16xbf16>
        %c0_167 = arith.constant 0 : index
        %c0_168 = arith.constant 0 : index
        %185 = vector.load %arg4[%c0_167, %c0_168] : memref<16x32xbf16, #tpu.memory_space<vmem>>, vector<16x32xbf16>
        %cst_169 = arith.constant dense<0.000000e+00> : vector<64x32xf32>
        %186 = tpu.matmul %184, %185, %cst_169 {dimension_numbers = #tpu.dot_dimension_numbers<[1], [0], [0], [1], [0, 0, 1, 1], [], []>} : vector<64x16xbf16>, vector<16x32xbf16>, vector<64x32xf32> -> vector<64x32xf32>
        %c0_170 = arith.constant 0 : index
        %c0_171 = arith.constant 0 : index
        %187 = vector.load %arg5[%c0_170, %c0_171] : memref<1x32xf32, #tpu.memory_space<vmem>>, vector<1x32xf32>
        %188 = vector.broadcast %187 : vector<1x32xf32> to vector<64x32xf32>
        %189 = arith.addf %186, %188 : vector<64x32xf32>
        %c0_172 = arith.constant 0 : index
        %c0_173 = arith.constant 0 : index
        %190 = vector.load %arg6[%c0_172, %c0_173] : memref<1x32xf32, #tpu.memory_space<vmem>>, vector<1x32xf32>
        %191 = arith.mulf %189, %189 : vector<64x32xf32>
        %cst_174 = arith.constant dense<0.000000e+00> : vector<64xf32>
        %192 = vector.multi_reduction <add>, %191, %cst_174 [1] : vector<64x32xf32> to vector<64xf32>
        %193 = vector.shape_cast %192 : vector<64xf32> to vector<64x1xf32>
        %cst_175 = arith.constant 3.200000e+01 : f32
        %194 = vector.broadcast %cst_175 : f32 to vector<64x1xf32>
        %195 = arith.divf %193, %194 : vector<64x1xf32>
        %cst_176 = arith.constant 9.99999997E-7 : f32
        %196 = vector.broadcast %cst_176 : f32 to vector<64x1xf32>
        %197 = arith.addf %195, %196 : vector<64x1xf32>
        %198 = math.rsqrt %197 : vector<64x1xf32>
        %199 = vector.broadcast %198 : vector<64x1xf32> to vector<64x32xf32>
        %200 = arith.mulf %189, %199 : vector<64x32xf32>
        %201 = vector.broadcast %190 : vector<1x32xf32> to vector<64x32xf32>
        %202 = arith.mulf %200, %201 : vector<64x32xf32>
        %cst_177 = arith.constant 0.000000e+00 : f32
        %203 = vector.broadcast %cst_177 : f32 to vector<64x32xf32>
        %204 = arith.cmpf oge, %202, %203 : vector<64x32xf32>
        %cst_178 = arith.constant 0.00999999977 : f32
        %205 = vector.broadcast %cst_178 : f32 to vector<64x32xf32>
        %206 = arith.mulf %205, %202 : vector<64x32xf32>
        %207 = arith.select %204, %202, %206 : vector<64x32xi1>, vector<64x32xf32>
        %208 = vector.shape_cast %207 : vector<64x32xf32> to vector<8x8x32xf32>
        %209 = arith.truncf %208 : vector<8x8x32xf32> to vector<8x8x32xbf16>
        %210 = vector.shape_cast %209 : vector<8x8x32xbf16> to vector<1x8x8x32xbf16>
        %211 = arith.index_cast %172 : i32 to index
        %c1_179 = arith.constant 1 : index
        %c1_180 = arith.constant 1 : index
        %c0_181 = arith.constant 0 : index
        %212 = vector.load %arg12[%211, %c1_179, %c1_180, %c0_181] : memref<3x10x10x32xbf16, #tpu.memory_space<vmem>>, vector<1x8x8x32xbf16>
        tpu.vector_store %arg12[%211, %c1_179, %c1_180, %c0_181], %210 {strides = array<i32>} : memref<3x10x10x32xbf16, #tpu.memory_space<vmem>>, vector<1x8x8x32xbf16>,
      } else {
      }
      %c1_i32_159 = arith.constant 1 : i32
      %177 = arith.addi %arg1, %c1_i32_159 : i32
      %c3_i32_160 = arith.constant 3 : i32
      %178 = arith.cmpi sgt, %177, %c3_i32_160 : i32
      %179 = arith.extui %178 : i1 to i32
      %c0_i32_161 = arith.constant 0 : i32
      %180 = arith.cmpi ne, %179, %c0_i32_161 : i32
      scf.if %180 {
        %cst_162 = arith.constant 0.000000e+00 : bf16
        %181 = vector.broadcast %cst_162 : bf16 to vector<1x8x8x32xbf16>
        %182 = arith.index_cast %172 : i32 to index
        %c1_163 = arith.constant 1 : index
        %c1_164 = arith.constant 1 : index
        %c0_165 = arith.constant 0 : index
        %183 = vector.load %arg12[%182, %c1_163, %c1_164, %c0_165] : memref<3x10x10x32xbf16, #tpu.memory_space<vmem>>, vector<1x8x8x32xbf16>
        tpu.vector_store %arg12[%182, %c1_163, %c1_164, %c0_165], %181 {strides = array<i32>} : memref<3x10x10x32xbf16, #tpu.memory_space<vmem>>, vector<1x8x8x32xbf16>,
      } else {
      }
    } else {
    }
    %cst = arith.constant 0.000000e+00 : f32
    %6 = vector.broadcast %cst : f32 to vector<64x32xf32>
    %c0_i32_3 = arith.constant 0 : i32
    %7 = arith.addi %arg1, %c0_i32_3 : i32
    %c3_i32 = arith.constant 3 : i32
    %c0_i32_4 = arith.constant 0 : i32
    %8 = arith.cmpi eq, %c3_i32, %c0_i32_4 : i32
    %c1_i32 = arith.constant 1 : i32
    %9 = arith.select %8, %c1_i32, %c3_i32 : i32
    %10 = arith.remsi %7, %9 : i32
    %c0_i32_5 = arith.constant 0 : i32
    %11 = arith.cmpi ne, %10, %c0_i32_5 : i32
    %c0_i32_6 = arith.constant 0 : i32
    %12 = arith.cmpi slt, %10, %c0_i32_6 : i32
    %c0_i32_7 = arith.constant 0 : i32
    %13 = arith.cmpi slt, %9, %c0_i32_7 : i32
    %14 = arith.xori %12, %13 : i1
    %15 = arith.andi %14, %11 : i1
    %16 = arith.addi %10, %9 : i32
    %17 = arith.select %15, %16, %10 : i32
    %18 = arith.index_cast %17 : i32 to index
    %c0 = arith.constant 0 : index
    %c0_8 = arith.constant 0 : index
    %c0_9 = arith.constant 0 : index
    %19 = vector.load %arg12[%18, %c0, %c0_8, %c0_9] : memref<3x10x10x32xbf16, #tpu.memory_space<vmem>>, vector<1x10x8x32xbf16>
    %20 = vector.shape_cast %19 : vector<1x10x8x32xbf16> to vector<10x8x32xbf16>
    %c0_10 = arith.constant 0 : index
    %c0_11 = arith.constant 0 : index
    %c0_12 = arith.constant 0 : index
    %21 = vector.load %arg13[%c0_10, %c0_11, %c0_12] : memref<10x8x96xbf16, #tpu.memory_space<vmem>>, vector<10x8x32xbf16>
    tpu.vector_store %arg13[%c0_10, %c0_11, %c0_12], %20 {strides = array<i32>} : memref<10x8x96xbf16, #tpu.memory_space<vmem>>, vector<10x8x32xbf16>,
    %22 = arith.index_cast %17 : i32 to index
    %c0_13 = arith.constant 0 : index
    %c1 = arith.constant 1 : index
    %c0_14 = arith.constant 0 : index
    %23 = vector.load %arg12[%22, %c0_13, %c1, %c0_14] : memref<3x10x10x32xbf16, #tpu.memory_space<vmem>>, vector<1x10x8x32xbf16>
    %24 = vector.shape_cast %23 : vector<1x10x8x32xbf16> to vector<10x8x32xbf16>
    %c0_15 = arith.constant 0 : index
    %c0_16 = arith.constant 0 : index
    %c32 = arith.constant 32 : index
    %25 = vector.load %arg13[%c0_15, %c0_16, %c32] : memref<10x8x96xbf16, #tpu.memory_space<vmem>>, vector<10x8x32xbf16>
    tpu.vector_store %arg13[%c0_15, %c0_16, %c32], %24 {strides = array<i32>} : memref<10x8x96xbf16, #tpu.memory_space<vmem>>, vector<10x8x32xbf16>,
    %26 = arith.index_cast %17 : i32 to index
    %c0_17 = arith.constant 0 : index
    %c2 = arith.constant 2 : index
    %c0_18 = arith.constant 0 : index
    %27 = vector.load %arg12[%26, %c0_17, %c2, %c0_18] : memref<3x10x10x32xbf16, #tpu.memory_space<vmem>>, vector<1x10x8x32xbf16>
    %28 = vector.shape_cast %27 : vector<1x10x8x32xbf16> to vector<10x8x32xbf16>
    %c0_19 = arith.constant 0 : index
    %c0_20 = arith.constant 0 : index
    %c64 = arith.constant 64 : index
    %29 = vector.load %arg13[%c0_19, %c0_20, %c64] : memref<10x8x96xbf16, #tpu.memory_space<vmem>>, vector<10x8x32xbf16>
    tpu.vector_store %arg13[%c0_19, %c0_20, %c64], %28 {strides = array<i32>} : memref<10x8x96xbf16, #tpu.memory_space<vmem>>, vector<10x8x32xbf16>,
    %c0_21 = arith.constant 0 : index
    %c0_22 = arith.constant 0 : index
    %c0_23 = arith.constant 0 : index
    %30 = vector.load %arg13[%c0_21, %c0_22, %c0_23] : memref<10x8x96xbf16, #tpu.memory_space<vmem>>, vector<8x8x96xbf16>
    %31 = vector.shape_cast %30 : vector<8x8x96xbf16> to vector<64x96xbf16>
    %c0_24 = arith.constant 0 : index
    %c0_25 = arith.constant 0 : index
    %c0_26 = arith.constant 0 : index
    %32 = vector.load %arg7[%c0_24, %c0_25, %c0_26] : memref<9x96x32xbf16, #tpu.memory_space<vmem>>, vector<1x96x32xbf16>
    %33 = vector.shape_cast %32 : vector<1x96x32xbf16> to vector<96x32xbf16>
    %cst_27 = arith.constant dense<0.000000e+00> : vector<64x32xf32>
    %34 = tpu.matmul %31, %33, %cst_27 {dimension_numbers = #tpu.dot_dimension_numbers<[1], [0], [0], [1], [0, 0, 1, 1], [], []>} : vector<64x96xbf16>, vector<96x32xbf16>, vector<64x32xf32> -> vector<64x32xf32>
    %35 = arith.addf %6, %34 : vector<64x32xf32>
    %c1_28 = arith.constant 1 : index
    %c0_29 = arith.constant 0 : index
    %c0_30 = arith.constant 0 : index
    %36 = vector.load %arg13[%c1_28, %c0_29, %c0_30] : memref<10x8x96xbf16, #tpu.memory_space<vmem>>, vector<8x8x96xbf16>
    %37 = vector.shape_cast %36 : vector<8x8x96xbf16> to vector<64x96xbf16>
    %c1_31 = arith.constant 1 : index
    %c0_32 = arith.constant 0 : index
    %c0_33 = arith.constant 0 : index
    %38 = vector.load %arg7[%c1_31, %c0_32, %c0_33] : memref<9x96x32xbf16, #tpu.memory_space<vmem>>, vector<1x96x32xbf16>
    %39 = vector.shape_cast %38 : vector<1x96x32xbf16> to vector<96x32xbf16>
    %cst_34 = arith.constant dense<0.000000e+00> : vector<64x32xf32>
    %40 = tpu.matmul %37, %39, %cst_34 {dimension_numbers = #tpu.dot_dimension_numbers<[1], [0], [0], [1], [0, 0, 1, 1], [], []>} : vector<64x96xbf16>, vector<96x32xbf16>, vector<64x32xf32> -> vector<64x32xf32>
    %41 = arith.addf %35, %40 : vector<64x32xf32>
    %c2_35 = arith.constant 2 : index
    %c0_36 = arith.constant 0 : index
    %c0_37 = arith.constant 0 : index
    %42 = vector.load %arg13[%c2_35, %c0_36, %c0_37] : memref<10x8x96xbf16, #tpu.memory_space<vmem>>, vector<8x8x96xbf16>
    %43 = vector.shape_cast %42 : vector<8x8x96xbf16> to vector<64x96xbf16>
    %c2_38 = arith.constant 2 : index
    %c0_39 = arith.constant 0 : index
    %c0_40 = arith.constant 0 : index
    %44 = vector.load %arg7[%c2_38, %c0_39, %c0_40] : memref<9x96x32xbf16, #tpu.memory_space<vmem>>, vector<1x96x32xbf16>
    %45 = vector.shape_cast %44 : vector<1x96x32xbf16> to vector<96x32xbf16>
    %cst_41 = arith.constant dense<0.000000e+00> : vector<64x32xf32>
    %46 = tpu.matmul %43, %45, %cst_41 {dimension_numbers = #tpu.dot_dimension_numbers<[1], [0], [0], [1], [0, 0, 1, 1], [], []>} : vector<64x96xbf16>, vector<96x32xbf16>, vector<64x32xf32> -> vector<64x32xf32>
    %47 = arith.addf %41, %46 : vector<64x32xf32>
    %c1_i32_42 = arith.constant 1 : i32
    %48 = arith.addi %arg1, %c1_i32_42 : i32
    %c3_i32_43 = arith.constant 3 : i32
    %c0_i32_44 = arith.constant 0 : i32
    %49 = arith.cmpi eq, %c3_i32_43, %c0_i32_44 : i32
    %c1_i32_45 = arith.constant 1 : i32
    %50 = arith.select %49, %c1_i32_45, %c3_i32_43 : i32
    %51 = arith.remsi %48, %50 : i32
    %c0_i32_46 = arith.constant 0 : i32
    %52 = arith.cmpi ne, %51, %c0_i32_46 : i32
    %c0_i32_47 = arith.constant 0 : i32
    %53 = arith.cmpi slt, %51, %c0_i32_47 : i32
    %c0_i32_48 = arith.constant 0 : i32
    %54 = arith.cmpi slt, %50, %c0_i32_48 : i32
    %55 = arith.xori %53, %54 : i1
    %56 = arith.andi %55, %52 : i1
    %57 = arith.addi %51, %50 : i32
    %58 = arith.select %56, %57, %51 : i32
    %59 = arith.index_cast %58 : i32 to index
    %c0_49 = arith.constant 0 : index
    %c0_50 = arith.constant 0 : index
    %c0_51 = arith.constant 0 : index
    %60 = vector.load %arg12[%59, %c0_49, %c0_50, %c0_51] : memref<3x10x10x32xbf16, #tpu.memory_space<vmem>>, vector<1x10x8x32xbf16>
    %61 = vector.shape_cast %60 : vector<1x10x8x32xbf16> to vector<10x8x32xbf16>
    %c0_52 = arith.constant 0 : index
    %c0_53 = arith.constant 0 : index
    %c0_54 = arith.constant 0 : index
    %62 = vector.load %arg13[%c0_52, %c0_53, %c0_54] : memref<10x8x96xbf16, #tpu.memory_space<vmem>>, vector<10x8x32xbf16>
    tpu.vector_store %arg13[%c0_52, %c0_53, %c0_54], %61 {strides = array<i32>} : memref<10x8x96xbf16, #tpu.memory_space<vmem>>, vector<10x8x32xbf16>,
    %63 = arith.index_cast %58 : i32 to index
    %c0_55 = arith.constant 0 : index
    %c1_56 = arith.constant 1 : index
    %c0_57 = arith.constant 0 : index
    %64 = vector.load %arg12[%63, %c0_55, %c1_56, %c0_57] : memref<3x10x10x32xbf16, #tpu.memory_space<vmem>>, vector<1x10x8x32xbf16>
    %65 = vector.shape_cast %64 : vector<1x10x8x32xbf16> to vector<10x8x32xbf16>
    %c0_58 = arith.constant 0 : index
    %c0_59 = arith.constant 0 : index
    %c32_60 = arith.constant 32 : index
    %66 = vector.load %arg13[%c0_58, %c0_59, %c32_60] : memref<10x8x96xbf16, #tpu.memory_space<vmem>>, vector<10x8x32xbf16>
    tpu.vector_store %arg13[%c0_58, %c0_59, %c32_60], %65 {strides = array<i32>} : memref<10x8x96xbf16, #tpu.memory_space<vmem>>, vector<10x8x32xbf16>,
    %67 = arith.index_cast %58 : i32 to index
    %c0_61 = arith.constant 0 : index
    %c2_62 = arith.constant 2 : index
    %c0_63 = arith.constant 0 : index
    %68 = vector.load %arg12[%67, %c0_61, %c2_62, %c0_63] : memref<3x10x10x32xbf16, #tpu.memory_space<vmem>>, vector<1x10x8x32xbf16>
    %69 = vector.shape_cast %68 : vector<1x10x8x32xbf16> to vector<10x8x32xbf16>
    %c0_64 = arith.constant 0 : index
    %c0_65 = arith.constant 0 : index
    %c64_66 = arith.constant 64 : index
    %70 = vector.load %arg13[%c0_64, %c0_65, %c64_66] : memref<10x8x96xbf16, #tpu.memory_space<vmem>>, vector<10x8x32xbf16>
    tpu.vector_store %arg13[%c0_64, %c0_65, %c64_66], %69 {strides = array<i32>} : memref<10x8x96xbf16, #tpu.memory_space<vmem>>, vector<10x8x32xbf16>,
    %c0_67 = arith.constant 0 : index
    %c0_68 = arith.constant 0 : index
    %c0_69 = arith.constant 0 : index
    %71 = vector.load %arg13[%c0_67, %c0_68, %c0_69] : memref<10x8x96xbf16, #tpu.memory_space<vmem>>, vector<8x8x96xbf16>
    %72 = vector.shape_cast %71 : vector<8x8x96xbf16> to vector<64x96xbf16>
    %c3 = arith.constant 3 : index
    %c0_70 = arith.constant 0 : index
    %c0_71 = arith.constant 0 : index
    %73 = vector.load %arg7[%c3, %c0_70, %c0_71] : memref<9x96x32xbf16, #tpu.memory_space<vmem>>, vector<1x96x32xbf16>
    %74 = vector.shape_cast %73 : vector<1x96x32xbf16> to vector<96x32xbf16>
    %cst_72 = arith.constant dense<0.000000e+00> : vector<64x32xf32>
    %75 = tpu.matmul %72, %74, %cst_72 {dimension_numbers = #tpu.dot_dimension_numbers<[1], [0], [0], [1], [0, 0, 1, 1], [], []>} : vector<64x96xbf16>, vector<96x32xbf16>, vector<64x32xf32> -> vector<64x32xf32>
    %76 = arith.addf %47, %75 : vector<64x32xf32>
    %c1_73 = arith.constant 1 : index
    %c0_74 = arith.constant 0 : index
    %c0_75 = arith.constant 0 : index
    %77 = vector.load %arg13[%c1_73, %c0_74, %c0_75] : memref<10x8x96xbf16, #tpu.memory_space<vmem>>, vector<8x8x96xbf16>
    %78 = vector.shape_cast %77 : vector<8x8x96xbf16> to vector<64x96xbf16>
    %c4 = arith.constant 4 : index
    %c0_76 = arith.constant 0 : index
    %c0_77 = arith.constant 0 : index
    %79 = vector.load %arg7[%c4, %c0_76, %c0_77] : memref<9x96x32xbf16, #tpu.memory_space<vmem>>, vector<1x96x32xbf16>
    %80 = vector.shape_cast %79 : vector<1x96x32xbf16> to vector<96x32xbf16>
    %cst_78 = arith.constant dense<0.000000e+00> : vector<64x32xf32>
    %81 = tpu.matmul %78, %80, %cst_78 {dimension_numbers = #tpu.dot_dimension_numbers<[1], [0], [0], [1], [0, 0, 1, 1], [], []>} : vector<64x96xbf16>, vector<96x32xbf16>, vector<64x32xf32> -> vector<64x32xf32>
    %82 = arith.addf %76, %81 : vector<64x32xf32>
    %c2_79 = arith.constant 2 : index
    %c0_80 = arith.constant 0 : index
    %c0_81 = arith.constant 0 : index
    %83 = vector.load %arg13[%c2_79, %c0_80, %c0_81] : memref<10x8x96xbf16, #tpu.memory_space<vmem>>, vector<8x8x96xbf16>
    %84 = vector.shape_cast %83 : vector<8x8x96xbf16> to vector<64x96xbf16>
    %c5 = arith.constant 5 : index
    %c0_82 = arith.constant 0 : index
    %c0_83 = arith.constant 0 : index
    %85 = vector.load %arg7[%c5, %c0_82, %c0_83] : memref<9x96x32xbf16, #tpu.memory_space<vmem>>, vector<1x96x32xbf16>
    %86 = vector.shape_cast %85 : vector<1x96x32xbf16> to vector<96x32xbf16>
    %cst_84 = arith.constant dense<0.000000e+00> : vector<64x32xf32>
    %87 = tpu.matmul %84, %86, %cst_84 {dimension_numbers = #tpu.dot_dimension_numbers<[1], [0], [0], [1], [0, 0, 1, 1], [], []>} : vector<64x96xbf16>, vector<96x32xbf16>, vector<64x32xf32> -> vector<64x32xf32>
    %88 = arith.addf %82, %87 : vector<64x32xf32>
    %c2_i32 = arith.constant 2 : i32
    %89 = arith.addi %arg1, %c2_i32 : i32
    %c3_i32_85 = arith.constant 3 : i32
    %c0_i32_86 = arith.constant 0 : i32
    %90 = arith.cmpi eq, %c3_i32_85, %c0_i32_86 : i32
    %c1_i32_87 = arith.constant 1 : i32
    %91 = arith.select %90, %c1_i32_87, %c3_i32_85 : i32
    %92 = arith.remsi %89, %91 : i32
    %c0_i32_88 = arith.constant 0 : i32
    %93 = arith.cmpi ne, %92, %c0_i32_88 : i32
    %c0_i32_89 = arith.constant 0 : i32
    %94 = arith.cmpi slt, %92, %c0_i32_89 : i32
    %c0_i32_90 = arith.constant 0 : i32
    %95 = arith.cmpi slt, %91, %c0_i32_90 : i32
    %96 = arith.xori %94, %95 : i1
    %97 = arith.andi %96, %93 : i1
    %98 = arith.addi %92, %91 : i32
    %99 = arith.select %97, %98, %92 : i32
    %100 = arith.index_cast %99 : i32 to index
    %c0_91 = arith.constant 0 : index
    %c0_92 = arith.constant 0 : index
    %c0_93 = arith.constant 0 : index
    %101 = vector.load %arg12[%100, %c0_91, %c0_92, %c0_93] : memref<3x10x10x32xbf16, #tpu.memory_space<vmem>>, vector<1x10x8x32xbf16>
    %102 = vector.shape_cast %101 : vector<1x10x8x32xbf16> to vector<10x8x32xbf16>
    %c0_94 = arith.constant 0 : index
    %c0_95 = arith.constant 0 : index
    %c0_96 = arith.constant 0 : index
    %103 = vector.load %arg13[%c0_94, %c0_95, %c0_96] : memref<10x8x96xbf16, #tpu.memory_space<vmem>>, vector<10x8x32xbf16>
    tpu.vector_store %arg13[%c0_94, %c0_95, %c0_96], %102 {strides = array<i32>} : memref<10x8x96xbf16, #tpu.memory_space<vmem>>, vector<10x8x32xbf16>,
    %104 = arith.index_cast %99 : i32 to index
    %c0_97 = arith.constant 0 : index
    %c1_98 = arith.constant 1 : index
    %c0_99 = arith.constant 0 : index
    %105 = vector.load %arg12[%104, %c0_97, %c1_98, %c0_99] : memref<3x10x10x32xbf16, #tpu.memory_space<vmem>>, vector<1x10x8x32xbf16>
    %106 = vector.shape_cast %105 : vector<1x10x8x32xbf16> to vector<10x8x32xbf16>
    %c0_100 = arith.constant 0 : index
    %c0_101 = arith.constant 0 : index
    %c32_102 = arith.constant 32 : index
    %107 = vector.load %arg13[%c0_100, %c0_101, %c32_102] : memref<10x8x96xbf16, #tpu.memory_space<vmem>>, vector<10x8x32xbf16>
    tpu.vector_store %arg13[%c0_100, %c0_101, %c32_102], %106 {strides = array<i32>} : memref<10x8x96xbf16, #tpu.memory_space<vmem>>, vector<10x8x32xbf16>,
    %108 = arith.index_cast %99 : i32 to index
    %c0_103 = arith.constant 0 : index
    %c2_104 = arith.constant 2 : index
    %c0_105 = arith.constant 0 : index
    %109 = vector.load %arg12[%108, %c0_103, %c2_104, %c0_105] : memref<3x10x10x32xbf16, #tpu.memory_space<vmem>>, vector<1x10x8x32xbf16>
    %110 = vector.shape_cast %109 : vector<1x10x8x32xbf16> to vector<10x8x32xbf16>
    %c0_106 = arith.constant 0 : index
    %c0_107 = arith.constant 0 : index
    %c64_108 = arith.constant 64 : index
    %111 = vector.load %arg13[%c0_106, %c0_107, %c64_108] : memref<10x8x96xbf16, #tpu.memory_space<vmem>>, vector<10x8x32xbf16>
    tpu.vector_store %arg13[%c0_106, %c0_107, %c64_108], %110 {strides = array<i32>} : memref<10x8x96xbf16, #tpu.memory_space<vmem>>, vector<10x8x32xbf16>,
    %c0_109 = arith.constant 0 : index
    %c0_110 = arith.constant 0 : index
    %c0_111 = arith.constant 0 : index
    %112 = vector.load %arg13[%c0_109, %c0_110, %c0_111] : memref<10x8x96xbf16, #tpu.memory_space<vmem>>, vector<8x8x96xbf16>
    %113 = vector.shape_cast %112 : vector<8x8x96xbf16> to vector<64x96xbf16>
    %c6 = arith.constant 6 : index
    %c0_112 = arith.constant 0 : index
    %c0_113 = arith.constant 0 : index
    %114 = vector.load %arg7[%c6, %c0_112, %c0_113] : memref<9x96x32xbf16, #tpu.memory_space<vmem>>, vector<1x96x32xbf16>
    %115 = vector.shape_cast %114 : vector<1x96x32xbf16> to vector<96x32xbf16>
    %cst_114 = arith.constant dense<0.000000e+00> : vector<64x32xf32>
    %116 = tpu.matmul %113, %115, %cst_114 {dimension_numbers = #tpu.dot_dimension_numbers<[1], [0], [0], [1], [0, 0, 1, 1], [], []>} : vector<64x96xbf16>, vector<96x32xbf16>, vector<64x32xf32> -> vector<64x32xf32>
    %117 = arith.addf %88, %116 : vector<64x32xf32>
    %c1_115 = arith.constant 1 : index
    %c0_116 = arith.constant 0 : index
    %c0_117 = arith.constant 0 : index
    %118 = vector.load %arg13[%c1_115, %c0_116, %c0_117] : memref<10x8x96xbf16, #tpu.memory_space<vmem>>, vector<8x8x96xbf16>
    %119 = vector.shape_cast %118 : vector<8x8x96xbf16> to vector<64x96xbf16>
    %c7 = arith.constant 7 : index
    %c0_118 = arith.constant 0 : index
    %c0_119 = arith.constant 0 : index
    %120 = vector.load %arg7[%c7, %c0_118, %c0_119] : memref<9x96x32xbf16, #tpu.memory_space<vmem>>, vector<1x96x32xbf16>
    %121 = vector.shape_cast %120 : vector<1x96x32xbf16> to vector<96x32xbf16>
    %cst_120 = arith.constant dense<0.000000e+00> : vector<64x32xf32>
    %122 = tpu.matmul %119, %121, %cst_120 {dimension_numbers = #tpu.dot_dimension_numbers<[1], [0], [0], [1], [0, 0, 1, 1], [], []>} : vector<64x96xbf16>, vector<96x32xbf16>, vector<64x32xf32> -> vector<64x32xf32>
    %123 = arith.addf %117, %122 : vector<64x32xf32>
    %c2_121 = arith.constant 2 : index
    %c0_122 = arith.constant 0 : index
    %c0_123 = arith.constant 0 : index
    %124 = vector.load %arg13[%c2_121, %c0_122, %c0_123] : memref<10x8x96xbf16, #tpu.memory_space<vmem>>, vector<8x8x96xbf16>
    %125 = vector.shape_cast %124 : vector<8x8x96xbf16> to vector<64x96xbf16>
    %c8 = arith.constant 8 : index
    %c0_124 = arith.constant 0 : index
    %c0_125 = arith.constant 0 : index
    %126 = vector.load %arg7[%c8, %c0_124, %c0_125] : memref<9x96x32xbf16, #tpu.memory_space<vmem>>, vector<1x96x32xbf16>
    %127 = vector.shape_cast %126 : vector<1x96x32xbf16> to vector<96x32xbf16>
    %cst_126 = arith.constant dense<0.000000e+00> : vector<64x32xf32>
    %128 = tpu.matmul %125, %127, %cst_126 {dimension_numbers = #tpu.dot_dimension_numbers<[1], [0], [0], [1], [0, 0, 1, 1], [], []>} : vector<64x96xbf16>, vector<96x32xbf16>, vector<64x32xf32> -> vector<64x32xf32>
    %129 = arith.addf %123, %128 : vector<64x32xf32>
    %c0_127 = arith.constant 0 : index
    %c0_128 = arith.constant 0 : index
    %130 = vector.load %arg8[%c0_127, %c0_128] : memref<1x32xf32, #tpu.memory_space<vmem>>, vector<1x32xf32>
    %131 = vector.broadcast %130 : vector<1x32xf32> to vector<64x32xf32>
    %132 = arith.addf %129, %131 : vector<64x32xf32>
    %c0_129 = arith.constant 0 : index
    %c0_130 = arith.constant 0 : index
    %133 = vector.load %arg9[%c0_129, %c0_130] : memref<1x32xf32, #tpu.memory_space<vmem>>, vector<1x32xf32>
    %134 = arith.mulf %132, %132 : vector<64x32xf32>
    %cst_131 = arith.constant dense<0.000000e+00> : vector<64xf32>
    %135 = vector.multi_reduction <add>, %134, %cst_131 [1] : vector<64x32xf32> to vector<64xf32>
    %136 = vector.shape_cast %135 : vector<64xf32> to vector<64x1xf32>
    %cst_132 = arith.constant 3.200000e+01 : f32
    %137 = vector.broadcast %cst_132 : f32 to vector<64x1xf32>
    %138 = arith.divf %136, %137 : vector<64x1xf32>
    %cst_133 = arith.constant 9.99999997E-7 : f32
    %139 = vector.broadcast %cst_133 : f32 to vector<64x1xf32>
    %140 = arith.addf %138, %139 : vector<64x1xf32>
    %141 = math.rsqrt %140 : vector<64x1xf32>
    %142 = vector.broadcast %141 : vector<64x1xf32> to vector<64x32xf32>
    %143 = arith.mulf %132, %142 : vector<64x32xf32>
    %144 = vector.broadcast %133 : vector<1x32xf32> to vector<64x32xf32>
    %145 = arith.mulf %143, %144 : vector<64x32xf32>
    %cst_134 = arith.constant 0.000000e+00 : f32
    %146 = vector.broadcast %cst_134 : f32 to vector<64x32xf32>
    %147 = arith.cmpf oge, %145, %146 : vector<64x32xf32>
    %cst_135 = arith.constant 0.00999999977 : f32
    %148 = vector.broadcast %cst_135 : f32 to vector<64x32xf32>
    %149 = arith.mulf %148, %145 : vector<64x32xf32>
    %150 = arith.select %147, %145, %149 : vector<64x32xi1>, vector<64x32xf32>
    %151 = arith.truncf %150 : vector<64x32xf32> to vector<64x32xbf16>
    %c0_136 = arith.constant 0 : index
    %c0_137 = arith.constant 0 : index
    %152 = vector.load %arg10[%c0_136, %c0_137] : memref<32x16xbf16, #tpu.memory_space<vmem>>, vector<32x16xbf16>
    %cst_138 = arith.constant dense<0.000000e+00> : vector<64x16xf32>
    %153 = tpu.matmul %151, %152, %cst_138 {dimension_numbers = #tpu.dot_dimension_numbers<[1], [0], [0], [1], [0, 0, 1, 1], [], []>} : vector<64x32xbf16>, vector<32x16xbf16>, vector<64x16xf32> -> vector<64x16xf32>
    %c0_139 = arith.constant 0 : index
    %c0_140 = arith.constant 0 : index
    %c0_141 = arith.constant 0 : index
    %c0_142 = arith.constant 0 : index
    %c0_143 = arith.constant 0 : index
    %154 = vector.load %arg2[%c0_139, %c0_140, %c0_141, %c0_142, %c0_143] : memref<1x1x8x8x16xf32, #tpu.memory_space<vmem>>, vector<1x1x8x8x16xf32>
    %155 = vector.shape_cast %154 : vector<1x1x8x8x16xf32> to vector<8x8x16xf32>
    %156 = vector.shape_cast %155 : vector<8x8x16xf32> to vector<64x16xf32>
    %157 = arith.addf %153, %156 : vector<64x16xf32>
    %158 = vector.shape_cast %157 : vector<64x16xf32> to vector<8x8x16xf32>
    %c0_144 = arith.constant 0 : index
    %c0_145 = arith.constant 0 : index
    %c0_146 = arith.constant 0 : index
    %c0_147 = arith.constant 0 : index
    %c0_148 = arith.constant 0 : index
    %159 = vector.load %arg11[%c0_144, %c0_145, %c0_146, %c0_147, %c0_148] : memref<1x1x8x8x16xf32, #tpu.memory_space<vmem>>, vector<1x1x8x8x16xf32>
    %160 = vector.shape_cast %159 : vector<1x1x8x8x16xf32> to vector<8x8x16xf32>
    %161 = vector.shape_cast %158 : vector<8x8x16xf32> to vector<1x1x8x8x16xf32>
    tpu.vector_store %arg11[%c0_144, %c0_145, %c0_146, %c0_147, %c0_148], %161 {strides = array<i32>} : memref<1x1x8x8x16xf32, #tpu.memory_space<vmem>>, vector<1x1x8x8x16xf32>,
    return
  }
  func.func @transform_0(%arg0: i32, %arg1: i32) -> (i32, i32, i32, i32, i32) {
    %c0_i32 = arith.constant 0 : i32
    %c0_i32_0 = arith.constant 0 : i32
    %c0_i32_1 = arith.constant 0 : i32
    %c0_i32_2 = arith.constant 0 : i32
    return %arg0, %arg1, %c0_i32, %c0_i32_0, %c0_i32_1 : i32, i32, i32, i32, i32
  }
  func.func @transform_1(%arg0: i32, %arg1: i32) -> (i32, i32, i32, i32, i32) {
    %c1_i32 = arith.constant 1 : i32
    %0 = arith.addi %arg1, %c1_i32 : i32
    %c3_i32 = arith.constant 3 : i32
    %1 = arith.minsi %0, %c3_i32 : i32
    %c0_i32 = arith.constant 0 : i32
    %c0_i32_0 = arith.constant 0 : i32
    %c0_i32_1 = arith.constant 0 : i32
    %c0_i32_2 = arith.constant 0 : i32
    return %arg0, %1, %c0_i32, %c0_i32_0, %c0_i32_1 : i32, i32, i32, i32, i32
  }
  func.func @transform_2(%arg0: i32, %arg1: i32) -> (i32, i32) {
    %c0_i32 = arith.constant 0 : i32
    %c0_i32_0 = arith.constant 0 : i32
    %c0_i32_1 = arith.constant 0 : i32
    return %c0_i32, %c0_i32_0 : i32, i32
  }
  func.func @transform_3(%arg0: i32, %arg1: i32) -> (i32, i32) {
    %c0_i32 = arith.constant 0 : i32
    %c0_i32_0 = arith.constant 0 : i32
    %c0_i32_1 = arith.constant 0 : i32
    return %c0_i32, %c0_i32_0 : i32, i32
  }
  func.func @transform_4(%arg0: i32, %arg1: i32) -> (i32, i32) {
    %c0_i32 = arith.constant 0 : i32
    %c0_i32_0 = arith.constant 0 : i32
    %c0_i32_1 = arith.constant 0 : i32
    return %c0_i32, %c0_i32_0 : i32, i32
  }
  func.func @transform_5(%arg0: i32, %arg1: i32) -> (i32, i32, i32) {
    %c0_i32 = arith.constant 0 : i32
    %c0_i32_0 = arith.constant 0 : i32
    %c0_i32_1 = arith.constant 0 : i32
    %c0_i32_2 = arith.constant 0 : i32
    return %c0_i32, %c0_i32_0, %c0_i32_1 : i32, i32, i32
  }
  func.func @transform_6(%arg0: i32, %arg1: i32) -> (i32, i32) {
    %c0_i32 = arith.constant 0 : i32
    %c0_i32_0 = arith.constant 0 : i32
    %c0_i32_1 = arith.constant 0 : i32
    return %c0_i32, %c0_i32_0 : i32, i32
  }
  func.func @transform_7(%arg0: i32, %arg1: i32) -> (i32, i32) {
    %c0_i32 = arith.constant 0 : i32
    %c0_i32_0 = arith.constant 0 : i32
    %c0_i32_1 = arith.constant 0 : i32
    return %c0_i32, %c0_i32_0 : i32, i32
  }
  func.func @transform_8(%arg0: i32, %arg1: i32) -> (i32, i32) {
    %c0_i32 = arith.constant 0 : i32
    %c0_i32_0 = arith.constant 0 : i32
    %c0_i32_1 = arith.constant 0 : i32
    return %c0_i32, %c0_i32_0 : i32, i32
  }
  func.func @transform_9(%arg0: i32, %arg1: i32) -> (i32, i32, i32, i32, i32) {
    %c0_i32 = arith.constant 0 : i32
    %c0_i32_0 = arith.constant 0 : i32
    %c0_i32_1 = arith.constant 0 : i32
    %c0_i32_2 = arith.constant 0 : i32
    return %arg0, %arg1, %c0_i32, %c0_i32_0, %c0_i32_1 : i32, i32, i32, i32, i32
  }
}

</mosaic_0001>

<llo_original>
// kernel: resblock3d_forward.1
$region0: #{resblock3d_forward.1}
  #allocation0 [shape = 'u32[]', space=smem, size = 0x4, offset = 0x4, fixed_abs, tag = 'smem constant byte address 0x4 - core index']
  #allocation1 [shape = 'u32[144,128]{1,0:T(1,128)}', space=vmem, size = 0x12000, scoped, tag = 'internal scratch']
  #allocation2 [shape = 'bf16[3,10,10,32]{3,2,1,0:T(8,128)(2,1)}', space=vmem, size = 0x1e000, scoped, tag = 'scratch operand']
  #allocation3 [shape = 'bf16[10,8,96]{2,1,0:T(8,128)(2,1)}', space=vmem, size = 0x5000, scoped, tag = 'scratch operand']
  %s0 = inlined_call_operand.vmem [shape: f32[2,4,8,8,16], index: 0, kind: input, shape index: {}, may-alias: {0,1}]
  %s1 = inlined_call_operand.vmem [shape: f32[2,4,8,8,16], index: 1, kind: input, shape index: {}, may-alias: {0,1}]
  %s2 = inlined_call_operand.vmem [shape: bf16[16,32], index: 2, kind: input, shape index: {}]
  %s3 = inlined_call_operand.vmem [shape: f32[1,32], index: 3, kind: input, shape index: {}]
  %s4 = inlined_call_operand.vmem [shape: f32[1,32], index: 4, kind: input, shape index: {}]
  %s5 = inlined_call_operand.vmem [shape: bf16[9,96,32], index: 5, kind: input, shape index: {}]
  %s6 = inlined_call_operand.vmem [shape: f32[1,32], index: 6, kind: input, shape index: {}]
  %s7 = inlined_call_operand.vmem [shape: f32[1,32], index: 7, kind: input, shape index: {}]
  %s8 = inlined_call_operand.vmem [shape: bf16[32,16], index: 8, kind: input, shape index: {}]
  %s9 = inlined_call_operand.hbm [shape: f32[2,4,8,8,16], index: 9, kind: output, shape index: {}]
  %s10 = sld [smem:[#allocation0]]
  $region85: #{resblock3d_forward.1} parent=0
    _
  %s12 = ssub.s32 1, %s10
  %s13 = scalar_select 0, %s12, %s10
  $region1: #{resblock3d_forward.1} parent=0
    #allocation4 [shape = 'u8[65536]{0}', space=vmem, size = 0x10000, scoped, tag = 'output window, operand 0']
    #allocation5 [shape = 's32[2]{0}', space=sflag, size = 0x8, scoped, tag = 'scoped memory for resblock3d_forward.1']
    %14 = vsyncpa [#allocation5], 0
    %s15 = scalar_lea.sflag [#allocation5], 1
    %16 = vsyncpa %s15, 0
    loop: start=0, step=1, limit=10
    $region2: #{resblock3d_forward.1} parent=1 // loop_pre_header
      _
    $region3: #{resblock3d_forward.1} parent=1 // loop_header
      %s18 = sphi 0, %s22
      %p19 = scmp.ge.s32.totalorder %s18, 10
      %s25 = sphi 0, %s37
      %s26 = sphi 0, %s33
      %s27 = sphi 0, %s25
      %s28 = sphi 0, %s26
      %s29 = sphi 0, %s27
      %s30 = sphi 0, %s28
      %s42 = sphi 0, %s44
      %s45 = sphi 0, %s42
      %s46 = sphi 0, %s45
      %s62 = sphi 0, %s46
      %s76 = sphi 0, %s78
      %s79 = sphi 0, %s76
      %s80 = sphi 0, %s79
      %s96 = sphi 0, %s80
      %s100 = sphi 0, %s100
      %s102 = sphi 0, %s100
      %s103 = sphi 0, %s102
      %s117 = sphi 0, %s103
      %s121 = sphi 0, %s121
      %s123 = sphi 0, %s121
      %s124 = sphi 0, %s123
      %s138 = sphi 0, %s124
      %s142 = sphi 0, %s142
      %s144 = sphi 0, %s142
      %s145 = sphi 0, %s144
      %s159 = sphi 0, %s145
      %s163 = sphi 0, %s163
      %s165 = sphi 0, %s163
      %s166 = sphi 0, %s165
      %s180 = sphi 0, %s166
      %s184 = sphi 0, %s184
      %s186 = sphi 0, %s184
      %s187 = sphi 0, %s186
      %s201 = sphi 0, %s187
      %s205 = sphi 0, %s205
      %s207 = sphi 0, %s205
      %s208 = sphi 0, %s207
      %s222 = sphi 0, %s208
      %s226 = sphi 0, %s226
      %s228 = sphi 0, %s226
      %s229 = sphi 0, %s228
      %s243 = sphi 0, %s229
      %s251 = sphi 0, %s253
      %s254 = sphi 0, %s251
      %s255 = sphi 0, %s254
      %s271 = sphi 0, %s255
    $region4: #{resblock3d_forward.1} parent=1 // loop_header_branch
      %21 = sbr.rel (%p19) target = $region8
    $region5: #{resblock3d_forward.1} parent=1 // loop_body
      %s23 = ssub.s32 %s18, 1
      %s24 = ssub.s32 %s18, 2
      %s31 = sadd.s32 1, %s26
      %p32 = scmp.ge.s32.totalorder %s31, 4
      %s33 = scalar_select %p32, 0, %s31
      %s34 = sadd.s32 1, %s25
      %s35 = scalar_select %p32, %s34, %s25
      %p36 = scmp.ge.s32.totalorder %s35, 2
      %s37 = scalar_select %p36, 0, %s35
      %s38 = ssub.s32 %s25, %s37
      %s39 = ssub.s32 %s26, %s33
      %s40 = sor.u32 %s38, %s39
      %p41 = scmp.eq.s32.totalorder %s40, 0
      %s43 = sadd.s32 %s42, 1
      %s44 = scalar_select %p41, %s42, %s43
      %p47 = pneg %p41
      %p48 = scmp.eq.s32.totalorder %s18, 7
      %p49 = por %p47, %p48
      %p50 = scmp.ne.s32.totalorder %s42, %s45
      %p51 = scmp.eq.s32.totalorder %s18, 0
      %p52 = por %p50, %p51
      %p53 = scmp.ne.s32.totalorder %s42, %s45
      %p54 = scmp.eq.s32.totalorder %s23, 7
      %p55 = por %p53, %p54
      %p56 = scmp.ne.s32.totalorder %s45, %s46
      %p57 = scmp.eq.s32.totalorder %s23, 0
      %p58 = por %p56, %p57
      %p59 = scmp.ne.s32.totalorder %s45, %s46
      %p60 = scmp.eq.s32.totalorder %s24, 7
      %p61 = por %p59, %p60
      %p63 = scmp.ne.s32.totalorder %s46, %s62
      %p64 = scmp.eq.s32.totalorder %s24, 0
      %p65 = por %p63, %p64
      %s66 = sadd.s32 %s26, 1
      %p67 = scmp.lt.s32.totalorder %s66, 3
      %s68 = scalar_select %p67, %s66, 3
      %s69 = sadd.s32 %s33, 1
      %p70 = scmp.lt.s32.totalorder %s69, 3
      %s71 = scalar_select %p70, %s69, 3
      %s72 = ssub.s32 %s25, %s37
      %s73 = ssub.s32 %s68, %s71
      %s74 = sor.u32 %s72, %s73
      %p75 = scmp.eq.s32.totalorder %s74, 0
      %s77 = sadd.s32 %s76, 1
      %s78 = scalar_select %p75, %s76, %s77
      %p81 = pneg %p75
      %p82 = scmp.eq.s32.totalorder %s18, 7
      %p83 = por %p81, %p82
      %p84 = scmp.ne.s32.totalorder %s76, %s79
      %p85 = scmp.eq.s32.totalorder %s18, 0
      %p86 = por %p84, %p85
      %p87 = scmp.ne.s32.totalorder %s76, %s79
      %p88 = scmp.eq.s32.totalorder %s23, 7
      %p89 = por %p87, %p88
      %p90 = scmp.ne.s32.totalorder %s79, %s80
      %p91 = scmp.eq.s32.totalorder %s23, 0
      %p92 = por %p90, %p91
      %p93 = scmp.ne.s32.totalorder %s79, %s80
      %p94 = scmp.eq.s32.totalorder %s24, 7
      %p95 = por %p93, %p94
      %p97 = scmp.ne.s32.totalorder %s80, %s96
      %p98 = scmp.eq.s32.totalorder %s24, 0
      %p99 = por %p97, %p98
      %s101 = sadd.s32 %s100, 1
      %p104 = scmp.eq.s32.totalorder %s18, 7
      %p105 = scmp.ne.s32.totalorder %s100, %s102
      %p106 = scmp.eq.s32.totalorder %s18, 0
      %p107 = por %p105, %p106
      %p108 = scmp.ne.s32.totalorder %s100, %s102
      %p109 = scmp.eq.s32.totalorder %s23, 7
      %p110 = por %p108, %p109
      %p111 = scmp.ne.s32.totalorder %s102, %s103
      %p112 = scmp.eq.s32.totalorder %s23, 0
      %p113 = por %p111, %p112
      %p114 = scmp.ne.s32.totalorder %s102, %s103
      %p115 = scmp.eq.s32.totalorder %s24, 7
      %p116 = por %p114, %p115
      %p118 = scmp.ne.s32.totalorder %s103, %s117
      %p119 = scmp.eq.s32.totalorder %s24, 0
      %p120 = por %p118, %p119
      %s122 = sadd.s32 %s121, 1
      %p125 = scmp.eq.s32.totalorder %s18, 7
      %p126 = scmp.ne.s32.totalorder %s121, %s123
      %p127 = scmp.eq.s32.totalorder %s18, 0
      %p128 = por %p126, %p127
      %p129 = scmp.ne.s32.totalorder %s121, %s123
      %p130 = scmp.eq.s32.totalorder %s23, 7
      %p131 = por %p129, %p130
      %p132 = scmp.ne.s32.totalorder %s123, %s124
      %p133 = scmp.eq.s32.totalorder %s23, 0
      %p134 = por %p132, %p133
      %p135 = scmp.ne.s32.totalorder %s123, %s124
      %p136 = scmp.eq.s32.totalorder %s24, 7
      %p137 = por %p135, %p136
      %p139 = scmp.ne.s32.totalorder %s124, %s138
      %p140 = scmp.eq.s32.totalorder %s24, 0
      %p141 = por %p139, %p140
      %s143 = sadd.s32 %s142, 1
      %p146 = scmp.eq.s32.totalorder %s18, 7
      %p147 = scmp.ne.s32.totalorder %s142, %s144
      %p148 = scmp.eq.s32.totalorder %s18, 0
      %p149 = por %p147, %p148
      %p150 = scmp.ne.s32.totalorder %s142, %s144
      %p151 = scmp.eq.s32.totalorder %s23, 7
      %p152 = por %p150, %p151
      %p153 = scmp.ne.s32.totalorder %s144, %s145
      %p154 = scmp.eq.s32.totalorder %s23, 0
      %p155 = por %p153, %p154
      %p156 = scmp.ne.s32.totalorder %s144, %s145
      %p157 = scmp.eq.s32.totalorder %s24, 7
      %p158 = por %p156, %p157
      %p160 = scmp.ne.s32.totalorder %s145, %s159
      %p161 = scmp.eq.s32.totalorder %s24, 0
      %p162 = por %p160, %p161
      %s164 = sadd.s32 %s163, 1
      %p167 = scmp.eq.s32.totalorder %s18, 7
      %p168 = scmp.ne.s32.totalorder %s163, %s165
      %p169 = scmp.eq.s32.totalorder %s18, 0
      %p170 = por %p168, %p169
      %p171 = scmp.ne.s32.totalorder %s163, %s165
      %p172 = scmp.eq.s32.totalorder %s23, 7
      %p173 = por %p171, %p172
      %p174 = scmp.ne.s32.totalorder %s165, %s166
      %p175 = scmp.eq.s32.totalorder %s23, 0
      %p176 = por %p174, %p175
      %p177 = scmp.ne.s32.totalorder %s165, %s166
      %p178 = scmp.eq.s32.totalorder %s24, 7
      %p179 = por %p177, %p178
      %p181 = scmp.ne.s32.totalorder %s166, %s180
      %p182 = scmp.eq.s32.totalorder %s24, 0
      %p183 = por %p181, %p182
      %s185 = sadd.s32 %s184, 1
      %p188 = scmp.eq.s32.totalorder %s18, 7
      %p189 = scmp.ne.s32.totalorder %s184, %s186
      %p190 = scmp.eq.s32.totalorder %s18, 0
      %p191 = por %p189, %p190
      %p192 = scmp.ne.s32.totalorder %s184, %s186
      %p193 = scmp.eq.s32.totalorder %s23, 7
      %p194 = por %p192, %p193
      %p195 = scmp.ne.s32.totalorder %s186, %s187
      %p196 = scmp.eq.s32.totalorder %s23, 0
      %p197 = por %p195, %p196
      %p198 = scmp.ne.s32.totalorder %s186, %s187
      %p199 = scmp.eq.s32.totalorder %s24, 7
      %p200 = por %p198, %p199
      %p202 = scmp.ne.s32.totalorder %s187, %s201
      %p203 = scmp.eq.s32.totalorder %s24, 0
      %p204 = por %p202, %p203
      %s206 = sadd.s32 %s205, 1
      %p209 = scmp.eq.s32.totalorder %s18, 7
      %p210 = scmp.ne.s32.totalorder %s205, %s207
      %p211 = scmp.eq.s32.totalorder %s18, 0
      %p212 = por %p210, %p211
      %p213 = scmp.ne.s32.totalorder %s205, %s207
      %p214 = scmp.eq.s32.totalorder %s23, 7
      %p215 = por %p213, %p214
      %p216 = scmp.ne.s32.totalorder %s207, %s208
      %p217 = scmp.eq.s32.totalorder %s23, 0
      %p218 = por %p216, %p217
      %p219 = scmp.ne.s32.totalorder %s207, %s208
      %p220 = scmp.eq.s32.totalorder %s24, 7
      %p221 = por %p219, %p220
      %p223 = scmp.ne.s32.totalorder %s208, %s222
      %p224 = scmp.eq.s32.totalorder %s24, 0
      %p225 = por %p223, %p224
      %s227 = sadd.s32 %s226, 1
      %p230 = scmp.eq.s32.totalorder %s18, 7
      %p231 = scmp.ne.s32.totalorder %s226, %s228
      %p232 = scmp.eq.s32.totalorder %s18, 0
      %p233 = por %p231, %p232
      %p234 = scmp.ne.s32.totalorder %s226, %s228
      %p235 = scmp.eq.s32.totalorder %s23, 7
      %p236 = por %p234, %p235
      %p237 = scmp.ne.s32.totalorder %s228, %s229
      %p238 = scmp.eq.s32.totalorder %s23, 0
      %p239 = por %p237, %p238
      %p240 = scmp.ne.s32.totalorder %s228, %s229
      %p241 = scmp.eq.s32.totalorder %s24, 7
      %p242 = por %p240, %p241
      %p244 = scmp.ne.s32.totalorder %s229, %s243
      %p245 = scmp.eq.s32.totalorder %s24, 0
      %p246 = por %p244, %p245
      %s247 = ssub.s32 %s25, %s37
      %s248 = ssub.s32 %s26, %s33
      %s249 = sor.u32 %s247, %s248
      %p250 = scmp.eq.s32.totalorder %s249, 0
      %s252 = sadd.s32 %s251, 1
      %s253 = scalar_select %p250, %s251, %s252
      %p256 = pneg %p250
      %p257 = scmp.eq.s32.totalorder %s18, 7
      %p258 = por %p256, %p257
      %p259 = scmp.ne.s32.totalorder %s251, %s254
      %p260 = scmp.eq.s32.totalorder %s18, 0
      %p261 = por %p259, %p260
      %p262 = scmp.ne.s32.totalorder %s251, %s254
      %p263 = scmp.eq.s32.totalorder %s23, 7
      %p264 = por %p262, %p263
      %p265 = scmp.ne.s32.totalorder %s254, %s255
      %p266 = scmp.eq.s32.totalorder %s23, 0
      %p267 = por %p265, %p266
      %p268 = scmp.ne.s32.totalorder %s254, %s255
      %p269 = scmp.eq.s32.totalorder %s24, 7
      %p270 = por %p268, %p269
      %p272 = scmp.ne.s32.totalorder %s255, %s271
      %p273 = scmp.eq.s32.totalorder %s24, 0
      %p274 = por %p272, %p273
      %p275 = scmp.le.s32.totalorder 1, %s18
      %p276 = scmp.lt.s32.totalorder %s18, 9
      %p277 = pnand %p275, %p276
      %p278 = pneg %p277
      // Predicated region
      $region9: #{resblock3d_forward.1} parent=5 // pred_check
        _
      $region10: #{resblock3d_forward.1} parent=5 // pred_check_branch
        %280 = sbr.rel (%p277) target = $region12
      $region11: #{resblock3d_forward.1} parent=5 // pred_region
        %s281 = ssub.s32 %s18, 1
        // Predicated region
        $region13: #{resblock3d_forward.1} parent=11 // pred_check
          %p282 = pneg %p113
        $region14: #{resblock3d_forward.1} parent=11 // pred_check_branch
          %284 = sbr.rel (%p282) target = $region16
        $region15: #{resblock3d_forward.1} parent=11 // pred_region
          _
        $region16: #{resblock3d_forward.1} parent=11 // pred_fallthru
          _
        // Predicated region
        $region17: #{resblock3d_forward.1} parent=11 // pred_check
          %p285 = pneg %p134
        $region18: #{resblock3d_forward.1} parent=11 // pred_check_branch
          %287 = sbr.rel (%p285) target = $region20
        $region19: #{resblock3d_forward.1} parent=11 // pred_region
          _
        $region20: #{resblock3d_forward.1} parent=11 // pred_fallthru
          _
        // Predicated region
        $region21: #{resblock3d_forward.1} parent=11 // pred_check
          %p288 = pneg %p155
        $region22: #{resblock3d_forward.1} parent=11 // pred_check_branch
          %290 = sbr.rel (%p288) target = $region24
        $region23: #{resblock3d_forward.1} parent=11 // pred_region
          _
        $region24: #{resblock3d_forward.1} parent=11 // pred_fallthru
          _
        // Predicated region
        $region25: #{resblock3d_forward.1} parent=11 // pred_check
          %p291 = pneg %p176
        $region26: #{resblock3d_forward.1} parent=11 // pred_check_branch
          %293 = sbr.rel (%p291) target = $region28
        $region27: #{resblock3d_forward.1} parent=11 // pred_region
          _
        $region28: #{resblock3d_forward.1} parent=11 // pred_fallthru
          _
        // Predicated region
        $region29: #{resblock3d_forward.1} parent=11 // pred_check
          %p294 = pneg %p197
        $region30: #{resblock3d_forward.1} parent=11 // pred_check_branch
          %296 = sbr.rel (%p294) target = $region32
        $region31: #{resblock3d_forward.1} parent=11 // pred_region
          _
        $region32: #{resblock3d_forward.1} parent=11 // pred_fallthru
          _
        // Predicated region
        $region33: #{resblock3d_forward.1} parent=11 // pred_check
          %p297 = pneg %p218
        $region34: #{resblock3d_forward.1} parent=11 // pred_check_branch
          %299 = sbr.rel (%p297) target = $region36
        $region35: #{resblock3d_forward.1} parent=11 // pred_region
          _
        $region36: #{resblock3d_forward.1} parent=11 // pred_fallthru
          _
        // Predicated region
        $region37: #{resblock3d_forward.1} parent=11 // pred_check
          %p300 = pneg %p239
        $region38: #{resblock3d_forward.1} parent=11 // pred_check_branch
          %302 = sbr.rel (%p300) target = $region40
        $region39: #{resblock3d_forward.1} parent=11 // pred_region
          _
        $region40: #{resblock3d_forward.1} parent=11 // pred_fallthru
          _
      $region12: #{resblock3d_forward.1} parent=5 // pred_fallthru
        _
      %p303 = scmp.lt.s32.totalorder %s18, 8
      // Predicated region
      $region41: #{resblock3d_forward.1} parent=5 // pred_check
        %p304 = pneg %p303
      $region42: #{resblock3d_forward.1} parent=5 // pred_check_branch
        %306 = sbr.rel (%p304) target = $region44
      $region43: #{resblock3d_forward.1} parent=5 // pred_region
        // Predicated region
        $region45: #{resblock3d_forward.1} parent=43 // pred_check
          %p307 = pneg %p52
        $region46: #{resblock3d_forward.1} parent=43 // pred_check_branch
          %309 = sbr.rel (%p307) target = $region48
        $region47: #{resblock3d_forward.1} parent=43 // pred_region
          %p310 = scmp.lt.s32.totalorder %s25, 1
          %s311 = scalar_select %p310, %s25, 1
          %p312 = scmp.lt.s32.totalorder %s26, 3
          %s313 = scalar_select %p312, %s26, 3
          %s314 = smul.addr %s313, 8
          %s315 = smul.addr %s311, 32
          %s316 = sadd.s32 %s314, %s315
          %s317 = smul.addr %s316, 8
          %s318 = scalar_lea.vmem %s0, %s317
        $region48: #{resblock3d_forward.1} parent=43 // pred_fallthru
          _
        // Predicated region
        $region49: #{resblock3d_forward.1} parent=43 // pred_check
          %p319 = pneg %p86
        $region50: #{resblock3d_forward.1} parent=43 // pred_check_branch
          %321 = sbr.rel (%p319) target = $region52
        $region51: #{resblock3d_forward.1} parent=43 // pred_region
          %s322 = sadd.s32 %s26, 1
          %p323 = scmp.lt.s32.totalorder %s322, 3
          %s324 = scalar_select %p323, %s322, 3
          %p325 = scmp.lt.s32.totalorder %s25, 1
          %s326 = scalar_select %p325, %s25, 1
          %p327 = scmp.lt.s32.totalorder %s324, 3
          %s328 = scalar_select %p327, %s324, 3
          %s329 = smul.addr %s328, 8
          %s330 = smul.addr %s326, 32
          %s331 = sadd.s32 %s329, %s330
          %s332 = smul.addr %s331, 8
          %s333 = scalar_lea.vmem %s1, %s332
          %s334 = sadd.s32 %s26, 1
          %p335 = scmp.lt.s32.totalorder %s334, 3
          %s336 = scalar_select %p335, %s334, 3
        $region52: #{resblock3d_forward.1} parent=43 // pred_fallthru
          _
      $region44: #{resblock3d_forward.1} parent=5 // pred_fallthru
        _
      %p337 = scmp.le.s32.totalorder 1, %s18
      %p338 = scmp.lt.s32.totalorder %s18, 9
      %p339 = pnand %p337, %p338
      %p340 = pneg %p339
      // Predicated region
      $region53: #{resblock3d_forward.1} parent=5 // pred_check
        _
      $region54: #{resblock3d_forward.1} parent=5 // pred_check_branch
        %342 = sbr.rel (%p339) target = $region56
      $region55: #{resblock3d_forward.1} parent=5 // pred_region
        %s343 = ssub.s32 %s18, 1
        %p344 = scmp.lt.s32.totalorder %s27, 1
        %s345 = scalar_select %p344, %s27, 1
        %p346 = scmp.lt.s32.totalorder %s28, 3
        %s347 = scalar_select %p346, %s28, 3
        %s348 = smul.addr %s347, 8
        %s349 = smul.addr %s345, 32
        %s350 = sadd.s32 %s348, %s349
        %s351 = smul.addr %s350, 8
        %s352 = scalar_lea.vmem %s0, %s351
        %p353 = pneg %p58
        %p354 = pneg %p55
        %s355 = sadd.s32 %s28, 1
        %p356 = scmp.lt.s32.totalorder %s355, 3
        %s357 = scalar_select %p356, %s355, 3
        %p358 = scmp.lt.s32.totalorder %s27, 1
        %s359 = scalar_select %p358, %s27, 1
        %p360 = scmp.lt.s32.totalorder %s357, 3
        %s361 = scalar_select %p360, %s357, 3
        %s362 = smul.addr %s361, 8
        %s363 = smul.addr %s359, 32
        %s364 = sadd.s32 %s362, %s363
        %s365 = smul.addr %s364, 8
        %s366 = scalar_lea.vmem %s1, %s365
        %p367 = pneg %p92
        %p368 = pneg %p89
        %p369 = pneg %p113
        %p370 = pneg %p110
        %p371 = pneg %p134
        %p372 = pneg %p131
        %p373 = pneg %p155
        %p374 = pneg %p152
        %p375 = pneg %p176
        %p376 = pneg %p173
        %p377 = pneg %p197
        %p378 = pneg %p194
        %p379 = pneg %p218
        %p380 = pneg %p215
        %p381 = pneg %p239
        %p382 = pneg %p236
        %p383 = pneg %p267
        %p384 = pneg %p264
        %s385 = sand.u32 %s254, 1
        %s386 = scalar_lea.sflag [#allocation5], %s385
        %s387 = sand.u32 %s254, 1
        %s388 = smul.addr %s387, 64
        %s389 = scalar_lea.vmem [#allocation4], %s388
        %p390 = scmp.lt.s32.totalorder %s27, 1
        %s391 = scalar_select %p390, %s27, 1
        %p392 = scmp.lt.s32.totalorder %s28, 3
        %s393 = scalar_select %p392, %s28, 3
        %s394 = smul.addr %s393, 8
        %s395 = smul.addr %s391, 32
        %s396 = sadd.s32 %s394, %s395
        %s397 = smul.addr %s396, 8
        %s398 = scalar_lea.vmem %s0, %s397
        %s399 = sadd.s32 %s28, 1
        %p400 = scmp.lt.s32.totalorder %s399, 3
        %s401 = scalar_select %p400, %s399, 3
        %p402 = scmp.lt.s32.totalorder %s27, 1
        %s403 = scalar_select %p402, %s27, 1
        %p404 = scmp.lt.s32.totalorder %s401, 3
        %s405 = scalar_select %p404, %s401, 3
        %s406 = smul.addr %s405, 8
        %s407 = smul.addr %s403, 32
        %s408 = sadd.s32 %s406, %s407
        %s409 = smul.addr %s408, 8
        %s410 = scalar_lea.vmem %s1, %s409
        %s411 = sadd.s32 %s28, 1
        %p412 = scmp.lt.s32.totalorder %s411, 3
        %s413 = scalar_select %p412, %s411, 3
        %p415 = scmp.eq.s32.totalorder %s28, 0
        // Predicated region
        $region57: #{resblock3d_forward.1} parent=55 // pred_check
          %p416 = pneg %p415
        $region58: #{resblock3d_forward.1} parent=55 // pred_check_branch
          %418 = sbr.rel (%p416) target = $region60
        $region59: #{resblock3d_forward.1} parent=55 // pred_region
          %vm419 = vcmask 257024
          %420 = vst.msk [vmem:[#allocation2] sm:$0xf] %vm419, 0
          %vm421 = vcmask 253952
          %422 = vst.msk [vmem:[#allocation2 + $0x4] sm:$0x1] %vm421, 0
          %423 = vst.msk [vmem:[#allocation2 + $0x8] sm:$0xf] %vm419, 0
          %424 = vst.msk [vmem:[#allocation2 + $0xc] sm:$0x1] %vm421, 0
          %425 = vst.msk [vmem:[#allocation2 + $0x10] sm:$0xf] %vm419, 0
          %426 = vst.msk [vmem:[#allocation2 + $0x14] sm:$0x1] %vm421, 0
          %427 = vst.msk [vmem:[#allocation2 + $0x18] sm:$0xf] %vm419, 0
          %428 = vst.msk [vmem:[#allocation2 + $0x1c] sm:$0x1] %vm421, 0
          %429 = vst.msk [vmem:[#allocation2 + $0x20] sm:$0xf] %vm419, 0
          %430 = vst.msk [vmem:[#allocation2 + $0x24] sm:$0x1] %vm421, 0
          %431 = vst.msk [vmem:[#allocation2 + $0x28] sm:$0xf] %vm419, 0
          %432 = vst.msk [vmem:[#allocation2 + $0x2c] sm:$0x1] %vm421, 0
          %433 = vst.msk [vmem:[#allocation2 + $0x30] sm:$0xf] %vm419, 0
          %434 = vst.msk [vmem:[#allocation2 + $0x34] sm:$0x1] %vm421, 0
          %435 = vst.msk [vmem:[#allocation2 + $0x38] sm:$0xf] %vm419, 0
          %436 = vst.msk [vmem:[#allocation2 + $0x3c] sm:$0x1] %vm421, 0
          %437 = vst.msk [vmem:[#allocation2 + $0x40] sm:$0xf] %vm419, 0
          %438 = vst.msk [vmem:[#allocation2 + $0x44] sm:$0x1] %vm421, 0
          %439 = vst.msk [vmem:[#allocation2 + $0x48] sm:$0xf] %vm419, 0
          %440 = vst.msk [vmem:[#allocation2 + $0x4c] sm:$0x1] %vm421, 0
          %441 = vst.msk [vmem:[#allocation2 + $0x50] sm:$0xf] %vm419, 0
          %442 = vst.msk [vmem:[#allocation2 + $0x54] sm:$0x1] %vm421, 0
          %443 = vst.msk [vmem:[#allocation2 + $0x58] sm:$0xf] %vm419, 0
          %444 = vst.msk [vmem:[#allocation2 + $0x5c] sm:$0x1] %vm421, 0
          %445 = vst.msk [vmem:[#allocation2 + $0x60] sm:$0xf] %vm419, 0
          %446 = vst.msk [vmem:[#allocation2 + $0x64] sm:$0x1] %vm421, 0
          %447 = vst.msk [vmem:[#allocation2 + $0x68] sm:$0xf] %vm419, 0
          %448 = vst.msk [vmem:[#allocation2 + $0x6c] sm:$0x1] %vm421, 0
          %449 = vst.msk [vmem:[#allocation2 + $0x70] sm:$0xf] %vm419, 0
          %450 = vst.msk [vmem:[#allocation2 + $0x74] sm:$0x1] %vm421, 0
          %451 = vst.msk [vmem:[#allocation2 + $0x78] sm:$0xf] %vm419, 0
          %452 = vst.msk [vmem:[#allocation2 + $0x7c] sm:$0x1] %vm421, 0
          %453 = vst.msk [vmem:[#allocation2 + $0x80] sm:$0xf] %vm419, 0
          %454 = vst.msk [vmem:[#allocation2 + $0x84] sm:$0x1] %vm421, 0
          %455 = vst.msk [vmem:[#allocation2 + $0x88] sm:$0xf] %vm419, 0
          %456 = vst.msk [vmem:[#allocation2 + $0x8c] sm:$0x1] %vm421, 0
          %457 = vst.msk [vmem:[#allocation2 + $0x90] sm:$0xf] %vm419, 0
          %458 = vst.msk [vmem:[#allocation2 + $0x94] sm:$0x1] %vm421, 0
          %459 = vst.msk [vmem:[#allocation2 + $0x98] sm:$0xf] %vm419, 0
          %460 = vst.msk [vmem:[#allocation2 + $0x9c] sm:$0x1] %vm421, 0
          %461 = vst.msk [vmem:[#allocation2 + $0xa0] sm:$0xf] %vm419, 0
          %462 = vst.msk [vmem:[#allocation2 + $0xa4] sm:$0x1] %vm421, 0
          %463 = vst.msk [vmem:[#allocation2 + $0xa8] sm:$0xf] %vm419, 0
          %464 = vst.msk [vmem:[#allocation2 + $0xac] sm:$0x1] %vm421, 0
          %465 = vst.msk [vmem:[#allocation2 + $0xb0] sm:$0xf] %vm419, 0
          %466 = vst.msk [vmem:[#allocation2 + $0xb4] sm:$0x1] %vm421, 0
          %467 = vst.msk [vmem:[#allocation2 + $0xb8] sm:$0xf] %vm419, 0
          %468 = vst.msk [vmem:[#allocation2 + $0xbc] sm:$0x1] %vm421, 0
          %469 = vst.msk [vmem:[#allocation2 + $0xc0] sm:$0xf] %vm419, 0
          %470 = vst.msk [vmem:[#allocation2 + $0xc4] sm:$0x1] %vm421, 0
          %471 = vst.msk [vmem:[#allocation2 + $0xc8] sm:$0xf] %vm419, 0
          %472 = vst.msk [vmem:[#allocation2 + $0xcc] sm:$0x1] %vm421, 0
          %473 = vst.msk [vmem:[#allocation2 + $0xd0] sm:$0xf] %vm419, 0
          %474 = vst.msk [vmem:[#allocation2 + $0xd4] sm:$0x1] %vm421, 0
          %475 = vst.msk [vmem:[#allocation2 + $0xd8] sm:$0xf] %vm419, 0
          %476 = vst.msk [vmem:[#allocation2 + $0xdc] sm:$0x1] %vm421, 0
          %477 = vst.msk [vmem:[#allocation2 + $0xe0] sm:$0xf] %vm419, 0
          %478 = vst.msk [vmem:[#allocation2 + $0xe4] sm:$0x1] %vm421, 0
          %479 = vst.msk [vmem:[#allocation2 + $0xe8] sm:$0xf] %vm419, 0
          %480 = vst.msk [vmem:[#allocation2 + $0xec] sm:$0x1] %vm421, 0
          %v481 = vld [vmem:[%s398] sm:$0xff]
          %v482 = vld [vmem:[%s398 + $0x8] sm:$0xff]
          %v483 = vld [vmem:[%s398 + $0x10] sm:$0xff]
          %v484 = vld [vmem:[%s398 + $0x18] sm:$0xff]
          %v485 = vld [vmem:[%s398 + $0x20] sm:$0xff]
          %v486 = vld [vmem:[%s398 + $0x28] sm:$0xff]
          %v487 = vld [vmem:[%s398 + $0x30] sm:$0xff]
          %v488 = vld [vmem:[%s398 + $0x38] sm:$0xff]
          %v489 = vpack.c.bf16 %v482, %v481
          %v490 = vpack.c.bf16 %v484, %v483
          %v491 = vpack.c.bf16 %v486, %v485
          %v492 = vpack.c.bf16 %v488, %v487
          %v493 = vld [vmem:[%s2] sm:$0xf]
          %v494 = vld [vmem:[%s2 + $0x4] sm:$0xf]
          %v495 = vld [vmem:[%s3] sm:$0x1]
          %v497 = vlaneseq
          %v498 = vshrl.u32 %v497, 7
          %v499 = vsub.s32 0, %v498
          %v500 = vrot.slane %v495, %v499
          %v504 = vunpack.c.l.b16 %v493
          %v505 = vunpack.c.l.b16 %v494
          %v506 = vpack.c.b16 %v505, %v504
          %vm508 = vcmask 130048
          %v510 = vsel %vm508, %v489, 0
          %v513 = vsel %vm508, %v490, 0
          %v516 = vsel %vm508, %v491, 0
          %v519 = vsel %vm508, %v492, 0
          %521 = vmatprep.subr.bf16.mxu0 0
          %522 = vmatpush1.bf16.msra.mxu0 0
          %523 = vmatprep.subr.bf16.mxu0 0
          %524 = vmatpush1.bf16.msra.mxu0 0
          %525 = vmatprep.subr.bf16.mxu0 0
          %526 = vmatpush1.bf16.msra.mxu0 0
          %527 = vmatprep.subr.bf16.mxu0 0
          %528 = vmatpush1.bf16.msra.mxu0 0
          %529 = vmatprep.subr.bf16.mxu0 0
          %530 = vmatpush1.bf16.msra.mxu0 0
          %531 = vmatprep.subr.bf16.mxu0 0
          %532 = vmatpush1.bf16.msra.mxu0 0
          %533 = vmatprep.subr.bf16.mxu0 0
          %534 = vmatpush1.bf16.msra.mxu0 0
          %535 = vmatprep.subr.bf16.mxu0 0
          %536 = vmatpush1.bf16.msra.mxu0 %v506
          %537 = vmatprep.subr.bf16.mxu0 0
          %538 = vmatpush2.bf16.msra.mxu0 0
          %539 = vmatprep.subr.bf16.mxu0 0
          %540 = vmatpush2.bf16.msra.mxu0 0
          %541 = vmatprep.subr.bf16.mxu0 0
          %542 = vmatpush2.bf16.msra.mxu0 0
          %543 = vmatprep.subr.bf16.mxu0 0
          %544 = vmatpush2.bf16.msra.mxu0 0
          %545 = vmatprep.subr.bf16.mxu0 0
          %546 = vmatpush2.bf16.msra.mxu0 0
          %547 = vmatprep.subr.bf16.mxu0 0
          %548 = vmatpush2.bf16.msra.mxu0 0
          %549 = vmatprep.subr.bf16.mxu0 0
          %550 = vmatpush2.bf16.msra.mxu0 0
          %551 = vmatprep.subr.bf16.mxu0 0
          %552 = vmatpush2.bf16.msra.mxu0 0
          %553 = vmatprep.mubr.bf16.mxu0 0
          %554 = vmatmul.mubr.bf16.gmra.mxu0 %v510
          %v555 = vpop.f32.mrf.mxu0
          %v556 = vadd.f32 %v500, %v555
          %v557 = vpop.f32.mrf.mxu0
          %v558 = vpop.f32.mrf.mxu0
          %v559 = vadd.f32 %v500, %v558
          %v560 = vpop.f32.mrf.mxu0
          %561 = vmatprep.mubr.bf16.mxu0 0
          %562 = vmatmul.mubr.bf16.gmra.mxu0 %v513
          %v563 = vpop.f32.mrf.mxu0
          %v564 = vadd.f32 %v500, %v563
          %v565 = vpop.f32.mrf.mxu0
          %v566 = vpop.f32.mrf.mxu0
          %v567 = vadd.f32 %v500, %v566
          %v568 = vpop.f32.mrf.mxu0
          %569 = vmatprep.mubr.bf16.mxu0 0
          %570 = vmatmul.mubr.bf16.gmra.mxu0 %v516
          %v571 = vpop.f32.mrf.mxu0
          %v572 = vadd.f32 %v500, %v571
          %v573 = vpop.f32.mrf.mxu0
          %v574 = vpop.f32.mrf.mxu0
          %v575 = vadd.f32 %v500, %v574
          %v576 = vpop.f32.mrf.mxu0
          %577 = vmatprep.mubr.bf16.mxu0 0
          %578 = vmatmul.mubr.bf16.gmra.mxu0 %v519
          %v579 = vpop.f32.mrf.mxu0
          %v580 = vadd.f32 %v500, %v579
          %v581 = vpop.f32.mrf.mxu0
          %v582 = vpop.f32.mrf.mxu0
          %v583 = vadd.f32 %v500, %v582
          %v584 = vpop.f32.mrf.mxu0
          %585 = vdwg.mxu0
          %v586 = vld [vmem:[%s4] sm:$0x1]
          %v587 = vmul.f32 %v556, %v556
          %v588 = vmul.f32 %v559, %v559
          %v589 = vmul.f32 %v564, %v564
          %v590 = vmul.f32 %v567, %v567
          %v591 = vmul.f32 %v572, %v572
          %v592 = vmul.f32 %v575, %v575
          %v593 = vmul.f32 %v580, %v580
          %v594 = vmul.f32 %v583, %v583
          %vm595 = vcmask 261120
          %v596 = vsel %vm595, %v587, 0.0
          %597 = vadd.xlane.f32.xlu0 %v596
          %v598 = vpop.xlane.xlu0 %597
          %v599 = vsel %vm595, %v588, 0.0
          %600 = vadd.xlane.f32.xlu0 %v599
          %v601 = vpop.xlane.xlu0 %600
          %v602 = vsel %vm595, %v589, 0.0
          %603 = vadd.xlane.f32.xlu0 %v602
          %v604 = vpop.xlane.xlu0 %603
          %v605 = vsel %vm595, %v590, 0.0
          %606 = vadd.xlane.f32.xlu0 %v605
          %v607 = vpop.xlane.xlu0 %606
          %v608 = vsel %vm595, %v591, 0.0
          %609 = vadd.xlane.f32.xlu0 %v608
          %v610 = vpop.xlane.xlu0 %609
          %v611 = vsel %vm595, %v592, 0.0
          %612 = vadd.xlane.f32.xlu0 %v611
          %v613 = vpop.xlane.xlu0 %612
          %v614 = vsel %vm595, %v593, 0.0
          %615 = vadd.xlane.f32.xlu0 %v614
          %v616 = vpop.xlane.xlu0 %615
          %v617 = vsel %vm595, %v594, 0.0
          %618 = vadd.xlane.f32.xlu0 %v617
          %v619 = vpop.xlane.xlu0 %618
          %v620 = vrcp.pop 32.0
          %v621 = vmul.f32 %v598, %v620
          %v622 = vmul.f32 %v601, %v620
          %v623 = vmul.f32 %v604, %v620
          %v624 = vmul.f32 %v607, %v620
          %v625 = vmul.f32 %v610, %v620
          %v626 = vmul.f32 %v613, %v620
          %v627 = vmul.f32 %v616, %v620
          %v628 = vmul.f32 %v619, %v620
          %v629 = vadd.f32 %v621, 1e-06
          %v630 = vadd.f32 %v622, 1e-06
          %v631 = vadd.f32 %v623, 1e-06
          %v632 = vadd.f32 %v624, 1e-06
          %v633 = vadd.f32 %v625, 1e-06
          %v634 = vadd.f32 %v626, 1e-06
          %v635 = vadd.f32 %v627, 1e-06
          %v636 = vadd.f32 %v628, 1e-06
          %v637 = vrsqrt.pop %v629
          %v638 = vrsqrt.pop %v630
          %v639 = vrsqrt.pop %v631
          %v640 = vrsqrt.pop %v632
          %v641 = vrsqrt.pop %v633
          %v642 = vrsqrt.pop %v634
          %v643 = vrsqrt.pop %v635
          %v644 = vrsqrt.pop %v636
          %v645 = vmul.f32 %v556, %v637
          %v646 = vmul.f32 %v559, %v638
          %v647 = vmul.f32 %v564, %v639
          %v648 = vmul.f32 %v567, %v640
          %v649 = vmul.f32 %v572, %v641
          %v650 = vmul.f32 %v575, %v642
          %v651 = vmul.f32 %v580, %v643
          %v652 = vmul.f32 %v583, %v644
          %v654 = vlaneseq
          %v655 = vshrl.u32 %v654, 7
          %v656 = vsub.s32 0, %v655
          %v657 = vrot.slane %v586, %v656
          %v659 = vmul.f32 %v645, %v657
          %v660 = vmul.f32 %v646, %v657
          %v661 = vmul.f32 %v647, %v657
          %v662 = vmul.f32 %v648, %v657
          %v663 = vmul.f32 %v649, %v657
          %v664 = vmul.f32 %v650, %v657
          %v665 = vmul.f32 %v651, %v657
          %v666 = vmul.f32 %v652, %v657
          %vm667 = vcmp.ge.f32.partialorder %v659, 0.0
          %vm668 = vcmp.ge.f32.partialorder %v660, 0.0
          %vm669 = vcmp.ge.f32.partialorder %v661, 0.0
          %vm670 = vcmp.ge.f32.partialorder %v662, 0.0
          %vm671 = vcmp.ge.f32.partialorder %v663, 0.0
          %vm672 = vcmp.ge.f32.partialorder %v664, 0.0
          %vm673 = vcmp.ge.f32.partialorder %v665, 0.0
          %vm674 = vcmp.ge.f32.partialorder %v666, 0.0
          %v675 = vmul.f32 %v659, 0.01
          %v676 = vmul.f32 %v660, 0.01
          %v677 = vmul.f32 %v661, 0.01
          %v678 = vmul.f32 %v662, 0.01
          %v679 = vmul.f32 %v663, 0.01
          %v680 = vmul.f32 %v664, 0.01
          %v681 = vmul.f32 %v665, 0.01
          %v682 = vmul.f32 %v666, 0.01
          %v683 = vsel %vm667, %v659, %v675
          %v684 = vsel %vm668, %v660, %v676
          %v685 = vsel %vm669, %v661, %v677
          %v686 = vsel %vm670, %v662, %v678
          %v687 = vsel %vm671, %v663, %v679
          %v688 = vsel %vm672, %v664, %v680
          %v689 = vsel %vm673, %v665, %v681
          %v690 = vsel %vm674, %v666, %v682
          %v691 = vpack.c.bf16 %v683, %v683
          %v692 = vpack.c.bf16 %v684, %v684
          %v693 = vpack.c.bf16 %v685, %v685
          %v694 = vpack.c.bf16 %v686, %v686
          %v695 = vpack.c.bf16 %v687, %v687
          %v696 = vpack.c.bf16 %v688, %v688
          %v697 = vpack.c.bf16 %v689, %v689
          %v698 = vpack.c.bf16 %v690, %v690
          %v707 = vunpack.c.l.b16 %v691
          %v708 = vunpack.c.l.b16 %v692
          %v709 = vunpack.c.l.b16 %v693
          %v710 = vunpack.c.l.b16 %v694
          %v711 = vunpack.c.l.b16 %v695
          %v712 = vunpack.c.l.b16 %v696
          %v713 = vunpack.c.l.b16 %v697
          %v714 = vunpack.c.l.b16 %v698
          %v715 = vpack.c.b16 %v707, %v707
          %v716 = vpack.c.b16 %v708, %v708
          %v717 = vpack.c.b16 %v709, %v709
          %v718 = vpack.c.b16 %v710, %v710
          %v719 = vpack.c.b16 %v711, %v711
          %v720 = vpack.c.b16 %v712, %v712
          %v721 = vpack.c.b16 %v713, %v713
          %v722 = vpack.c.b16 %v714, %v714
          %v724 = vshrl.u32 %v715, 16
          %v726 = vrot.slane %v724, 7
          %v727 = vshll.u32 %v715, 16
          %v729 = vor.u32 %v726, %v727
          %v730 = vrot.slane %v726, 4
          %v732 = vshrl.u32 %v716, 16
          %v734 = vrot.slane %v732, 7
          %v735 = vshll.u32 %v716, 16
          %v737 = vor.u32 %v734, %v735
          %v738 = vrot.slane %v734, 4
          %v740 = vshrl.u32 %v717, 16
          %v742 = vrot.slane %v740, 7
          %v743 = vshll.u32 %v717, 16
          %v745 = vor.u32 %v742, %v743
          %v746 = vrot.slane %v742, 4
          %v748 = vshrl.u32 %v718, 16
          %v750 = vrot.slane %v748, 7
          %v751 = vshll.u32 %v718, 16
          %v753 = vor.u32 %v750, %v751
          %v754 = vrot.slane %v750, 4
          %v756 = vshrl.u32 %v719, 16
          %v758 = vrot.slane %v756, 7
          %v759 = vshll.u32 %v719, 16
          %v761 = vor.u32 %v758, %v759
          %v762 = vrot.slane %v758, 4
          %v764 = vshrl.u32 %v720, 16
          %v766 = vrot.slane %v764, 7
          %v767 = vshll.u32 %v720, 16
          %v769 = vor.u32 %v766, %v767
          %v770 = vrot.slane %v766, 4
          %v772 = vshrl.u32 %v721, 16
          %v774 = vrot.slane %v772, 7
          %v775 = vshll.u32 %v721, 16
          %v777 = vor.u32 %v774, %v775
          %v778 = vrot.slane %v774, 4
          %v780 = vshrl.u32 %v722, 16
          %v782 = vrot.slane %v780, 7
          %v783 = vshll.u32 %v722, 16
          %v785 = vor.u32 %v782, %v783
          %v786 = vrot.slane %v782, 4
          %s803 = scalar_lea.vmem [#allocation2], 88
          %vm804 = vcmask 257024
          %vm805 = vsmask.f32 7938
          %vm806 = vmand %vm804, %vm805
          %v807 = vld [vmem:[%s803] sm:$0xf]
          %v808 = vsel %vm806, %v729, %v807
          %809 = vst [vmem:[%s803] sm:$0xf] %v808
          %vm810 = vcmask 253952
          %vm811 = vsmask.f32 256
          %vm812 = vmand %vm810, %vm811
          %v813 = vld [vmem:[%s803 + $0x4] sm:$0x1]
          %v814 = vsel %vm812, %v730, %v813
          %815 = vst [vmem:[%s803 + $0x4] sm:$0x1] %v814
          %v816 = vld [vmem:[%s803 + $0x8] sm:$0xf]
          %v817 = vsel %vm806, %v737, %v816
          %818 = vst [vmem:[%s803 + $0x8] sm:$0xf] %v817
          %v819 = vld [vmem:[%s803 + $0xc] sm:$0x1]
          %v820 = vsel %vm812, %v738, %v819
          %821 = vst [vmem:[%s803 + $0xc] sm:$0x1] %v820
          %v822 = vld [vmem:[%s803 + $0x10] sm:$0xf]
          %v823 = vsel %vm806, %v745, %v822
          %824 = vst [vmem:[%s803 + $0x10] sm:$0xf] %v823
          %v825 = vld [vmem:[%s803 + $0x14] sm:$0x1]
          %v826 = vsel %vm812, %v746, %v825
          %827 = vst [vmem:[%s803 + $0x14] sm:$0x1] %v826
          %v828 = vld [vmem:[%s803 + $0x18] sm:$0xf]
          %v829 = vsel %vm806, %v753, %v828
          %830 = vst [vmem:[%s803 + $0x18] sm:$0xf] %v829
          %v831 = vld [vmem:[%s803 + $0x1c] sm:$0x1]
          %v832 = vsel %vm812, %v754, %v831
          %833 = vst [vmem:[%s803 + $0x1c] sm:$0x1] %v832
          %v834 = vld [vmem:[%s803 + $0x20] sm:$0xf]
          %v835 = vsel %vm806, %v761, %v834
          %836 = vst [vmem:[%s803 + $0x20] sm:$0xf] %v835
          %v837 = vld [vmem:[%s803 + $0x24] sm:$0x1]
          %v838 = vsel %vm812, %v762, %v837
          %839 = vst [vmem:[%s803 + $0x24] sm:$0x1] %v838
          %v840 = vld [vmem:[%s803 + $0x28] sm:$0xf]
          %v841 = vsel %vm806, %v769, %v840
          %842 = vst [vmem:[%s803 + $0x28] sm:$0xf] %v841
          %v843 = vld [vmem:[%s803 + $0x2c] sm:$0x1]
          %v844 = vsel %vm812, %v770, %v843
          %845 = vst [vmem:[%s803 + $0x2c] sm:$0x1] %v844
          %v846 = vld [vmem:[%s803 + $0x30] sm:$0xf]
          %v847 = vsel %vm806, %v777, %v846
          %848 = vst [vmem:[%s803 + $0x30] sm:$0xf] %v847
          %v849 = vld [vmem:[%s803 + $0x34] sm:$0x1]
          %v850 = vsel %vm812, %v778, %v849
          %851 = vst [vmem:[%s803 + $0x34] sm:$0x1] %v850
          %v852 = vld [vmem:[%s803 + $0x38] sm:$0xf]
          %v853 = vsel %vm806, %v785, %v852
          %854 = vst [vmem:[%s803 + $0x38] sm:$0xf] %v853
          %v855 = vld [vmem:[%s803 + $0x3c] sm:$0x1]
          %v856 = vsel %vm812, %v786, %v855
          %857 = vst [vmem:[%s803 + $0x3c] sm:$0x1] %v856
          %v858 = vld [vmem:[%s410] sm:$0xff]
          %v859 = vld [vmem:[%s410 + $0x8] sm:$0xff]
          %v860 = vld [vmem:[%s410 + $0x10] sm:$0xff]
          %v861 = vld [vmem:[%s410 + $0x18] sm:$0xff]
          %v862 = vld [vmem:[%s410 + $0x20] sm:$0xff]
          %v863 = vld [vmem:[%s410 + $0x28] sm:$0xff]
          %v864 = vld [vmem:[%s410 + $0x30] sm:$0xff]
          %v865 = vld [vmem:[%s410 + $0x38] sm:$0xff]
          %v866 = vpack.c.bf16 %v859, %v858
          %v867 = vpack.c.bf16 %v861, %v860
          %v868 = vpack.c.bf16 %v863, %v862
          %v869 = vpack.c.bf16 %v865, %v864
          %v870 = vld [vmem:[%s2] sm:$0xf]
          %v871 = vld [vmem:[%s2 + $0x4] sm:$0xf]
          %v872 = vld [vmem:[%s3] sm:$0x1]
          %v874 = vlaneseq
          %v875 = vshrl.u32 %v874, 7
          %v876 = vsub.s32 0, %v875
          %v877 = vrot.slane %v872, %v876
          %v881 = vunpack.c.l.b16 %v870
          %v882 = vunpack.c.l.b16 %v871
          %v883 = vpack.c.b16 %v882, %v881
          %v886 = vsel %vm508, %v866, 0
          %v889 = vsel %vm508, %v867, 0
          %v892 = vsel %vm508, %v868, 0
          %v895 = vsel %vm508, %v869, 0
          %897 = vmatprep.subr.bf16.mxu0 0
          %898 = vmatpush1.bf16.msra.mxu0 0
          %899 = vmatprep.subr.bf16.mxu0 0
          %900 = vmatpush1.bf16.msra.mxu0 0
          %901 = vmatprep.subr.bf16.mxu0 0
          %902 = vmatpush1.bf16.msra.mxu0 0
          %903 = vmatprep.subr.bf16.mxu0 0
          %904 = vmatpush1.bf16.msra.mxu0 0
          %905 = vmatprep.subr.bf16.mxu0 0
          %906 = vmatpush1.bf16.msra.mxu0 0
          %907 = vmatprep.subr.bf16.mxu0 0
          %908 = vmatpush1.bf16.msra.mxu0 0
          %909 = vmatprep.subr.bf16.mxu0 0
          %910 = vmatpush1.bf16.msra.mxu0 0
          %911 = vmatprep.subr.bf16.mxu0 0
          %912 = vmatpush1.bf16.msra.mxu0 %v883
          %913 = vmatprep.subr.bf16.mxu0 0
          %914 = vmatpush2.bf16.msra.mxu0 0
          %915 = vmatprep.subr.bf16.mxu0 0
          %916 = vmatpush2.bf16.msra.mxu0 0
          %917 = vmatprep.subr.bf16.mxu0 0
          %918 = vmatpush2.bf16.msra.mxu0 0
          %919 = vmatprep.subr.bf16.mxu0 0
          %920 = vmatpush2.bf16.msra.mxu0 0
          %921 = vmatprep.subr.bf16.mxu0 0
          %922 = vmatpush2.bf16.msra.mxu0 0
          %923 = vmatprep.subr.bf16.mxu0 0
          %924 = vmatpush2.bf16.msra.mxu0 0
          %925 = vmatprep.subr.bf16.mxu0 0
          %926 = vmatpush2.bf16.msra.mxu0 0
          %927 = vmatprep.subr.bf16.mxu0 0
          %928 = vmatpush2.bf16.msra.mxu0 0
          %929 = vmatprep.mubr.bf16.mxu0 0
          %930 = vmatmul.mubr.bf16.gmra.mxu0 %v886
          %v931 = vpop.f32.mrf.mxu0
          %v932 = vadd.f32 %v877, %v931
          %v933 = vpop.f32.mrf.mxu0
          %v934 = vpop.f32.mrf.mxu0
          %v935 = vadd.f32 %v877, %v934
          %v936 = vpop.f32.mrf.mxu0
          %937 = vmatprep.mubr.bf16.mxu0 0
          %938 = vmatmul.mubr.bf16.gmra.mxu0 %v889
          %v939 = vpop.f32.mrf.mxu0
          %v940 = vadd.f32 %v877, %v939
          %v941 = vpop.f32.mrf.mxu0
          %v942 = vpop.f32.mrf.mxu0
          %v943 = vadd.f32 %v877, %v942
          %v944 = vpop.f32.mrf.mxu0
          %945 = vmatprep.mubr.bf16.mxu0 0
          %946 = vmatmul.mubr.bf16.gmra.mxu0 %v892
          %v947 = vpop.f32.mrf.mxu0
          %v948 = vadd.f32 %v877, %v947
          %v949 = vpop.f32.mrf.mxu0
          %v950 = vpop.f32.mrf.mxu0
          %v951 = vadd.f32 %v877, %v950
          %v952 = vpop.f32.mrf.mxu0
          %953 = vmatprep.mubr.bf16.mxu0 0
          %954 = vmatmul.mubr.bf16.gmra.mxu0 %v895
          %v955 = vpop.f32.mrf.mxu0
          %v956 = vadd.f32 %v877, %v955
          %v957 = vpop.f32.mrf.mxu0
          %v958 = vpop.f32.mrf.mxu0
          %v959 = vadd.f32 %v877, %v958
          %v960 = vpop.f32.mrf.mxu0
          %961 = vdwg.mxu0
          %v962 = vld [vmem:[%s4] sm:$0x1]
          %v963 = vmul.f32 %v932, %v932
          %v964 = vmul.f32 %v935, %v935
          %v965 = vmul.f32 %v940, %v940
          %v966 = vmul.f32 %v943, %v943
          %v967 = vmul.f32 %v948, %v948
          %v968 = vmul.f32 %v951, %v951
          %v969 = vmul.f32 %v956, %v956
          %v970 = vmul.f32 %v959, %v959
          %v971 = vsel %vm595, %v963, 0.0
          %972 = vadd.xlane.f32.xlu0 %v971
          %v973 = vpop.xlane.xlu0 %972
          %v974 = vsel %vm595, %v964, 0.0
          %975 = vadd.xlane.f32.xlu0 %v974
          %v976 = vpop.xlane.xlu0 %975
          %v977 = vsel %vm595, %v965, 0.0
          %978 = vadd.xlane.f32.xlu0 %v977
          %v979 = vpop.xlane.xlu0 %978
          %v980 = vsel %vm595, %v966, 0.0
          %981 = vadd.xlane.f32.xlu0 %v980
          %v982 = vpop.xlane.xlu0 %981
          %v983 = vsel %vm595, %v967, 0.0
          %984 = vadd.xlane.f32.xlu0 %v983
          %v985 = vpop.xlane.xlu0 %984
          %v986 = vsel %vm595, %v968, 0.0
          %987 = vadd.xlane.f32.xlu0 %v986
          %v988 = vpop.xlane.xlu0 %987
          %v989 = vsel %vm595, %v969, 0.0
          %990 = vadd.xlane.f32.xlu0 %v989
          %v991 = vpop.xlane.xlu0 %990
          %v992 = vsel %vm595, %v970, 0.0
          %993 = vadd.xlane.f32.xlu0 %v992
          %v994 = vpop.xlane.xlu0 %993
          %v995 = vmul.f32 %v973, %v620
          %v996 = vmul.f32 %v976, %v620
          %v997 = vmul.f32 %v979, %v620
          %v998 = vmul.f32 %v982, %v620
          %v999 = vmul.f32 %v985, %v620
          %v1000 = vmul.f32 %v988, %v620
          %v1001 = vmul.f32 %v991, %v620
          %v1002 = vmul.f32 %v994, %v620
          %v1003 = vadd.f32 %v995, 1e-06
          %v1004 = vadd.f32 %v996, 1e-06
          %v1005 = vadd.f32 %v997, 1e-06
          %v1006 = vadd.f32 %v998, 1e-06
          %v1007 = vadd.f32 %v999, 1e-06
          %v1008 = vadd.f32 %v1000, 1e-06
          %v1009 = vadd.f32 %v1001, 1e-06
          %v1010 = vadd.f32 %v1002, 1e-06
          %v1011 = vrsqrt.pop %v1003
          %v1012 = vrsqrt.pop %v1004
          %v1013 = vrsqrt.pop %v1005
          %v1014 = vrsqrt.pop %v1006
          %v1015 = vrsqrt.pop %v1007
          %v1016 = vrsqrt.pop %v1008
          %v1017 = vrsqrt.pop %v1009
          %v1018 = vrsqrt.pop %v1010
          %v1019 = vmul.f32 %v932, %v1011
          %v1020 = vmul.f32 %v935, %v1012
          %v1021 = vmul.f32 %v940, %v1013
          %v1022 = vmul.f32 %v943, %v1014
          %v1023 = vmul.f32 %v948, %v1015
          %v1024 = vmul.f32 %v951, %v1016
          %v1025 = vmul.f32 %v956, %v1017
          %v1026 = vmul.f32 %v959, %v1018
          %v1028 = vlaneseq
          %v1029 = vshrl.u32 %v1028, 7
          %v1030 = vsub.s32 0, %v1029
          %v1031 = vrot.slane %v962, %v1030
          %v1033 = vmul.f32 %v1019, %v1031
          %v1034 = vmul.f32 %v1020, %v1031
          %v1035 = vmul.f32 %v1021, %v1031
          %v1036 = vmul.f32 %v1022, %v1031
          %v1037 = vmul.f32 %v1023, %v1031
          %v1038 = vmul.f32 %v1024, %v1031
          %v1039 = vmul.f32 %v1025, %v1031
          %v1040 = vmul.f32 %v1026, %v1031
          %vm1041 = vcmp.ge.f32.partialorder %v1033, 0.0
          %vm1042 = vcmp.ge.f32.partialorder %v1034, 0.0
          %vm1043 = vcmp.ge.f32.partialorder %v1035, 0.0
          %vm1044 = vcmp.ge.f32.partialorder %v1036, 0.0
          %vm1045 = vcmp.ge.f32.partialorder %v1037, 0.0
          %vm1046 = vcmp.ge.f32.partialorder %v1038, 0.0
          %vm1047 = vcmp.ge.f32.partialorder %v1039, 0.0
          %vm1048 = vcmp.ge.f32.partialorder %v1040, 0.0
          %v1049 = vmul.f32 %v1033, 0.01
          %v1050 = vmul.f32 %v1034, 0.01
          %v1051 = vmul.f32 %v1035, 0.01
          %v1052 = vmul.f32 %v1036, 0.01
          %v1053 = vmul.f32 %v1037, 0.01
          %v1054 = vmul.f32 %v1038, 0.01
          %v1055 = vmul.f32 %v1039, 0.01
          %v1056 = vmul.f32 %v1040, 0.01
          %v1057 = vsel %vm1041, %v1033, %v1049
          %v1058 = vsel %vm1042, %v1034, %v1050
          %v1059 = vsel %vm1043, %v1035, %v1051
          %v1060 = vsel %vm1044, %v1036, %v1052
          %v1061 = vsel %vm1045, %v1037, %v1053
          %v1062 = vsel %vm1046, %v1038, %v1054
          %v1063 = vsel %vm1047, %v1039, %v1055
          %v1064 = vsel %vm1048, %v1040, %v1056
          %v1065 = vpack.c.bf16 %v1057, %v1057
          %v1066 = vpack.c.bf16 %v1058, %v1058
          %v1067 = vpack.c.bf16 %v1059, %v1059
          %v1068 = vpack.c.bf16 %v1060, %v1060
          %v1069 = vpack.c.bf16 %v1061, %v1061
          %v1070 = vpack.c.bf16 %v1062, %v1062
          %v1071 = vpack.c.bf16 %v1063, %v1063
          %v1072 = vpack.c.bf16 %v1064, %v1064
          %v1081 = vunpack.c.l.b16 %v1065
          %v1082 = vunpack.c.l.b16 %v1066
          %v1083 = vunpack.c.l.b16 %v1067
          %v1084 = vunpack.c.l.b16 %v1068
          %v1085 = vunpack.c.l.b16 %v1069
          %v1086 = vunpack.c.l.b16 %v1070
          %v1087 = vunpack.c.l.b16 %v1071
          %v1088 = vunpack.c.l.b16 %v1072
          %v1089 = vpack.c.b16 %v1081, %v1081
          %v1090 = vpack.c.b16 %v1082, %v1082
          %v1091 = vpack.c.b16 %v1083, %v1083
          %v1092 = vpack.c.b16 %v1084, %v1084
          %v1093 = vpack.c.b16 %v1085, %v1085
          %v1094 = vpack.c.b16 %v1086, %v1086
          %v1095 = vpack.c.b16 %v1087, %v1087
          %v1096 = vpack.c.b16 %v1088, %v1088
          %v1098 = vshrl.u32 %v1089, 16
          %v1100 = vrot.slane %v1098, 7
          %v1101 = vshll.u32 %v1089, 16
          %v1103 = vor.u32 %v1100, %v1101
          %v1104 = vrot.slane %v1100, 4
          %v1106 = vshrl.u32 %v1090, 16
          %v1108 = vrot.slane %v1106, 7
          %v1109 = vshll.u32 %v1090, 16
          %v1111 = vor.u32 %v1108, %v1109
          %v1112 = vrot.slane %v1108, 4
          %v1114 = vshrl.u32 %v1091, 16
          %v1116 = vrot.slane %v1114, 7
          %v1117 = vshll.u32 %v1091, 16
          %v1119 = vor.u32 %v1116, %v1117
          %v1120 = vrot.slane %v1116, 4
          %v1122 = vshrl.u32 %v1092, 16
          %v1124 = vrot.slane %v1122, 7
          %v1125 = vshll.u32 %v1092, 16
          %v1127 = vor.u32 %v1124, %v1125
          %v1128 = vrot.slane %v1124, 4
          %v1130 = vshrl.u32 %v1093, 16
          %v1132 = vrot.slane %v1130, 7
          %v1133 = vshll.u32 %v1093, 16
          %v1135 = vor.u32 %v1132, %v1133
          %v1136 = vrot.slane %v1132, 4
          %v1138 = vshrl.u32 %v1094, 16
          %v1140 = vrot.slane %v1138, 7
          %v1141 = vshll.u32 %v1094, 16
          %v1143 = vor.u32 %v1140, %v1141
          %v1144 = vrot.slane %v1140, 4
          %v1146 = vshrl.u32 %v1095, 16
          %v1148 = vrot.slane %v1146, 7
          %v1149 = vshll.u32 %v1095, 16
          %v1151 = vor.u32 %v1148, %v1149
          %v1152 = vrot.slane %v1148, 4
          %v1154 = vshrl.u32 %v1096, 16
          %v1156 = vrot.slane %v1154, 7
          %v1157 = vshll.u32 %v1096, 16
          %v1159 = vor.u32 %v1156, %v1157
          %v1160 = vrot.slane %v1156, 4
          %s1177 = scalar_lea.vmem [#allocation2], 168
          %v1178 = vld [vmem:[%s1177] sm:$0xf]
          %v1179 = vsel %vm806, %v1103, %v1178
          %1180 = vst [vmem:[%s1177] sm:$0xf] %v1179
          %v1181 = vld [vmem:[%s1177 + $0x4] sm:$0x1]
          %v1182 = vsel %vm812, %v1104, %v1181
          %1183 = vst [vmem:[%s1177 + $0x4] sm:$0x1] %v1182
          %v1184 = vld [vmem:[%s1177 + $0x8] sm:$0xf]
          %v1185 = vsel %vm806, %v1111, %v1184
          %1186 = vst [vmem:[%s1177 + $0x8] sm:$0xf] %v1185
          %v1187 = vld [vmem:[%s1177 + $0xc] sm:$0x1]
          %v1188 = vsel %vm812, %v1112, %v1187
          %1189 = vst [vmem:[%s1177 + $0xc] sm:$0x1] %v1188
          %v1190 = vld [vmem:[%s1177 + $0x10] sm:$0xf]
          %v1191 = vsel %vm806, %v1119, %v1190
          %1192 = vst [vmem:[%s1177 + $0x10] sm:$0xf] %v1191
          %v1193 = vld [vmem:[%s1177 + $0x14] sm:$0x1]
          %v1194 = vsel %vm812, %v1120, %v1193
          %1195 = vst [vmem:[%s1177 + $0x14] sm:$0x1] %v1194
          %v1196 = vld [vmem:[%s1177 + $0x18] sm:$0xf]
          %v1197 = vsel %vm806, %v1127, %v1196
          %1198 = vst [vmem:[%s1177 + $0x18] sm:$0xf] %v1197
          %v1199 = vld [vmem:[%s1177 + $0x1c] sm:$0x1]
          %v1200 = vsel %vm812, %v1128, %v1199
          %1201 = vst [vmem:[%s1177 + $0x1c] sm:$0x1] %v1200
          %v1202 = vld [vmem:[%s1177 + $0x20] sm:$0xf]
          %v1203 = vsel %vm806, %v1135, %v1202
          %1204 = vst [vmem:[%s1177 + $0x20] sm:$0xf] %v1203
          %v1205 = vld [vmem:[%s1177 + $0x24] sm:$0x1]
          %v1206 = vsel %vm812, %v1136, %v1205
          %1207 = vst [vmem:[%s1177 + $0x24] sm:$0x1] %v1206
          %v1208 = vld [vmem:[%s1177 + $0x28] sm:$0xf]
          %v1209 = vsel %vm806, %v1143, %v1208
          %1210 = vst [vmem:[%s1177 + $0x28] sm:$0xf] %v1209
          %v1211 = vld [vmem:[%s1177 + $0x2c] sm:$0x1]
          %v1212 = vsel %vm812, %v1144, %v1211
          %1213 = vst [vmem:[%s1177 + $0x2c] sm:$0x1] %v1212
          %v1214 = vld [vmem:[%s1177 + $0x30] sm:$0xf]
          %v1215 = vsel %vm806, %v1151, %v1214
          %1216 = vst [vmem:[%s1177 + $0x30] sm:$0xf] %v1215
          %v1217 = vld [vmem:[%s1177 + $0x34] sm:$0x1]
          %v1218 = vsel %vm812, %v1152, %v1217
          %1219 = vst [vmem:[%s1177 + $0x34] sm:$0x1] %v1218
          %v1220 = vld [vmem:[%s1177 + $0x38] sm:$0xf]
          %v1221 = vsel %vm806, %v1159, %v1220
          %1222 = vst [vmem:[%s1177 + $0x38] sm:$0xf] %v1221
          %v1223 = vld [vmem:[%s1177 + $0x3c] sm:$0x1]
          %v1224 = vsel %vm812, %v1160, %v1223
          %1225 = vst [vmem:[%s1177 + $0x3c] sm:$0x1] %v1224
        $region60: #{resblock3d_forward.1} parent=55 // pred_fallthru
          _
        %p1226 = scmp.gt.s32.totalorder %s28, 0
        // Predicated region
        $region61: #{resblock3d_forward.1} parent=55 // pred_check
          %p1227 = pneg %p1226
        $region62: #{resblock3d_forward.1} parent=55 // pred_check_branch
          %1229 = sbr.rel (%p1227) target = $region64
        $region63: #{resblock3d_forward.1} parent=55 // pred_region
          %s1230 = sadd.s32 %s28, 2
          %p1231 = scmp.lt.s32.totalorder %s1230, 0
          %s1232 = ssub.s32 0, %s1230
          %s1233 = scalar_select %p1231, %s1232, %s1230
          %s1234 = sdiv.u32.pop %s1233, 3
          %s1235 = srem.u32.pop %s1233, 3
          %s1236 = ssub.s32 0, %s1235
          %s1237 = scalar_select %p1231, %s1236, %s1235
          %p1238 = scmp.ne.s32.totalorder %s1237, 0
          %p1239 = scmp.lt.s32.totalorder %s1237, 0
          %p1240 = pnand %p1239, %p1238
          %p1241 = pneg %p1240
          %s1242 = sadd.s32 %s1237, 3
          %s1243 = scalar_select %p1241, %s1242, %s1237
          %s1244 = sadd.s32 %s28, 1
          %p1245 = scmp.le.s32.totalorder %s1244, 3
          // Predicated region
          $region65: #{resblock3d_forward.1} parent=63 // pred_check
            %p1246 = pneg %p1245
          $region66: #{resblock3d_forward.1} parent=63 // pred_check_branch
            %1248 = sbr.rel (%p1246) target = $region68
          $region67: #{resblock3d_forward.1} parent=63 // pred_region
            %v1249 = vld [vmem:[%s410] sm:$0xff]
            %v1250 = vld [vmem:[%s410 + $0x8] sm:$0xff]
            %v1251 = vld [vmem:[%s410 + $0x10] sm:$0xff]
            %v1252 = vld [vmem:[%s410 + $0x18] sm:$0xff]
            %v1253 = vld [vmem:[%s410 + $0x20] sm:$0xff]
            %v1254 = vld [vmem:[%s410 + $0x28] sm:$0xff]
            %v1255 = vld [vmem:[%s410 + $0x30] sm:$0xff]
            %v1256 = vld [vmem:[%s410 + $0x38] sm:$0xff]
            %v1257 = vpack.c.bf16 %v1250, %v1249
            %v1258 = vpack.c.bf16 %v1252, %v1251
            %v1259 = vpack.c.bf16 %v1254, %v1253
            %v1260 = vpack.c.bf16 %v1256, %v1255
            %v1261 = vld [vmem:[%s2] sm:$0xf]
            %v1262 = vld [vmem:[%s2 + $0x4] sm:$0xf]
            %v1263 = vld [vmem:[%s3] sm:$0x1]
            %v1265 = vlaneseq
            %v1266 = vshrl.u32 %v1265, 7
            %v1267 = vsub.s32 0, %v1266
            %v1268 = vrot.slane %v1263, %v1267
            %v1272 = vunpack.c.l.b16 %v1261
            %v1273 = vunpack.c.l.b16 %v1262
            %v1274 = vpack.c.b16 %v1273, %v1272
            %vm1276 = vcmask 130048
            %v1278 = vsel %vm1276, %v1257, 0
            %v1281 = vsel %vm1276, %v1258, 0
            %v1284 = vsel %vm1276, %v1259, 0
            %v1287 = vsel %vm1276, %v1260, 0
            %1289 = vmatprep.subr.bf16.mxu0 0
            %1290 = vmatpush1.bf16.msra.mxu0 0
            %1291 = vmatprep.subr.bf16.mxu0 0
            %1292 = vmatpush1.bf16.msra.mxu0 0
            %1293 = vmatprep.subr.bf16.mxu0 0
            %1294 = vmatpush1.bf16.msra.mxu0 0
            %1295 = vmatprep.subr.bf16.mxu0 0
            %1296 = vmatpush1.bf16.msra.mxu0 0
            %1297 = vmatprep.subr.bf16.mxu0 0
            %1298 = vmatpush1.bf16.msra.mxu0 0
            %1299 = vmatprep.subr.bf16.mxu0 0
            %1300 = vmatpush1.bf16.msra.mxu0 0
            %1301 = vmatprep.subr.bf16.mxu0 0
            %1302 = vmatpush1.bf16.msra.mxu0 0
            %1303 = vmatprep.subr.bf16.mxu0 0
            %1304 = vmatpush1.bf16.msra.mxu0 %v1274
            %1305 = vmatprep.subr.bf16.mxu0 0
            %1306 = vmatpush2.bf16.msra.mxu0 0
            %1307 = vmatprep.subr.bf16.mxu0 0
            %1308 = vmatpush2.bf16.msra.mxu0 0
            %1309 = vmatprep.subr.bf16.mxu0 0
            %1310 = vmatpush2.bf16.msra.mxu0 0
            %1311 = vmatprep.subr.bf16.mxu0 0
            %1312 = vmatpush2.bf16.msra.mxu0 0
            %1313 = vmatprep.subr.bf16.mxu0 0
            %1314 = vmatpush2.bf16.msra.mxu0 0
            %1315 = vmatprep.subr.bf16.mxu0 0
            %1316 = vmatpush2.bf16.msra.mxu0 0
            %1317 = vmatprep.subr.bf16.mxu0 0
            %1318 = vmatpush2.bf16.msra.mxu0 0
            %1319 = vmatprep.subr.bf16.mxu0 0
            %1320 = vmatpush2.bf16.msra.mxu0 0
            %1321 = vmatprep.mubr.bf16.mxu0 0
            %1322 = vmatmul.mubr.bf16.gmra.mxu0 %v1278
            %v1323 = vpop.f32.mrf.mxu0
            %v1324 = vadd.f32 %v1268, %v1323
            %v1325 = vpop.f32.mrf.mxu0
            %v1326 = vpop.f32.mrf.mxu0
            %v1327 = vadd.f32 %v1268, %v1326
            %v1328 = vpop.f32.mrf.mxu0
            %1329 = vmatprep.mubr.bf16.mxu0 0
            %1330 = vmatmul.mubr.bf16.gmra.mxu0 %v1281
            %v1331 = vpop.f32.mrf.mxu0
            %v1332 = vadd.f32 %v1268, %v1331
            %v1333 = vpop.f32.mrf.mxu0
            %v1334 = vpop.f32.mrf.mxu0
            %v1335 = vadd.f32 %v1268, %v1334
            %v1336 = vpop.f32.mrf.mxu0
            %1337 = vmatprep.mubr.bf16.mxu0 0
            %1338 = vmatmul.mubr.bf16.gmra.mxu0 %v1284
            %v1339 = vpop.f32.mrf.mxu0
            %v1340 = vadd.f32 %v1268, %v1339
            %v1341 = vpop.f32.mrf.mxu0
            %v1342 = vpop.f32.mrf.mxu0
            %v1343 = vadd.f32 %v1268, %v1342
            %v1344 = vpop.f32.mrf.mxu0
            %1345 = vmatprep.mubr.bf16.mxu0 0
            %1346 = vmatmul.mubr.bf16.gmra.mxu0 %v1287
            %v1347 = vpop.f32.mrf.mxu0
            %v1348 = vadd.f32 %v1268, %v1347
            %v1349 = vpop.f32.mrf.mxu0
            %v1350 = vpop.f32.mrf.mxu0
            %v1351 = vadd.f32 %v1268, %v1350
            %v1352 = vpop.f32.mrf.mxu0
            %1353 = vdwg.mxu0
            %v1354 = vld [vmem:[%s4] sm:$0x1]
            %v1355 = vmul.f32 %v1324, %v1324
            %v1356 = vmul.f32 %v1327, %v1327
            %v1357 = vmul.f32 %v1332, %v1332
            %v1358 = vmul.f32 %v1335, %v1335
            %v1359 = vmul.f32 %v1340, %v1340
            %v1360 = vmul.f32 %v1343, %v1343
            %v1361 = vmul.f32 %v1348, %v1348
            %v1362 = vmul.f32 %v1351, %v1351
            %vm1363 = vcmask 261120
            %v1364 = vsel %vm1363, %v1355, 0.0
            %1365 = vadd.xlane.f32.xlu0 %v1364
            %v1366 = vpop.xlane.xlu0 %1365
            %v1367 = vsel %vm1363, %v1356, 0.0
            %1368 = vadd.xlane.f32.xlu0 %v1367
            %v1369 = vpop.xlane.xlu0 %1368
            %v1370 = vsel %vm1363, %v1357, 0.0
            %1371 = vadd.xlane.f32.xlu0 %v1370
            %v1372 = vpop.xlane.xlu0 %1371
            %v1373 = vsel %vm1363, %v1358, 0.0
            %1374 = vadd.xlane.f32.xlu0 %v1373
            %v1375 = vpop.xlane.xlu0 %1374
            %v1376 = vsel %vm1363, %v1359, 0.0
            %1377 = vadd.xlane.f32.xlu0 %v1376
            %v1378 = vpop.xlane.xlu0 %1377
            %v1379 = vsel %vm1363, %v1360, 0.0
            %1380 = vadd.xlane.f32.xlu0 %v1379
            %v1381 = vpop.xlane.xlu0 %1380
            %v1382 = vsel %vm1363, %v1361, 0.0
            %1383 = vadd.xlane.f32.xlu0 %v1382
            %v1384 = vpop.xlane.xlu0 %1383
            %v1385 = vsel %vm1363, %v1362, 0.0
            %1386 = vadd.xlane.f32.xlu0 %v1385
            %v1387 = vpop.xlane.xlu0 %1386
            %v1388 = vrcp.pop 32.0
            %v1389 = vmul.f32 %v1366, %v1388
            %v1390 = vmul.f32 %v1369, %v1388
            %v1391 = vmul.f32 %v1372, %v1388
            %v1392 = vmul.f32 %v1375, %v1388
            %v1393 = vmul.f32 %v1378, %v1388
            %v1394 = vmul.f32 %v1381, %v1388
            %v1395 = vmul.f32 %v1384, %v1388
            %v1396 = vmul.f32 %v1387, %v1388
            %v1397 = vadd.f32 %v1389, 1e-06
            %v1398 = vadd.f32 %v1390, 1e-06
            %v1399 = vadd.f32 %v1391, 1e-06
            %v1400 = vadd.f32 %v1392, 1e-06
            %v1401 = vadd.f32 %v1393, 1e-06
            %v1402 = vadd.f32 %v1394, 1e-06
            %v1403 = vadd.f32 %v1395, 1e-06
            %v1404 = vadd.f32 %v1396, 1e-06
            %v1405 = vrsqrt.pop %v1397
            %v1406 = vrsqrt.pop %v1398
            %v1407 = vrsqrt.pop %v1399
            %v1408 = vrsqrt.pop %v1400
            %v1409 = vrsqrt.pop %v1401
            %v1410 = vrsqrt.pop %v1402
            %v1411 = vrsqrt.pop %v1403
            %v1412 = vrsqrt.pop %v1404
            %v1413 = vmul.f32 %v1324, %v1405
            %v1414 = vmul.f32 %v1327, %v1406
            %v1415 = vmul.f32 %v1332, %v1407
            %v1416 = vmul.f32 %v1335, %v1408
            %v1417 = vmul.f32 %v1340, %v1409
            %v1418 = vmul.f32 %v1343, %v1410
            %v1419 = vmul.f32 %v1348, %v1411
            %v1420 = vmul.f32 %v1351, %v1412
            %v1422 = vlaneseq
            %v1423 = vshrl.u32 %v1422, 7
            %v1424 = vsub.s32 0, %v1423
            %v1425 = vrot.slane %v1354, %v1424
            %v1427 = vmul.f32 %v1413, %v1425
            %v1428 = vmul.f32 %v1414, %v1425
            %v1429 = vmul.f32 %v1415, %v1425
            %v1430 = vmul.f32 %v1416, %v1425
            %v1431 = vmul.f32 %v1417, %v1425
            %v1432 = vmul.f32 %v1418, %v1425
            %v1433 = vmul.f32 %v1419, %v1425
            %v1434 = vmul.f32 %v1420, %v1425
            %vm1435 = vcmp.ge.f32.partialorder %v1427, 0.0
            %vm1436 = vcmp.ge.f32.partialorder %v1428, 0.0
            %vm1437 = vcmp.ge.f32.partialorder %v1429, 0.0
            %vm1438 = vcmp.ge.f32.partialorder %v1430, 0.0
            %vm1439 = vcmp.ge.f32.partialorder %v1431, 0.0
            %vm1440 = vcmp.ge.f32.partialorder %v1432, 0.0
            %vm1441 = vcmp.ge.f32.partialorder %v1433, 0.0
            %vm1442 = vcmp.ge.f32.partialorder %v1434, 0.0
            %v1443 = vmul.f32 %v1427, 0.01
            %v1444 = vmul.f32 %v1428, 0.01
            %v1445 = vmul.f32 %v1429, 0.01
            %v1446 = vmul.f32 %v1430, 0.01
            %v1447 = vmul.f32 %v1431, 0.01
            %v1448 = vmul.f32 %v1432, 0.01
            %v1449 = vmul.f32 %v1433, 0.01
            %v1450 = vmul.f32 %v1434, 0.01
            %v1451 = vsel %vm1435, %v1427, %v1443
            %v1452 = vsel %vm1436, %v1428, %v1444
            %v1453 = vsel %vm1437, %v1429, %v1445
            %v1454 = vsel %vm1438, %v1430, %v1446
            %v1455 = vsel %vm1439, %v1431, %v1447
            %v1456 = vsel %vm1440, %v1432, %v1448
            %v1457 = vsel %vm1441, %v1433, %v1449
            %v1458 = vsel %vm1442, %v1434, %v1450
            %v1459 = vpack.c.bf16 %v1451, %v1451
            %v1460 = vpack.c.bf16 %v1452, %v1452
            %v1461 = vpack.c.bf16 %v1453, %v1453
            %v1462 = vpack.c.bf16 %v1454, %v1454
            %v1463 = vpack.c.bf16 %v1455, %v1455
            %v1464 = vpack.c.bf16 %v1456, %v1456
            %v1465 = vpack.c.bf16 %v1457, %v1457
            %v1466 = vpack.c.bf16 %v1458, %v1458
            %v1475 = vunpack.c.l.b16 %v1459
            %v1476 = vunpack.c.l.b16 %v1460
            %v1477 = vunpack.c.l.b16 %v1461
            %v1478 = vunpack.c.l.b16 %v1462
            %v1479 = vunpack.c.l.b16 %v1463
            %v1480 = vunpack.c.l.b16 %v1464
            %v1481 = vunpack.c.l.b16 %v1465
            %v1482 = vunpack.c.l.b16 %v1466
            %v1483 = vpack.c.b16 %v1475, %v1475
            %v1484 = vpack.c.b16 %v1476, %v1476
            %v1485 = vpack.c.b16 %v1477, %v1477
            %v1486 = vpack.c.b16 %v1478, %v1478
            %v1487 = vpack.c.b16 %v1479, %v1479
            %v1488 = vpack.c.b16 %v1480, %v1480
            %v1489 = vpack.c.b16 %v1481, %v1481
            %v1490 = vpack.c.b16 %v1482, %v1482
            %v1492 = vshrl.u32 %v1483, 16
            %v1494 = vrot.slane %v1492, 7
            %v1495 = vshll.u32 %v1483, 16
            %v1497 = vor.u32 %v1494, %v1495
            %v1498 = vrot.slane %v1494, 4
            %v1500 = vshrl.u32 %v1484, 16
            %v1502 = vrot.slane %v1500, 7
            %v1503 = vshll.u32 %v1484, 16
            %v1505 = vor.u32 %v1502, %v1503
            %v1506 = vrot.slane %v1502, 4
            %v1508 = vshrl.u32 %v1485, 16
            %v1510 = vrot.slane %v1508, 7
            %v1511 = vshll.u32 %v1485, 16
            %v1513 = vor.u32 %v1510, %v1511
            %v1514 = vrot.slane %v1510, 4
            %v1516 = vshrl.u32 %v1486, 16
            %v1518 = vrot.slane %v1516, 7
            %v1519 = vshll.u32 %v1486, 16
            %v1521 = vor.u32 %v1518, %v1519
            %v1522 = vrot.slane %v1518, 4
            %v1524 = vshrl.u32 %v1487, 16
            %v1526 = vrot.slane %v1524, 7
            %v1527 = vshll.u32 %v1487, 16
            %v1529 = vor.u32 %v1526, %v1527
            %v1530 = vrot.slane %v1526, 4
            %v1532 = vshrl.u32 %v1488, 16
            %v1534 = vrot.slane %v1532, 7
            %v1535 = vshll.u32 %v1488, 16
            %v1537 = vor.u32 %v1534, %v1535
            %v1538 = vrot.slane %v1534, 4
            %v1540 = vshrl.u32 %v1489, 16
            %v1542 = vrot.slane %v1540, 7
            %v1543 = vshll.u32 %v1489, 16
            %v1545 = vor.u32 %v1542, %v1543
            %v1546 = vrot.slane %v1542, 4
            %v1548 = vshrl.u32 %v1490, 16
            %v1550 = vrot.slane %v1548, 7
            %v1551 = vshll.u32 %v1490, 16
            %v1553 = vor.u32 %v1550, %v1551
            %v1554 = vrot.slane %v1550, 4
            %s1571 = smul.u32 %s1243, 20
            %s1572 = sadd.s32 2, %s1571
            %s1573 = smul.addr %s1572, 4
            %s1574 = scalar_lea.vmem [#allocation2], %s1573
            %vm1575 = vcmask 257024
            %vm1576 = vsmask.f32 7938
            %vm1577 = vmand %vm1575, %vm1576
            %v1578 = vld [vmem:[%s1574] sm:$0xf]
            %v1579 = vsel %vm1577, %v1497, %v1578
            %1580 = vst [vmem:[%s1574] sm:$0xf] %v1579
            %vm1581 = vcmask 253952
            %vm1582 = vsmask.f32 256
            %vm1583 = vmand %vm1581, %vm1582
            %v1584 = vld [vmem:[%s1574 + $0x4] sm:$0x1]
            %v1585 = vsel %vm1583, %v1498, %v1584
            %1586 = vst [vmem:[%s1574 + $0x4] sm:$0x1] %v1585
            %v1587 = vld [vmem:[%s1574 + $0x8] sm:$0xf]
            %v1588 = vsel %vm1577, %v1505, %v1587
            %1589 = vst [vmem:[%s1574 + $0x8] sm:$0xf] %v1588
            %v1590 = vld [vmem:[%s1574 + $0xc] sm:$0x1]
            %v1591 = vsel %vm1583, %v1506, %v1590
            %1592 = vst [vmem:[%s1574 + $0xc] sm:$0x1] %v1591
            %v1593 = vld [vmem:[%s1574 + $0x10] sm:$0xf]
            %v1594 = vsel %vm1577, %v1513, %v1593
            %1595 = vst [vmem:[%s1574 + $0x10] sm:$0xf] %v1594
            %v1596 = vld [vmem:[%s1574 + $0x14] sm:$0x1]
            %v1597 = vsel %vm1583, %v1514, %v1596
            %1598 = vst [vmem:[%s1574 + $0x14] sm:$0x1] %v1597
            %v1599 = vld [vmem:[%s1574 + $0x18] sm:$0xf]
            %v1600 = vsel %vm1577, %v1521, %v1599
            %1601 = vst [vmem:[%s1574 + $0x18] sm:$0xf] %v1600
            %v1602 = vld [vmem:[%s1574 + $0x1c] sm:$0x1]
            %v1603 = vsel %vm1583, %v1522, %v1602
            %1604 = vst [vmem:[%s1574 + $0x1c] sm:$0x1] %v1603
            %v1605 = vld [vmem:[%s1574 + $0x20] sm:$0xf]
            %v1606 = vsel %vm1577, %v1529, %v1605
            %1607 = vst [vmem:[%s1574 + $0x20] sm:$0xf] %v1606
            %v1608 = vld [vmem:[%s1574 + $0x24] sm:$0x1]
            %v1609 = vsel %vm1583, %v1530, %v1608
            %1610 = vst [vmem:[%s1574 + $0x24] sm:$0x1] %v1609
            %v1611 = vld [vmem:[%s1574 + $0x28] sm:$0xf]
            %v1612 = vsel %vm1577, %v1537, %v1611
            %1613 = vst [vmem:[%s1574 + $0x28] sm:$0xf] %v1612
            %v1614 = vld [vmem:[%s1574 + $0x2c] sm:$0x1]
            %v1615 = vsel %vm1583, %v1538, %v1614
            %1616 = vst [vmem:[%s1574 + $0x2c] sm:$0x1] %v1615
            %v1617 = vld [vmem:[%s1574 + $0x30] sm:$0xf]
            %v1618 = vsel %vm1577, %v1545, %v1617
            %1619 = vst [vmem:[%s1574 + $0x30] sm:$0xf] %v1618
            %v1620 = vld [vmem:[%s1574 + $0x34] sm:$0x1]
            %v1621 = vsel %vm1583, %v1546, %v1620
            %1622 = vst [vmem:[%s1574 + $0x34] sm:$0x1] %v1621
            %v1623 = vld [vmem:[%s1574 + $0x38] sm:$0xf]
            %v1624 = vsel %vm1577, %v1553, %v1623
            %1625 = vst [vmem:[%s1574 + $0x38] sm:$0xf] %v1624
            %v1626 = vld [vmem:[%s1574 + $0x3c] sm:$0x1]
            %v1627 = vsel %vm1583, %v1554, %v1626
            %1628 = vst [vmem:[%s1574 + $0x3c] sm:$0x1] %v1627
          $region68: #{resblock3d_forward.1} parent=63 // pred_fallthru
            _
          %p1629 = scmp.gt.s32.totalorder %s1244, 3
          // Predicated region
          $region69: #{resblock3d_forward.1} parent=63 // pred_check
            %p1630 = pneg %p1629
          $region70: #{resblock3d_forward.1} parent=63 // pred_check_branch
            %1632 = sbr.rel (%p1630) target = $region72
          $region71: #{resblock3d_forward.1} parent=63 // pred_region
            %s1633 = smul.u32 %s1243, 20
            %s1634 = sadd.s32 2, %s1633
            %s1635 = smul.addr %s1634, 4
            %s1636 = scalar_lea.vmem [#allocation2], %s1635
            %vm1637 = vcmask 257024
            %vm1638 = vsmask.f32 7938
            %vm1639 = vmand %vm1637, %vm1638
            %v1640 = vld [vmem:[%s1636] sm:$0xf]
            %v1641 = vsel %vm1639, 0, %v1640
            %1642 = vst [vmem:[%s1636] sm:$0xf] %v1641
            %vm1643 = vcmask 253952
            %vm1644 = vsmask.f32 256
            %vm1645 = vmand %vm1643, %vm1644
            %v1646 = vld [vmem:[%s1636 + $0x4] sm:$0x1]
            %v1647 = vsel %vm1645, 0, %v1646
            %1648 = vst [vmem:[%s1636 + $0x4] sm:$0x1] %v1647
            %v1649 = vld [vmem:[%s1636 + $0x8] sm:$0xf]
            %v1650 = vsel %vm1639, 0, %v1649
            %1651 = vst [vmem:[%s1636 + $0x8] sm:$0xf] %v1650
            %v1652 = vld [vmem:[%s1636 + $0xc] sm:$0x1]
            %v1653 = vsel %vm1645, 0, %v1652
            %1654 = vst [vmem:[%s1636 + $0xc] sm:$0x1] %v1653
            %v1655 = vld [vmem:[%s1636 + $0x10] sm:$0xf]
            %v1656 = vsel %vm1639, 0, %v1655
            %1657 = vst [vmem:[%s1636 + $0x10] sm:$0xf] %v1656
            %v1658 = vld [vmem:[%s1636 + $0x14] sm:$0x1]
            %v1659 = vsel %vm1645, 0, %v1658
            %1660 = vst [vmem:[%s1636 + $0x14] sm:$0x1] %v1659
            %v1661 = vld [vmem:[%s1636 + $0x18] sm:$0xf]
            %v1662 = vsel %vm1639, 0, %v1661
            %1663 = vst [vmem:[%s1636 + $0x18] sm:$0xf] %v1662
            %v1664 = vld [vmem:[%s1636 + $0x1c] sm:$0x1]
            %v1665 = vsel %vm1645, 0, %v1664
            %1666 = vst [vmem:[%s1636 + $0x1c] sm:$0x1] %v1665
            %v1667 = vld [vmem:[%s1636 + $0x20] sm:$0xf]
            %v1668 = vsel %vm1639, 0, %v1667
            %1669 = vst [vmem:[%s1636 + $0x20] sm:$0xf] %v1668
            %v1670 = vld [vmem:[%s1636 + $0x24] sm:$0x1]
            %v1671 = vsel %vm1645, 0, %v1670
            %1672 = vst [vmem:[%s1636 + $0x24] sm:$0x1] %v1671
            %v1673 = vld [vmem:[%s1636 + $0x28] sm:$0xf]
            %v1674 = vsel %vm1639, 0, %v1673
            %1675 = vst [vmem:[%s1636 + $0x28] sm:$0xf] %v1674
            %v1676 = vld [vmem:[%s1636 + $0x2c] sm:$0x1]
            %v1677 = vsel %vm1645, 0, %v1676
            %1678 = vst [vmem:[%s1636 + $0x2c] sm:$0x1] %v1677
            %v1679 = vld [vmem:[%s1636 + $0x30] sm:$0xf]
            %v1680 = vsel %vm1639, 0, %v1679
            %1681 = vst [vmem:[%s1636 + $0x30] sm:$0xf] %v1680
            %v1682 = vld [vmem:[%s1636 + $0x34] sm:$0x1]
            %v1683 = vsel %vm1645, 0, %v1682
            %1684 = vst [vmem:[%s1636 + $0x34] sm:$0x1] %v1683
            %v1685 = vld [vmem:[%s1636 + $0x38] sm:$0xf]
            %v1686 = vsel %vm1639, 0, %v1685
            %1687 = vst [vmem:[%s1636 + $0x38] sm:$0xf] %v1686
            %v1688 = vld [vmem:[%s1636 + $0x3c] sm:$0x1]
            %v1689 = vsel %vm1645, 0, %v1688
            %1690 = vst [vmem:[%s1636 + $0x3c] sm:$0x1] %v1689
          $region72: #{resblock3d_forward.1} parent=63 // pred_fallthru
            _
        $region64: #{resblock3d_forward.1} parent=55 // pred_fallthru
          _
        %p1691 = scmp.lt.s32.totalorder %s28, 0
        %s1692 = ssub.s32 0, %s28
        %s1693 = scalar_select %p1691, %s1692, %s28
        %s1694 = sdiv.u32.pop %s1693, 3
        %s1695 = srem.u32.pop %s1693, 3
        %s1696 = ssub.s32 0, %s1695
        %s1697 = scalar_select %p1691, %s1696, %s1695
        %p1698 = scmp.ne.s32.totalorder %s1697, 0
        %p1699 = scmp.lt.s32.totalorder %s1697, 0
        %p1700 = pnand %p1699, %p1698
        %p1701 = pneg %p1700
        %s1702 = sadd.s32 %s1697, 3
        %s1703 = scalar_select %p1701, %s1702, %s1697
        %s1704 = smul.u32 %s1703, 20
        %s1705 = smul.addr %s1704, 4
        %s1706 = scalar_lea.vmem [#allocation2], %s1705
        %v1707 = vld [vmem:[%s1706] sm:$0xf]
        %v1708 = vld [vmem:[%s1706 + $0x8] sm:$0xf]
        %v1709 = vld [vmem:[%s1706 + $0x10] sm:$0xf]
        %v1710 = vld [vmem:[%s1706 + $0x18] sm:$0xf]
        %v1711 = vld [vmem:[%s1706 + $0x20] sm:$0xf]
        %v1712 = vld [vmem:[%s1706 + $0x28] sm:$0xf]
        %v1713 = vld [vmem:[%s1706 + $0x30] sm:$0xf]
        %v1714 = vld [vmem:[%s1706 + $0x38] sm:$0xf]
        %v1715 = vld [vmem:[%s1706 + $0x40] sm:$0xf]
        %v1716 = vld [vmem:[%s1706 + $0x48] sm:$0xf]
        %vm1717 = vcmask 257024
        %1718 = vst.msk [vmem:[#allocation3] sm:$0xf] %vm1717, %v1707
        %1719 = vst.msk [vmem:[#allocation3 + $0x4] sm:$0xf] %vm1717, %v1708
        %1720 = vst.msk [vmem:[#allocation3 + $0x8] sm:$0xf] %vm1717, %v1709
        %1721 = vst.msk [vmem:[#allocation3 + $0xc] sm:$0xf] %vm1717, %v1710
        %1722 = vst.msk [vmem:[#allocation3 + $0x10] sm:$0xf] %vm1717, %v1711
        %1723 = vst.msk [vmem:[#allocation3 + $0x14] sm:$0xf] %vm1717, %v1712
        %1724 = vst.msk [vmem:[#allocation3 + $0x18] sm:$0xf] %vm1717, %v1713
        %1725 = vst.msk [vmem:[#allocation3 + $0x1c] sm:$0xf] %vm1717, %v1714
        %1726 = vst.msk [vmem:[#allocation3 + $0x20] sm:$0xf] %vm1717, %v1715
        %1727 = vst.msk [vmem:[#allocation3 + $0x24] sm:$0xf] %vm1717, %v1716
        %v1728 = vld [vmem:[%s1706] sm:$0xf]
        %v1729 = vld [vmem:[%s1706 + $0x4] sm:$0x1]
        %v1730 = vld [vmem:[%s1706 + $0x8] sm:$0xf]
        %v1731 = vld [vmem:[%s1706 + $0xc] sm:$0x1]
        %v1732 = vld [vmem:[%s1706 + $0x10] sm:$0xf]
        %v1733 = vld [vmem:[%s1706 + $0x14] sm:$0x1]
        %v1734 = vld [vmem:[%s1706 + $0x18] sm:$0xf]
        %v1735 = vld [vmem:[%s1706 + $0x1c] sm:$0x1]
        %v1736 = vld [vmem:[%s1706 + $0x20] sm:$0xf]
        %v1737 = vld [vmem:[%s1706 + $0x24] sm:$0x1]
        %v1738 = vld [vmem:[%s1706 + $0x28] sm:$0xf]
        %v1739 = vld [vmem:[%s1706 + $0x2c] sm:$0x1]
        %v1740 = vld [vmem:[%s1706 + $0x30] sm:$0xf]
        %v1741 = vld [vmem:[%s1706 + $0x34] sm:$0x1]
        %v1742 = vld [vmem:[%s1706 + $0x38] sm:$0xf]
        %v1743 = vld [vmem:[%s1706 + $0x3c] sm:$0x1]
        %v1744 = vld [vmem:[%s1706 + $0x40] sm:$0xf]
        %v1745 = vld [vmem:[%s1706 + $0x44] sm:$0x1]
        %v1746 = vld [vmem:[%s1706 + $0x48] sm:$0xf]
        %v1747 = vld [vmem:[%s1706 + $0x4c] sm:$0x1]
        %vm1748 = vsmask.f32 3328
        %vm1749 = vsmask.f32 7440
        %vm1750 = vmor %vm1748, %vm1749
        %v1752 = vshrl.u32 %v1728, 16
        %v1754 = vrot.slane %v1752, 4
        %v1755 = vshll.u32 %v1728, 16
        %v1757 = vrot.slane %v1755, 5
        %v1758 = vor.u32 %v1754, %v1757
        %v1759 = vrot.slane %v1758, 4
        %v1761 = vshll.u32 %v1729, 16
        %v1763 = vrot.slane %v1761, 5
        %v1764 = vsel %vm1750, %v1759, %v1763
        %v1766 = vshrl.u32 %v1730, 16
        %v1768 = vrot.slane %v1766, 4
        %v1769 = vshll.u32 %v1730, 16
        %v1771 = vrot.slane %v1769, 5
        %v1772 = vor.u32 %v1768, %v1771
        %v1773 = vrot.slane %v1772, 4
        %v1775 = vshll.u32 %v1731, 16
        %v1777 = vrot.slane %v1775, 5
        %v1778 = vsel %vm1750, %v1773, %v1777
        %v1780 = vshrl.u32 %v1732, 16
        %v1782 = vrot.slane %v1780, 4
        %v1783 = vshll.u32 %v1732, 16
        %v1785 = vrot.slane %v1783, 5
        %v1786 = vor.u32 %v1782, %v1785
        %v1787 = vrot.slane %v1786, 4
        %v1789 = vshll.u32 %v1733, 16
        %v1791 = vrot.slane %v1789, 5
        %v1792 = vsel %vm1750, %v1787, %v1791
        %v1794 = vshrl.u32 %v1734, 16
        %v1796 = vrot.slane %v1794, 4
        %v1797 = vshll.u32 %v1734, 16
        %v1799 = vrot.slane %v1797, 5
        %v1800 = vor.u32 %v1796, %v1799
        %v1801 = vrot.slane %v1800, 4
        %v1803 = vshll.u32 %v1735, 16
        %v1805 = vrot.slane %v1803, 5
        %v1806 = vsel %vm1750, %v1801, %v1805
        %v1808 = vshrl.u32 %v1736, 16
        %v1810 = vrot.slane %v1808, 4
        %v1811 = vshll.u32 %v1736, 16
        %v1813 = vrot.slane %v1811, 5
        %v1814 = vor.u32 %v1810, %v1813
        %v1815 = vrot.slane %v1814, 4
        %v1817 = vshll.u32 %v1737, 16
        %v1819 = vrot.slane %v1817, 5
        %v1820 = vsel %vm1750, %v1815, %v1819
        %v1822 = vshrl.u32 %v1738, 16
        %v1824 = vrot.slane %v1822, 4
        %v1825 = vshll.u32 %v1738, 16
        %v1827 = vrot.slane %v1825, 5
        %v1828 = vor.u32 %v1824, %v1827
        %v1829 = vrot.slane %v1828, 4
        %v1831 = vshll.u32 %v1739, 16
        %v1833 = vrot.slane %v1831, 5
        %v1834 = vsel %vm1750, %v1829, %v1833
        %v1836 = vshrl.u32 %v1740, 16
        %v1838 = vrot.slane %v1836, 4
        %v1839 = vshll.u32 %v1740, 16
        %v1841 = vrot.slane %v1839, 5
        %v1842 = vor.u32 %v1838, %v1841
        %v1843 = vrot.slane %v1842, 4
        %v1845 = vshll.u32 %v1741, 16
        %v1847 = vrot.slane %v1845, 5
        %v1848 = vsel %vm1750, %v1843, %v1847
        %v1850 = vshrl.u32 %v1742, 16
        %v1852 = vrot.slane %v1850, 4
        %v1853 = vshll.u32 %v1742, 16
        %v1855 = vrot.slane %v1853, 5
        %v1856 = vor.u32 %v1852, %v1855
        %v1857 = vrot.slane %v1856, 4
        %v1859 = vshll.u32 %v1743, 16
        %v1861 = vrot.slane %v1859, 5
        %v1862 = vsel %vm1750, %v1857, %v1861
        %v1864 = vshrl.u32 %v1744, 16
        %v1866 = vrot.slane %v1864, 4
        %v1867 = vshll.u32 %v1744, 16
        %v1869 = vrot.slane %v1867, 5
        %v1870 = vor.u32 %v1866, %v1869
        %v1871 = vrot.slane %v1870, 4
        %v1873 = vshll.u32 %v1745, 16
        %v1875 = vrot.slane %v1873, 5
        %v1876 = vsel %vm1750, %v1871, %v1875
        %v1878 = vshrl.u32 %v1746, 16
        %v1880 = vrot.slane %v1878, 4
        %v1881 = vshll.u32 %v1746, 16
        %v1883 = vrot.slane %v1881, 5
        %v1884 = vor.u32 %v1880, %v1883
        %v1885 = vrot.slane %v1884, 4
        %v1887 = vshll.u32 %v1747, 16
        %v1889 = vrot.slane %v1887, 5
        %v1890 = vsel %vm1750, %v1885, %v1889
        %1891 = vrot.lane.b32.xlu0 %v1764, 32
        %v1892 = vpop.permute.xlu0 %1891
        %1893 = vrot.lane.b32.xlu0 %v1778, 32
        %v1894 = vpop.permute.xlu0 %1893
        %1895 = vrot.lane.b32.xlu0 %v1792, 32
        %v1896 = vpop.permute.xlu0 %1895
        %1897 = vrot.lane.b32.xlu0 %v1806, 32
        %v1898 = vpop.permute.xlu0 %1897
        %1899 = vrot.lane.b32.xlu0 %v1820, 32
        %v1900 = vpop.permute.xlu0 %1899
        %1901 = vrot.lane.b32.xlu0 %v1834, 32
        %v1902 = vpop.permute.xlu0 %1901
        %1903 = vrot.lane.b32.xlu0 %v1848, 32
        %v1904 = vpop.permute.xlu0 %1903
        %1905 = vrot.lane.b32.xlu0 %v1862, 32
        %v1906 = vpop.permute.xlu0 %1905
        %1907 = vrot.lane.b32.xlu0 %v1876, 32
        %v1908 = vpop.permute.xlu0 %1907
        %1909 = vrot.lane.b32.xlu0 %v1890, 32
        %v1910 = vpop.permute.xlu0 %1909
        %vm1921 = vcmask 519424
        %1922 = vst.msk [vmem:[#allocation3] sm:$0xf] %vm1921, %v1892
        %1923 = vst.msk [vmem:[#allocation3 + $0x4] sm:$0xf] %vm1921, %v1894
        %1924 = vst.msk [vmem:[#allocation3 + $0x8] sm:$0xf] %vm1921, %v1896
        %1925 = vst.msk [vmem:[#allocation3 + $0xc] sm:$0xf] %vm1921, %v1898
        %1926 = vst.msk [vmem:[#allocation3 + $0x10] sm:$0xf] %vm1921, %v1900
        %1927 = vst.msk [vmem:[#allocation3 + $0x14] sm:$0xf] %vm1921, %v1902
        %1928 = vst.msk [vmem:[#allocation3 + $0x18] sm:$0xf] %vm1921, %v1904
        %1929 = vst.msk [vmem:[#allocation3 + $0x1c] sm:$0xf] %vm1921, %v1906
        %1930 = vst.msk [vmem:[#allocation3 + $0x20] sm:$0xf] %vm1921, %v1908
        %1931 = vst.msk [vmem:[#allocation3 + $0x24] sm:$0xf] %vm1921, %v1910
        %v1932 = vld [vmem:[%s1706] sm:$0xe]
        %v1933 = vld [vmem:[%s1706 + $0x4] sm:$0x1]
        %v1934 = vld [vmem:[%s1706 + $0x8] sm:$0xe]
        %v1935 = vld [vmem:[%s1706 + $0xc] sm:$0x1]
        %v1936 = vld [vmem:[%s1706 + $0x10] sm:$0xe]
        %v1937 = vld [vmem:[%s1706 + $0x14] sm:$0x1]
        %v1938 = vld [vmem:[%s1706 + $0x18] sm:$0xe]
        %v1939 = vld [vmem:[%s1706 + $0x1c] sm:$0x1]
        %v1940 = vld [vmem:[%s1706 + $0x20] sm:$0xe]
        %v1941 = vld [vmem:[%s1706 + $0x24] sm:$0x1]
        %v1942 = vld [vmem:[%s1706 + $0x28] sm:$0xe]
        %v1943 = vld [vmem:[%s1706 + $0x2c] sm:$0x1]
        %v1944 = vld [vmem:[%s1706 + $0x30] sm:$0xe]
        %v1945 = vld [vmem:[%s1706 + $0x34] sm:$0x1]
        %v1946 = vld [vmem:[%s1706 + $0x38] sm:$0xe]
        %v1947 = vld [vmem:[%s1706 + $0x3c] sm:$0x1]
        %v1948 = vld [vmem:[%s1706 + $0x40] sm:$0xe]
        %v1949 = vld [vmem:[%s1706 + $0x44] sm:$0x1]
        %v1950 = vld [vmem:[%s1706 + $0x48] sm:$0xe]
        %v1951 = vld [vmem:[%s1706 + $0x4c] sm:$0x1]
        %vm1972 = vcmask 1042432
        %vm1973 = vcmask 1046532
        %vm1974 = vmor %vm1972, %vm1973
        %v1975 = vrot.slane %v1932, 5
        %v1976 = vrot.slane %v1975, 4
        %v1977 = vrot.slane %v1933, 5
        %v1978 = vsel %vm1974, %v1976, %v1977
        %v1979 = vrot.slane %v1934, 5
        %v1980 = vrot.slane %v1979, 4
        %v1981 = vrot.slane %v1935, 5
        %v1982 = vsel %vm1974, %v1980, %v1981
        %v1983 = vrot.slane %v1936, 5
        %v1984 = vrot.slane %v1983, 4
        %v1985 = vrot.slane %v1937, 5
        %v1986 = vsel %vm1974, %v1984, %v1985
        %v1987 = vrot.slane %v1938, 5
        %v1988 = vrot.slane %v1987, 4
        %v1989 = vrot.slane %v1939, 5
        %v1990 = vsel %vm1974, %v1988, %v1989
        %v1991 = vrot.slane %v1940, 5
        %v1992 = vrot.slane %v1991, 4
        %v1993 = vrot.slane %v1941, 5
        %v1994 = vsel %vm1974, %v1992, %v1993
        %v1995 = vrot.slane %v1942, 5
        %v1996 = vrot.slane %v1995, 4
        %v1997 = vrot.slane %v1943, 5
        %v1998 = vsel %vm1974, %v1996, %v1997
        %v1999 = vrot.slane %v1944, 5
        %v2000 = vrot.slane %v1999, 4
        %v2001 = vrot.slane %v1945, 5
        %v2002 = vsel %vm1974, %v2000, %v2001
        %v2003 = vrot.slane %v1946, 5
        %v2004 = vrot.slane %v2003, 4
        %v2005 = vrot.slane %v1947, 5
        %v2006 = vsel %vm1974, %v2004, %v2005
        %v2007 = vrot.slane %v1948, 5
        %v2008 = vrot.slane %v2007, 4
        %v2009 = vrot.slane %v1949, 5
        %v2010 = vsel %vm1974, %v2008, %v2009
        %v2011 = vrot.slane %v1950, 5
        %v2012 = vrot.slane %v2011, 4
        %v2013 = vrot.slane %v1951, 5
        %v2014 = vsel %vm1974, %v2012, %v2013
        %2015 = vrot.lane.b32.xlu0 %v1978, 64
        %v2016 = vpop.permute.xlu0 %2015
        %2017 = vrot.lane.b32.xlu0 %v1982, 64
        %v2018 = vpop.permute.xlu0 %2017
        %2019 = vrot.lane.b32.xlu0 %v1986, 64
        %v2020 = vpop.permute.xlu0 %2019
        %2021 = vrot.lane.b32.xlu0 %v1990, 64
        %v2022 = vpop.permute.xlu0 %2021
        %2023 = vrot.lane.b32.xlu0 %v1994, 64
        %v2024 = vpop.permute.xlu0 %2023
        %2025 = vrot.lane.b32.xlu0 %v1998, 64
        %v2026 = vpop.permute.xlu0 %2025
        %2027 = vrot.lane.b32.xlu0 %v2002, 64
        %v2028 = vpop.permute.xlu0 %2027
        %2029 = vrot.lane.b32.xlu0 %v2006, 64
        %v2030 = vpop.permute.xlu0 %2029
        %2031 = vrot.lane.b32.xlu0 %v2010, 64
        %v2032 = vpop.permute.xlu0 %2031
        %2033 = vrot.lane.b32.xlu0 %v2014, 64
        %v2034 = vpop.permute.xlu0 %2033
        %vm2045 = vcmask 781824
        %2046 = vst.msk [vmem:[#allocation3] sm:$0xf] %vm2045, %v2016
        %2047 = vst.msk [vmem:[#allocation3 + $0x4] sm:$0xf] %vm2045, %v2018
        %2048 = vst.msk [vmem:[#allocation3 + $0x8] sm:$0xf] %vm2045, %v2020
        %2049 = vst.msk [vmem:[#allocation3 + $0xc] sm:$0xf] %vm2045, %v2022
        %2050 = vst.msk [vmem:[#allocation3 + $0x10] sm:$0xf] %vm2045, %v2024
        %2051 = vst.msk [vmem:[#allocation3 + $0x14] sm:$0xf] %vm2045, %v2026
        %2052 = vst.msk [vmem:[#allocation3 + $0x18] sm:$0xf] %vm2045, %v2028
        %2053 = vst.msk [vmem:[#allocation3 + $0x1c] sm:$0xf] %vm2045, %v2030
        %2054 = vst.msk [vmem:[#allocation3 + $0x20] sm:$0xf] %vm2045, %v2032
        %2055 = vst.msk [vmem:[#allocation3 + $0x24] sm:$0xf] %vm2045, %v2034
        %v2056 = vld [vmem:[#allocation3] sm:$0xf]
        %v2057 = vld [vmem:[#allocation3 + $0x4] sm:$0xf]
        %v2058 = vld [vmem:[#allocation3 + $0x8] sm:$0xf]
        %v2059 = vld [vmem:[#allocation3 + $0xc] sm:$0xf]
        %v2060 = vld [vmem:[#allocation3 + $0x10] sm:$0xf]
        %v2061 = vld [vmem:[#allocation3 + $0x14] sm:$0xf]
        %v2062 = vld [vmem:[#allocation3 + $0x18] sm:$0xf]
        %v2063 = vld [vmem:[#allocation3 + $0x1c] sm:$0xf]
        %v2064 = vld [vmem:[%s5] sm:$0xf]
        %v2065 = vld [vmem:[%s5 + $0x4] sm:$0xf]
        %v2066 = vld [vmem:[%s5 + $0x8] sm:$0xf]
        %v2067 = vld [vmem:[%s5 + $0xc] sm:$0xf]
        %v2068 = vld [vmem:[%s5 + $0x10] sm:$0xf]
        %v2069 = vld [vmem:[%s5 + $0x14] sm:$0xf]
        %v2070 = vld [vmem:[%s5 + $0x18] sm:$0xf]
        %v2071 = vld [vmem:[%s5 + $0x1c] sm:$0xf]
        %v2072 = vld [vmem:[%s5 + $0x20] sm:$0xf]
        %v2073 = vld [vmem:[%s5 + $0x24] sm:$0xf]
        %v2074 = vld [vmem:[%s5 + $0x28] sm:$0xf]
        %v2075 = vld [vmem:[%s5 + $0x2c] sm:$0xf]
        %s2076 = scalar_lea.vmem [#allocation3], 4
        %v2077 = vld [vmem:[%s2076] sm:$0xf]
        %v2078 = vld [vmem:[%s2076 + $0x4] sm:$0xf]
        %v2079 = vld [vmem:[%s2076 + $0x8] sm:$0xf]
        %v2080 = vld [vmem:[%s2076 + $0xc] sm:$0xf]
        %v2081 = vld [vmem:[%s2076 + $0x10] sm:$0xf]
        %v2082 = vld [vmem:[%s2076 + $0x14] sm:$0xf]
        %v2083 = vld [vmem:[%s2076 + $0x18] sm:$0xf]
        %v2084 = vld [vmem:[%s2076 + $0x1c] sm:$0xf]
        %s2085 = scalar_lea.vmem %s5, 48
        %v2086 = vld [vmem:[%s2085] sm:$0xf]
        %v2087 = vld [vmem:[%s2085 + $0x4] sm:$0xf]
        %v2088 = vld [vmem:[%s2085 + $0x8] sm:$0xf]
        %v2089 = vld [vmem:[%s2085 + $0xc] sm:$0xf]
        %v2090 = vld [vmem:[%s2085 + $0x10] sm:$0xf]
        %v2091 = vld [vmem:[%s2085 + $0x14] sm:$0xf]
        %v2092 = vld [vmem:[%s2085 + $0x18] sm:$0xf]
        %v2093 = vld [vmem:[%s2085 + $0x1c] sm:$0xf]
        %v2094 = vld [vmem:[%s2085 + $0x20] sm:$0xf]
        %v2095 = vld [vmem:[%s2085 + $0x24] sm:$0xf]
        %v2096 = vld [vmem:[%s2085 + $0x28] sm:$0xf]
        %v2097 = vld [vmem:[%s2085 + $0x2c] sm:$0xf]
        %v2106 = vunpack.c.l.b16 %v2077
        %v2107 = vunpack.c.l.b16 %v2078
        %v2108 = vunpack.c.l.b16 %v2079
        %v2109 = vunpack.c.l.b16 %v2080
        %v2110 = vunpack.c.l.b16 %v2081
        %v2111 = vunpack.c.l.b16 %v2082
        %v2112 = vunpack.c.l.b16 %v2083
        %v2113 = vunpack.c.l.b16 %v2084
        %v2114 = vpack.c.b16 %v2107, %v2106
        %v2115 = vpack.c.b16 %v2109, %v2108
        %v2116 = vpack.c.b16 %v2111, %v2110
        %v2117 = vpack.c.b16 %v2113, %v2112
        %v2130 = vunpack.c.l.b16 %v2086
        %v2131 = vunpack.c.l.b16 %v2087
        %v2132 = vunpack.c.l.b16 %v2088
        %v2133 = vunpack.c.l.b16 %v2089
        %v2134 = vunpack.c.l.b16 %v2090
        %v2135 = vunpack.c.l.b16 %v2091
        %v2136 = vunpack.c.l.b16 %v2092
        %v2137 = vunpack.c.l.b16 %v2093
        %v2138 = vunpack.c.l.b16 %v2094
        %v2139 = vunpack.c.l.b16 %v2095
        %v2140 = vunpack.c.l.b16 %v2096
        %v2141 = vunpack.c.l.b16 %v2097
        %v2142 = vpack.c.b16 %v2131, %v2130
        %v2143 = vpack.c.b16 %v2133, %v2132
        %v2144 = vpack.c.b16 %v2135, %v2134
        %v2145 = vpack.c.b16 %v2137, %v2136
        %v2146 = vpack.c.b16 %v2139, %v2138
        %v2147 = vpack.c.b16 %v2141, %v2140
        %vm2154 = vcmask 785408
        %v2156 = vsel %vm2154, %v2114, 0
        %v2159 = vsel %vm2154, %v2115, 0
        %v2162 = vsel %vm2154, %v2116, 0
        %v2165 = vsel %vm2154, %v2117, 0
        %2167 = vmatprep.subr.bf16.mxu0 0
        %2168 = vmatpush1.bf16.msra.mxu0 0
        %2169 = vmatprep.subr.bf16.mxu0 0
        %2170 = vmatpush1.bf16.msra.mxu0 0
        %2171 = vmatprep.subr.bf16.mxu0 0
        %2172 = vmatpush1.bf16.msra.mxu0 %v2147
        %2173 = vmatprep.subr.bf16.mxu0 0
        %2174 = vmatpush1.bf16.msra.mxu0 %v2146
        %2175 = vmatprep.subr.bf16.mxu0 0
        %2176 = vmatpush1.bf16.msra.mxu0 %v2145
        %2177 = vmatprep.subr.bf16.mxu0 0
        %2178 = vmatpush1.bf16.msra.mxu0 %v2144
        %2179 = vmatprep.subr.bf16.mxu0 0
        %2180 = vmatpush1.bf16.msra.mxu0 %v2143
        %2181 = vmatprep.subr.bf16.mxu0 0
        %2182 = vmatpush1.bf16.msra.mxu0 %v2142
        %2183 = vmatprep.subr.bf16.mxu0 0
        %2184 = vmatpush2.bf16.msra.mxu0 0
        %2185 = vmatprep.subr.bf16.mxu0 0
        %2186 = vmatpush2.bf16.msra.mxu0 0
        %2187 = vmatprep.subr.bf16.mxu0 0
        %2188 = vmatpush2.bf16.msra.mxu0 0
        %2189 = vmatprep.subr.bf16.mxu0 0
        %2190 = vmatpush2.bf16.msra.mxu0 0
        %2191 = vmatprep.subr.bf16.mxu0 0
        %2192 = vmatpush2.bf16.msra.mxu0 0
        %2193 = vmatprep.subr.bf16.mxu0 0
        %2194 = vmatpush2.bf16.msra.mxu0 0
        %2195 = vmatprep.subr.bf16.mxu0 0
        %2196 = vmatpush2.bf16.msra.mxu0 0
        %2197 = vmatprep.subr.bf16.mxu0 0
        %2198 = vmatpush2.bf16.msra.mxu0 0
        %2199 = vmatprep.mubr.bf16.mxu0 0
        %2200 = vmatmul.mubr.bf16.gmra.mxu0 %v2156
        %v2201 = vpop.f32.mrf.mxu0
        %v2202 = vadd.f32 0.0, %v2201
        %v2203 = vpop.f32.mrf.mxu0
        %v2204 = vpop.f32.mrf.mxu0
        %v2205 = vadd.f32 0.0, %v2204
        %v2206 = vpop.f32.mrf.mxu0
        %2207 = vmatprep.mubr.bf16.mxu0 0
        %2208 = vmatmul.mubr.bf16.gmra.mxu0 %v2159
        %v2209 = vpop.f32.mrf.mxu0
        %v2210 = vadd.f32 0.0, %v2209
        %v2211 = vpop.f32.mrf.mxu0
        %v2212 = vpop.f32.mrf.mxu0
        %v2213 = vadd.f32 0.0, %v2212
        %v2214 = vpop.f32.mrf.mxu0
        %2215 = vmatprep.mubr.bf16.mxu0 0
        %2216 = vmatmul.mubr.bf16.gmra.mxu0 %v2162
        %v2217 = vpop.f32.mrf.mxu0
        %v2218 = vadd.f32 0.0, %v2217
        %v2219 = vpop.f32.mrf.mxu0
        %v2220 = vpop.f32.mrf.mxu0
        %v2221 = vadd.f32 0.0, %v2220
        %v2222 = vpop.f32.mrf.mxu0
        %2223 = vmatprep.mubr.bf16.mxu0 0
        %2224 = vmatmul.mubr.bf16.gmra.mxu0 %v2165
        %v2225 = vpop.f32.mrf.mxu0
        %v2226 = vadd.f32 0.0, %v2225
        %v2227 = vpop.f32.mrf.mxu0
        %v2228 = vpop.f32.mrf.mxu0
        %v2229 = vadd.f32 0.0, %v2228
        %v2230 = vpop.f32.mrf.mxu0
        %2231 = vdwg.mxu0
        %v2240 = vunpack.c.l.b16 %v2056
        %v2241 = vunpack.c.l.b16 %v2057
        %v2242 = vunpack.c.l.b16 %v2058
        %v2243 = vunpack.c.l.b16 %v2059
        %v2244 = vunpack.c.l.b16 %v2060
        %v2245 = vunpack.c.l.b16 %v2061
        %v2246 = vunpack.c.l.b16 %v2062
        %v2247 = vunpack.c.l.b16 %v2063
        %v2248 = vpack.c.b16 %v2241, %v2240
        %v2249 = vpack.c.b16 %v2243, %v2242
        %v2250 = vpack.c.b16 %v2245, %v2244
        %v2251 = vpack.c.b16 %v2247, %v2246
        %v2264 = vunpack.c.l.b16 %v2064
        %v2265 = vunpack.c.l.b16 %v2065
        %v2266 = vunpack.c.l.b16 %v2066
        %v2267 = vunpack.c.l.b16 %v2067
        %v2268 = vunpack.c.l.b16 %v2068
        %v2269 = vunpack.c.l.b16 %v2069
        %v2270 = vunpack.c.l.b16 %v2070
        %v2271 = vunpack.c.l.b16 %v2071
        %v2272 = vunpack.c.l.b16 %v2072
        %v2273 = vunpack.c.l.b16 %v2073
        %v2274 = vunpack.c.l.b16 %v2074
        %v2275 = vunpack.c.l.b16 %v2075
        %v2276 = vpack.c.b16 %v2265, %v2264
        %v2277 = vpack.c.b16 %v2267, %v2266
        %v2278 = vpack.c.b16 %v2269, %v2268
        %v2279 = vpack.c.b16 %v2271, %v2270
        %v2280 = vpack.c.b16 %v2273, %v2272
        %v2281 = vpack.c.b16 %v2275, %v2274
        %v2289 = vsel %vm2154, %v2248, 0
        %v2292 = vsel %vm2154, %v2249, 0
        %v2295 = vsel %vm2154, %v2250, 0
        %v2298 = vsel %vm2154, %v2251, 0
        %2300 = vmatprep.subr.bf16.mxu0 0
        %2301 = vmatpush1.bf16.msra.mxu0 0
        %2302 = vmatprep.subr.bf16.mxu0 0
        %2303 = vmatpush1.bf16.msra.mxu0 0
        %2304 = vmatprep.subr.bf16.mxu0 0
        %2305 = vmatpush1.bf16.msra.mxu0 %v2281
        %2306 = vmatprep.subr.bf16.mxu0 0
        %2307 = vmatpush1.bf16.msra.mxu0 %v2280
        %2308 = vmatprep.subr.bf16.mxu0 0
        %2309 = vmatpush1.bf16.msra.mxu0 %v2279
        %2310 = vmatprep.subr.bf16.mxu0 0
        %2311 = vmatpush1.bf16.msra.mxu0 %v2278
        %2312 = vmatprep.subr.bf16.mxu0 0
        %2313 = vmatpush1.bf16.msra.mxu0 %v2277
        %2314 = vmatprep.subr.bf16.mxu0 0
        %2315 = vmatpush1.bf16.msra.mxu0 %v2276
        %2316 = vmatprep.subr.bf16.mxu0 0
        %2317 = vmatpush2.bf16.msra.mxu0 0
        %2318 = vmatprep.subr.bf16.mxu0 0
        %2319 = vmatpush2.bf16.msra.mxu0 0
        %2320 = vmatprep.subr.bf16.mxu0 0
        %2321 = vmatpush2.bf16.msra.mxu0 0
        %2322 = vmatprep.subr.bf16.mxu0 0
        %2323 = vmatpush2.bf16.msra.mxu0 0
        %2324 = vmatprep.subr.bf16.mxu0 0
        %2325 = vmatpush2.bf16.msra.mxu0 0
        %2326 = vmatprep.subr.bf16.mxu0 0
        %2327 = vmatpush2.bf16.msra.mxu0 0
        %2328 = vmatprep.subr.bf16.mxu0 0
        %2329 = vmatpush2.bf16.msra.mxu0 0
        %2330 = vmatprep.subr.bf16.mxu0 0
        %2331 = vmatpush2.bf16.msra.mxu0 0
        %2332 = vmatprep.mubr.bf16.mxu0 0
        %2333 = vmatmul.mubr.bf16.gmra.mxu0 %v2289
        %v2334 = vpop.f32.mrf.mxu0
        %v2335 = vadd.f32 %v2202, %v2334
        %v2336 = vpop.f32.mrf.mxu0
        %v2337 = vpop.f32.mrf.mxu0
        %v2338 = vadd.f32 %v2205, %v2337
        %v2339 = vpop.f32.mrf.mxu0
        %2340 = vmatprep.mubr.bf16.mxu0 0
        %2341 = vmatmul.mubr.bf16.gmra.mxu0 %v2292
        %v2342 = vpop.f32.mrf.mxu0
        %v2343 = vadd.f32 %v2210, %v2342
        %v2344 = vpop.f32.mrf.mxu0
        %v2345 = vpop.f32.mrf.mxu0
        %v2346 = vadd.f32 %v2213, %v2345
        %v2347 = vpop.f32.mrf.mxu0
        %2348 = vmatprep.mubr.bf16.mxu0 0
        %2349 = vmatmul.mubr.bf16.gmra.mxu0 %v2295
        %v2350 = vpop.f32.mrf.mxu0
        %v2351 = vadd.f32 %v2218, %v2350
        %v2352 = vpop.f32.mrf.mxu0
        %v2353 = vpop.f32.mrf.mxu0
        %v2354 = vadd.f32 %v2221, %v2353
        %v2355 = vpop.f32.mrf.mxu0
        %2356 = vmatprep.mubr.bf16.mxu0 0
        %2357 = vmatmul.mubr.bf16.gmra.mxu0 %v2298
        %v2358 = vpop.f32.mrf.mxu0
        %v2359 = vadd.f32 %v2226, %v2358
        %v2360 = vpop.f32.mrf.mxu0
        %v2361 = vpop.f32.mrf.mxu0
        %v2362 = vadd.f32 %v2229, %v2361
        %v2363 = vpop.f32.mrf.mxu0
        %2364 = vdwg.mxu0
        %s2365 = scalar_lea.vmem [#allocation3], 8
        %v2366 = vld [vmem:[%s2365] sm:$0xf]
        %v2367 = vld [vmem:[%s2365 + $0x4] sm:$0xf]
        %v2368 = vld [vmem:[%s2365 + $0x8] sm:$0xf]
        %v2369 = vld [vmem:[%s2365 + $0xc] sm:$0xf]
        %v2370 = vld [vmem:[%s2365 + $0x10] sm:$0xf]
        %v2371 = vld [vmem:[%s2365 + $0x14] sm:$0xf]
        %v2372 = vld [vmem:[%s2365 + $0x18] sm:$0xf]
        %v2373 = vld [vmem:[%s2365 + $0x1c] sm:$0xf]
        %s2374 = scalar_lea.vmem %s5, 96
        %v2375 = vld [vmem:[%s2374] sm:$0xf]
        %v2376 = vld [vmem:[%s2374 + $0x4] sm:$0xf]
        %v2377 = vld [vmem:[%s2374 + $0x8] sm:$0xf]
        %v2378 = vld [vmem:[%s2374 + $0xc] sm:$0xf]
        %v2379 = vld [vmem:[%s2374 + $0x10] sm:$0xf]
        %v2380 = vld [vmem:[%s2374 + $0x14] sm:$0xf]
        %v2381 = vld [vmem:[%s2374 + $0x18] sm:$0xf]
        %v2382 = vld [vmem:[%s2374 + $0x1c] sm:$0xf]
        %v2383 = vld [vmem:[%s2374 + $0x20] sm:$0xf]
        %v2384 = vld [vmem:[%s2374 + $0x24] sm:$0xf]
        %v2385 = vld [vmem:[%s2374 + $0x28] sm:$0xf]
        %v2386 = vld [vmem:[%s2374 + $0x2c] sm:$0xf]
        %v2395 = vunpack.c.l.b16 %v2366
        %v2396 = vunpack.c.l.b16 %v2367
        %v2397 = vunpack.c.l.b16 %v2368
        %v2398 = vunpack.c.l.b16 %v2369
        %v2399 = vunpack.c.l.b16 %v2370
        %v2400 = vunpack.c.l.b16 %v2371
        %v2401 = vunpack.c.l.b16 %v2372
        %v2402 = vunpack.c.l.b16 %v2373
        %v2403 = vpack.c.b16 %v2396, %v2395
        %v2404 = vpack.c.b16 %v2398, %v2397
        %v2405 = vpack.c.b16 %v2400, %v2399
        %v2406 = vpack.c.b16 %v2402, %v2401
        %v2419 = vunpack.c.l.b16 %v2375
        %v2420 = vunpack.c.l.b16 %v2376
        %v2421 = vunpack.c.l.b16 %v2377
        %v2422 = vunpack.c.l.b16 %v2378
        %v2423 = vunpack.c.l.b16 %v2379
        %v2424 = vunpack.c.l.b16 %v2380
        %v2425 = vunpack.c.l.b16 %v2381
        %v2426 = vunpack.c.l.b16 %v2382
        %v2427 = vunpack.c.l.b16 %v2383
        %v2428 = vunpack.c.l.b16 %v2384
        %v2429 = vunpack.c.l.b16 %v2385
        %v2430 = vunpack.c.l.b16 %v2386
        %v2431 = vpack.c.b16 %v2420, %v2419
        %v2432 = vpack.c.b16 %v2422, %v2421
        %v2433 = vpack.c.b16 %v2424, %v2423
        %v2434 = vpack.c.b16 %v2426, %v2425
        %v2435 = vpack.c.b16 %v2428, %v2427
        %v2436 = vpack.c.b16 %v2430, %v2429
        %v2444 = vsel %vm2154, %v2403, 0
        %v2447 = vsel %vm2154, %v2404, 0
        %v2450 = vsel %vm2154, %v2405, 0
        %v2453 = vsel %vm2154, %v2406, 0
        %2455 = vmatprep.subr.bf16.mxu0 0
        %2456 = vmatpush1.bf16.msra.mxu0 0
        %2457 = vmatprep.subr.bf16.mxu0 0
        %2458 = vmatpush1.bf16.msra.mxu0 0
        %2459 = vmatprep.subr.bf16.mxu0 0
        %2460 = vmatpush1.bf16.msra.mxu0 %v2436
        %2461 = vmatprep.subr.bf16.mxu0 0
        %2462 = vmatpush1.bf16.msra.mxu0 %v2435
        %2463 = vmatprep.subr.bf16.mxu0 0
        %2464 = vmatpush1.bf16.msra.mxu0 %v2434
        %2465 = vmatprep.subr.bf16.mxu0 0
        %2466 = vmatpush1.bf16.msra.mxu0 %v2433
        %2467 = vmatprep.subr.bf16.mxu0 0
        %2468 = vmatpush1.bf16.msra.mxu0 %v2432
        %2469 = vmatprep.subr.bf16.mxu0 0
        %2470 = vmatpush1.bf16.msra.mxu0 %v2431
        %2471 = vmatprep.subr.bf16.mxu0 0
        %2472 = vmatpush2.bf16.msra.mxu0 0
        %2473 = vmatprep.subr.bf16.mxu0 0
        %2474 = vmatpush2.bf16.msra.mxu0 0
        %2475 = vmatprep.subr.bf16.mxu0 0
        %2476 = vmatpush2.bf16.msra.mxu0 0
        %2477 = vmatprep.subr.bf16.mxu0 0
        %2478 = vmatpush2.bf16.msra.mxu0 0
        %2479 = vmatprep.subr.bf16.mxu0 0
        %2480 = vmatpush2.bf16.msra.mxu0 0
        %2481 = vmatprep.subr.bf16.mxu0 0
        %2482 = vmatpush2.bf16.msra.mxu0 0
        %2483 = vmatprep.subr.bf16.mxu0 0
        %2484 = vmatpush2.bf16.msra.mxu0 0
        %2485 = vmatprep.subr.bf16.mxu0 0
        %2486 = vmatpush2.bf16.msra.mxu0 0
        %2487 = vmatprep.mubr.bf16.mxu0 0
        %2488 = vmatmul.mubr.bf16.gmra.mxu0 %v2444
        %v2489 = vpop.f32.mrf.mxu0
        %v2490 = vadd.f32 0.0, %v2489
        %v2491 = vpop.f32.mrf.mxu0
        %v2492 = vpop.f32.mrf.mxu0
        %v2493 = vadd.f32 0.0, %v2492
        %v2494 = vpop.f32.mrf.mxu0
        %2495 = vmatprep.mubr.bf16.mxu0 0
        %2496 = vmatmul.mubr.bf16.gmra.mxu0 %v2447
        %v2497 = vpop.f32.mrf.mxu0
        %v2498 = vadd.f32 0.0, %v2497
        %v2499 = vpop.f32.mrf.mxu0
        %v2500 = vpop.f32.mrf.mxu0
        %v2501 = vadd.f32 0.0, %v2500
        %v2502 = vpop.f32.mrf.mxu0
        %2503 = vmatprep.mubr.bf16.mxu0 0
        %2504 = vmatmul.mubr.bf16.gmra.mxu0 %v2450
        %v2505 = vpop.f32.mrf.mxu0
        %v2506 = vadd.f32 0.0, %v2505
        %v2507 = vpop.f32.mrf.mxu0
        %v2508 = vpop.f32.mrf.mxu0
        %v2509 = vadd.f32 0.0, %v2508
        %v2510 = vpop.f32.mrf.mxu0
        %2511 = vmatprep.mubr.bf16.mxu0 0
        %2512 = vmatmul.mubr.bf16.gmra.mxu0 %v2453
        %v2513 = vpop.f32.mrf.mxu0
        %v2514 = vadd.f32 0.0, %v2513
        %v2515 = vpop.f32.mrf.mxu0
        %v2516 = vpop.f32.mrf.mxu0
        %v2517 = vadd.f32 0.0, %v2516
        %v2518 = vpop.f32.mrf.mxu0
        %2519 = vdwg.mxu0
        %v2520 = vadd.f32 %v2335, %v2490
        %v2521 = vadd.f32 %v2338, %v2493
        %v2522 = vadd.f32 %v2343, %v2498
        %v2523 = vadd.f32 %v2346, %v2501
        %v2524 = vadd.f32 %v2351, %v2506
        %v2525 = vadd.f32 %v2354, %v2509
        %v2526 = vadd.f32 %v2359, %v2514
        %v2527 = vadd.f32 %v2362, %v2517
        %s2528 = sadd.s32 %s28, 1
        %p2529 = scmp.lt.s32.totalorder %s2528, 0
        %s2530 = ssub.s32 0, %s2528
        %s2531 = scalar_select %p2529, %s2530, %s2528
        %s2532 = sdiv.u32.pop %s2531, 3
        %s2533 = srem.u32.pop %s2531, 3
        %s2534 = ssub.s32 0, %s2533
        %s2535 = scalar_select %p2529, %s2534, %s2533
        %p2536 = scmp.ne.s32.totalorder %s2535, 0
        %p2537 = scmp.lt.s32.totalorder %s2535, 0
        %p2538 = pnand %p2537, %p2536
        %p2539 = pneg %p2538
        %s2540 = sadd.s32 %s2535, 3
        %s2541 = scalar_select %p2539, %s2540, %s2535
        %s2542 = smul.u32 %s2541, 20
        %s2543 = smul.addr %s2542, 4
        %s2544 = scalar_lea.vmem [#allocation2], %s2543
        %v2545 = vld [vmem:[%s2544] sm:$0xf]
        %v2546 = vld [vmem:[%s2544 + $0x8] sm:$0xf]
        %v2547 = vld [vmem:[%s2544 + $0x10] sm:$0xf]
        %v2548 = vld [vmem:[%s2544 + $0x18] sm:$0xf]
        %v2549 = vld [vmem:[%s2544 + $0x20] sm:$0xf]
        %v2550 = vld [vmem:[%s2544 + $0x28] sm:$0xf]
        %v2551 = vld [vmem:[%s2544 + $0x30] sm:$0xf]
        %v2552 = vld [vmem:[%s2544 + $0x38] sm:$0xf]
        %v2553 = vld [vmem:[%s2544 + $0x40] sm:$0xf]
        %v2554 = vld [vmem:[%s2544 + $0x48] sm:$0xf]
        %2555 = vst.msk [vmem:[#allocation3] sm:$0xf] %vm1717, %v2545
        %2556 = vst.msk [vmem:[#allocation3 + $0x4] sm:$0xf] %vm1717, %v2546
        %2557 = vst.msk [vmem:[#allocation3 + $0x8] sm:$0xf] %vm1717, %v2547
        %2558 = vst.msk [vmem:[#allocation3 + $0xc] sm:$0xf] %vm1717, %v2548
        %2559 = vst.msk [vmem:[#allocation3 + $0x10] sm:$0xf] %vm1717, %v2549
        %2560 = vst.msk [vmem:[#allocation3 + $0x14] sm:$0xf] %vm1717, %v2550
        %2561 = vst.msk [vmem:[#allocation3 + $0x18] sm:$0xf] %vm1717, %v2551
        %2562 = vst.msk [vmem:[#allocation3 + $0x1c] sm:$0xf] %vm1717, %v2552
        %2563 = vst.msk [vmem:[#allocation3 + $0x20] sm:$0xf] %vm1717, %v2553
        %2564 = vst.msk [vmem:[#allocation3 + $0x24] sm:$0xf] %vm1717, %v2554
        %v2565 = vld [vmem:[%s2544] sm:$0xf]
        %v2566 = vld [vmem:[%s2544 + $0x4] sm:$0x1]
        %v2567 = vld [vmem:[%s2544 + $0x8] sm:$0xf]
        %v2568 = vld [vmem:[%s2544 + $0xc] sm:$0x1]
        %v2569 = vld [vmem:[%s2544 + $0x10] sm:$0xf]
        %v2570 = vld [vmem:[%s2544 + $0x14] sm:$0x1]
        %v2571 = vld [vmem:[%s2544 + $0x18] sm:$0xf]
        %v2572 = vld [vmem:[%s2544 + $0x1c] sm:$0x1]
        %v2573 = vld [vmem:[%s2544 + $0x20] sm:$0xf]
        %v2574 = vld [vmem:[%s2544 + $0x24] sm:$0x1]
        %v2575 = vld [vmem:[%s2544 + $0x28] sm:$0xf]
        %v2576 = vld [vmem:[%s2544 + $0x2c] sm:$0x1]
        %v2577 = vld [vmem:[%s2544 + $0x30] sm:$0xf]
        %v2578 = vld [vmem:[%s2544 + $0x34] sm:$0x1]
        %v2579 = vld [vmem:[%s2544 + $0x38] sm:$0xf]
        %v2580 = vld [vmem:[%s2544 + $0x3c] sm:$0x1]
        %v2581 = vld [vmem:[%s2544 + $0x40] sm:$0xf]
        %v2582 = vld [vmem:[%s2544 + $0x44] sm:$0x1]
        %v2583 = vld [vmem:[%s2544 + $0x48] sm:$0xf]
        %v2584 = vld [vmem:[%s2544 + $0x4c] sm:$0x1]
        %v2586 = vshrl.u32 %v2565, 16
        %v2588 = vrot.slane %v2586, 4
        %v2589 = vshll.u32 %v2565, 16
        %v2591 = vrot.slane %v2589, 5
        %v2592 = vor.u32 %v2588, %v2591
        %v2593 = vrot.slane %v2592, 4
        %v2595 = vshll.u32 %v2566, 16
        %v2597 = vrot.slane %v2595, 5
        %v2598 = vsel %vm1750, %v2593, %v2597
        %v2600 = vshrl.u32 %v2567, 16
        %v2602 = vrot.slane %v2600, 4
        %v2603 = vshll.u32 %v2567, 16
        %v2605 = vrot.slane %v2603, 5
        %v2606 = vor.u32 %v2602, %v2605
        %v2607 = vrot.slane %v2606, 4
        %v2609 = vshll.u32 %v2568, 16
        %v2611 = vrot.slane %v2609, 5
        %v2612 = vsel %vm1750, %v2607, %v2611
        %v2614 = vshrl.u32 %v2569, 16
        %v2616 = vrot.slane %v2614, 4
        %v2617 = vshll.u32 %v2569, 16
        %v2619 = vrot.slane %v2617, 5
        %v2620 = vor.u32 %v2616, %v2619
        %v2621 = vrot.slane %v2620, 4
        %v2623 = vshll.u32 %v2570, 16
        %v2625 = vrot.slane %v2623, 5
        %v2626 = vsel %vm1750, %v2621, %v2625
        %v2628 = vshrl.u32 %v2571, 16
        %v2630 = vrot.slane %v2628, 4
        %v2631 = vshll.u32 %v2571, 16
        %v2633 = vrot.slane %v2631, 5
        %v2634 = vor.u32 %v2630, %v2633
        %v2635 = vrot.slane %v2634, 4
        %v2637 = vshll.u32 %v2572, 16
        %v2639 = vrot.slane %v2637, 5
        %v2640 = vsel %vm1750, %v2635, %v2639
        %v2642 = vshrl.u32 %v2573, 16
        %v2644 = vrot.slane %v2642, 4
        %v2645 = vshll.u32 %v2573, 16
        %v2647 = vrot.slane %v2645, 5
        %v2648 = vor.u32 %v2644, %v2647
        %v2649 = vrot.slane %v2648, 4
        %v2651 = vshll.u32 %v2574, 16
        %v2653 = vrot.slane %v2651, 5
        %v2654 = vsel %vm1750, %v2649, %v2653
        %v2656 = vshrl.u32 %v2575, 16
        %v2658 = vrot.slane %v2656, 4
        %v2659 = vshll.u32 %v2575, 16
        %v2661 = vrot.slane %v2659, 5
        %v2662 = vor.u32 %v2658, %v2661
        %v2663 = vrot.slane %v2662, 4
        %v2665 = vshll.u32 %v2576, 16
        %v2667 = vrot.slane %v2665, 5
        %v2668 = vsel %vm1750, %v2663, %v2667
        %v2670 = vshrl.u32 %v2577, 16
        %v2672 = vrot.slane %v2670, 4
        %v2673 = vshll.u32 %v2577, 16
        %v2675 = vrot.slane %v2673, 5
        %v2676 = vor.u32 %v2672, %v2675
        %v2677 = vrot.slane %v2676, 4
        %v2679 = vshll.u32 %v2578, 16
        %v2681 = vrot.slane %v2679, 5
        %v2682 = vsel %vm1750, %v2677, %v2681
        %v2684 = vshrl.u32 %v2579, 16
        %v2686 = vrot.slane %v2684, 4
        %v2687 = vshll.u32 %v2579, 16
        %v2689 = vrot.slane %v2687, 5
        %v2690 = vor.u32 %v2686, %v2689
        %v2691 = vrot.slane %v2690, 4
        %v2693 = vshll.u32 %v2580, 16
        %v2695 = vrot.slane %v2693, 5
        %v2696 = vsel %vm1750, %v2691, %v2695
        %v2698 = vshrl.u32 %v2581, 16
        %v2700 = vrot.slane %v2698, 4
        %v2701 = vshll.u32 %v2581, 16
        %v2703 = vrot.slane %v2701, 5
        %v2704 = vor.u32 %v2700, %v2703
        %v2705 = vrot.slane %v2704, 4
        %v2707 = vshll.u32 %v2582, 16
        %v2709 = vrot.slane %v2707, 5
        %v2710 = vsel %vm1750, %v2705, %v2709
        %v2712 = vshrl.u32 %v2583, 16
        %v2714 = vrot.slane %v2712, 4
        %v2715 = vshll.u32 %v2583, 16
        %v2717 = vrot.slane %v2715, 5
        %v2718 = vor.u32 %v2714, %v2717
        %v2719 = vrot.slane %v2718, 4
        %v2721 = vshll.u32 %v2584, 16
        %v2723 = vrot.slane %v2721, 5
        %v2724 = vsel %vm1750, %v2719, %v2723
        %2725 = vrot.lane.b32.xlu0 %v2598, 32
        %v2726 = vpop.permute.xlu0 %2725
        %2727 = vrot.lane.b32.xlu0 %v2612, 32
        %v2728 = vpop.permute.xlu0 %2727
        %2729 = vrot.lane.b32.xlu0 %v2626, 32
        %v2730 = vpop.permute.xlu0 %2729
        %2731 = vrot.lane.b32.xlu0 %v2640, 32
        %v2732 = vpop.permute.xlu0 %2731
        %2733 = vrot.lane.b32.xlu0 %v2654, 32
        %v2734 = vpop.permute.xlu0 %2733
        %2735 = vrot.lane.b32.xlu0 %v2668, 32
        %v2736 = vpop.permute.xlu0 %2735
        %2737 = vrot.lane.b32.xlu0 %v2682, 32
        %v2738 = vpop.permute.xlu0 %2737
        %2739 = vrot.lane.b32.xlu0 %v2696, 32
        %v2740 = vpop.permute.xlu0 %2739
        %2741 = vrot.lane.b32.xlu0 %v2710, 32
        %v2742 = vpop.permute.xlu0 %2741
        %2743 = vrot.lane.b32.xlu0 %v2724, 32
        %v2744 = vpop.permute.xlu0 %2743
        %2755 = vst.msk [vmem:[#allocation3] sm:$0xf] %vm1921, %v2726
        %2756 = vst.msk [vmem:[#allocation3 + $0x4] sm:$0xf] %vm1921, %v2728
        %2757 = vst.msk [vmem:[#allocation3 + $0x8] sm:$0xf] %vm1921, %v2730
        %2758 = vst.msk [vmem:[#allocation3 + $0xc] sm:$0xf] %vm1921, %v2732
        %2759 = vst.msk [vmem:[#allocation3 + $0x10] sm:$0xf] %vm1921, %v2734
        %2760 = vst.msk [vmem:[#allocation3 + $0x14] sm:$0xf] %vm1921, %v2736
        %2761 = vst.msk [vmem:[#allocation3 + $0x18] sm:$0xf] %vm1921, %v2738
        %2762 = vst.msk [vmem:[#allocation3 + $0x1c] sm:$0xf] %vm1921, %v2740
        %2763 = vst.msk [vmem:[#allocation3 + $0x20] sm:$0xf] %vm1921, %v2742
        %2764 = vst.msk [vmem:[#allocation3 + $0x24] sm:$0xf] %vm1921, %v2744
        %v2765 = vld [vmem:[%s2544] sm:$0xe]
        %v2766 = vld [vmem:[%s2544 + $0x4] sm:$0x1]
        %v2767 = vld [vmem:[%s2544 + $0x8] sm:$0xe]
        %v2768 = vld [vmem:[%s2544 + $0xc] sm:$0x1]
        %v2769 = vld [vmem:[%s2544 + $0x10] sm:$0xe]
        %v2770 = vld [vmem:[%s2544 + $0x14] sm:$0x1]
        %v2771 = vld [vmem:[%s2544 + $0x18] sm:$0xe]
        %v2772 = vld [vmem:[%s2544 + $0x1c] sm:$0x1]
        %v2773 = vld [vmem:[%s2544 + $0x20] sm:$0xe]
        %v2774 = vld [vmem:[%s2544 + $0x24] sm:$0x1]
        %v2775 = vld [vmem:[%s2544 + $0x28] sm:$0xe]
        %v2776 = vld [vmem:[%s2544 + $0x2c] sm:$0x1]
        %v2777 = vld [vmem:[%s2544 + $0x30] sm:$0xe]
        %v2778 = vld [vmem:[%s2544 + $0x34] sm:$0x1]
        %v2779 = vld [vmem:[%s2544 + $0x38] sm:$0xe]
        %v2780 = vld [vmem:[%s2544 + $0x3c] sm:$0x1]
        %v2781 = vld [vmem:[%s2544 + $0x40] sm:$0xe]
        %v2782 = vld [vmem:[%s2544 + $0x44] sm:$0x1]
        %v2783 = vld [vmem:[%s2544 + $0x48] sm:$0xe]
        %v2784 = vld [vmem:[%s2544 + $0x4c] sm:$0x1]
        %v2805 = vrot.slane %v2765, 5
        %v2806 = vrot.slane %v2805, 4
        %v2807 = vrot.slane %v2766, 5
        %v2808 = vsel %vm1974, %v2806, %v2807
        %v2809 = vrot.slane %v2767, 5
        %v2810 = vrot.slane %v2809, 4
        %v2811 = vrot.slane %v2768, 5
        %v2812 = vsel %vm1974, %v2810, %v2811
        %v2813 = vrot.slane %v2769, 5
        %v2814 = vrot.slane %v2813, 4
        %v2815 = vrot.slane %v2770, 5
        %v2816 = vsel %vm1974, %v2814, %v2815
        %v2817 = vrot.slane %v2771, 5
        %v2818 = vrot.slane %v2817, 4
        %v2819 = vrot.slane %v2772, 5
        %v2820 = vsel %vm1974, %v2818, %v2819
        %v2821 = vrot.slane %v2773, 5
        %v2822 = vrot.slane %v2821, 4
        %v2823 = vrot.slane %v2774, 5
        %v2824 = vsel %vm1974, %v2822, %v2823
        %v2825 = vrot.slane %v2775, 5
        %v2826 = vrot.slane %v2825, 4
        %v2827 = vrot.slane %v2776, 5
        %v2828 = vsel %vm1974, %v2826, %v2827
        %v2829 = vrot.slane %v2777, 5
        %v2830 = vrot.slane %v2829, 4
        %v2831 = vrot.slane %v2778, 5
        %v2832 = vsel %vm1974, %v2830, %v2831
        %v2833 = vrot.slane %v2779, 5
        %v2834 = vrot.slane %v2833, 4
        %v2835 = vrot.slane %v2780, 5
        %v2836 = vsel %vm1974, %v2834, %v2835
        %v2837 = vrot.slane %v2781, 5
        %v2838 = vrot.slane %v2837, 4
        %v2839 = vrot.slane %v2782, 5
        %v2840 = vsel %vm1974, %v2838, %v2839
        %v2841 = vrot.slane %v2783, 5
        %v2842 = vrot.slane %v2841, 4
        %v2843 = vrot.slane %v2784, 5
        %v2844 = vsel %vm1974, %v2842, %v2843
        %2845 = vrot.lane.b32.xlu0 %v2808, 64
        %v2846 = vpop.permute.xlu0 %2845
        %2847 = vrot.lane.b32.xlu0 %v2812, 64
        %v2848 = vpop.permute.xlu0 %2847
        %2849 = vrot.lane.b32.xlu0 %v2816, 64
        %v2850 = vpop.permute.xlu0 %2849
        %2851 = vrot.lane.b32.xlu0 %v2820, 64
        %v2852 = vpop.permute.xlu0 %2851
        %2853 = vrot.lane.b32.xlu0 %v2824, 64
        %v2854 = vpop.permute.xlu0 %2853
        %2855 = vrot.lane.b32.xlu0 %v2828, 64
        %v2856 = vpop.permute.xlu0 %2855
        %2857 = vrot.lane.b32.xlu0 %v2832, 64
        %v2858 = vpop.permute.xlu0 %2857
        %2859 = vrot.lane.b32.xlu0 %v2836, 64
        %v2860 = vpop.permute.xlu0 %2859
        %2861 = vrot.lane.b32.xlu0 %v2840, 64
        %v2862 = vpop.permute.xlu0 %2861
        %2863 = vrot.lane.b32.xlu0 %v2844, 64
        %v2864 = vpop.permute.xlu0 %2863
        %2875 = vst.msk [vmem:[#allocation3] sm:$0xf] %vm2045, %v2846
        %2876 = vst.msk [vmem:[#allocation3 + $0x4] sm:$0xf] %vm2045, %v2848
        %2877 = vst.msk [vmem:[#allocation3 + $0x8] sm:$0xf] %vm2045, %v2850
        %2878 = vst.msk [vmem:[#allocation3 + $0xc] sm:$0xf] %vm2045, %v2852
        %2879 = vst.msk [vmem:[#allocation3 + $0x10] sm:$0xf] %vm2045, %v2854
        %2880 = vst.msk [vmem:[#allocation3 + $0x14] sm:$0xf] %vm2045, %v2856
        %2881 = vst.msk [vmem:[#allocation3 + $0x18] sm:$0xf] %vm2045, %v2858
        %2882 = vst.msk [vmem:[#allocation3 + $0x1c] sm:$0xf] %vm2045, %v2860
        %2883 = vst.msk [vmem:[#allocation3 + $0x20] sm:$0xf] %vm2045, %v2862
        %2884 = vst.msk [vmem:[#allocation3 + $0x24] sm:$0xf] %vm2045, %v2864
        %v2885 = vld [vmem:[#allocation3] sm:$0xf]
        %v2886 = vld [vmem:[#allocation3 + $0x4] sm:$0xf]
        %v2887 = vld [vmem:[#allocation3 + $0x8] sm:$0xf]
        %v2888 = vld [vmem:[#allocation3 + $0xc] sm:$0xf]
        %v2889 = vld [vmem:[#allocation3 + $0x10] sm:$0xf]
        %v2890 = vld [vmem:[#allocation3 + $0x14] sm:$0xf]
        %v2891 = vld [vmem:[#allocation3 + $0x18] sm:$0xf]
        %v2892 = vld [vmem:[#allocation3 + $0x1c] sm:$0xf]
        %s2893 = scalar_lea.vmem %s5, 144
        %v2894 = vld [vmem:[%s2893] sm:$0xf]
        %v2895 = vld [vmem:[%s2893 + $0x4] sm:$0xf]
        %v2896 = vld [vmem:[%s2893 + $0x8] sm:$0xf]
        %v2897 = vld [vmem:[%s2893 + $0xc] sm:$0xf]
        %v2898 = vld [vmem:[%s2893 + $0x10] sm:$0xf]
        %v2899 = vld [vmem:[%s2893 + $0x14] sm:$0xf]
        %v2900 = vld [vmem:[%s2893 + $0x18] sm:$0xf]
        %v2901 = vld [vmem:[%s2893 + $0x1c] sm:$0xf]
        %v2902 = vld [vmem:[%s2893 + $0x20] sm:$0xf]
        %v2903 = vld [vmem:[%s2893 + $0x24] sm:$0xf]
        %v2904 = vld [vmem:[%s2893 + $0x28] sm:$0xf]
        %v2905 = vld [vmem:[%s2893 + $0x2c] sm:$0xf]
        %v2914 = vunpack.c.l.b16 %v2885
        %v2915 = vunpack.c.l.b16 %v2886
        %v2916 = vunpack.c.l.b16 %v2887
        %v2917 = vunpack.c.l.b16 %v2888
        %v2918 = vunpack.c.l.b16 %v2889
        %v2919 = vunpack.c.l.b16 %v2890
        %v2920 = vunpack.c.l.b16 %v2891
        %v2921 = vunpack.c.l.b16 %v2892
        %v2922 = vpack.c.b16 %v2915, %v2914
        %v2923 = vpack.c.b16 %v2917, %v2916
        %v2924 = vpack.c.b16 %v2919, %v2918
        %v2925 = vpack.c.b16 %v2921, %v2920
        %v2938 = vunpack.c.l.b16 %v2894
        %v2939 = vunpack.c.l.b16 %v2895
        %v2940 = vunpack.c.l.b16 %v2896
        %v2941 = vunpack.c.l.b16 %v2897
        %v2942 = vunpack.c.l.b16 %v2898
        %v2943 = vunpack.c.l.b16 %v2899
        %v2944 = vunpack.c.l.b16 %v2900
        %v2945 = vunpack.c.l.b16 %v2901
        %v2946 = vunpack.c.l.b16 %v2902
        %v2947 = vunpack.c.l.b16 %v2903
        %v2948 = vunpack.c.l.b16 %v2904
        %v2949 = vunpack.c.l.b16 %v2905
        %v2950 = vpack.c.b16 %v2939, %v2938
        %v2951 = vpack.c.b16 %v2941, %v2940
        %v2952 = vpack.c.b16 %v2943, %v2942
        %v2953 = vpack.c.b16 %v2945, %v2944
        %v2954 = vpack.c.b16 %v2947, %v2946
        %v2955 = vpack.c.b16 %v2949, %v2948
        %v2963 = vsel %vm2154, %v2922, 0
        %v2966 = vsel %vm2154, %v2923, 0
        %v2969 = vsel %vm2154, %v2924, 0
        %v2972 = vsel %vm2154, %v2925, 0
        %2974 = vmatprep.subr.bf16.mxu0 0
        %2975 = vmatpush1.bf16.msra.mxu0 0
        %2976 = vmatprep.subr.bf16.mxu0 0
        %2977 = vmatpush1.bf16.msra.mxu0 0
        %2978 = vmatprep.subr.bf16.mxu0 0
        %2979 = vmatpush1.bf16.msra.mxu0 %v2955
        %2980 = vmatprep.subr.bf16.mxu0 0
        %2981 = vmatpush1.bf16.msra.mxu0 %v2954
        %2982 = vmatprep.subr.bf16.mxu0 0
        %2983 = vmatpush1.bf16.msra.mxu0 %v2953
        %2984 = vmatprep.subr.bf16.mxu0 0
        %2985 = vmatpush1.bf16.msra.mxu0 %v2952
        %2986 = vmatprep.subr.bf16.mxu0 0
        %2987 = vmatpush1.bf16.msra.mxu0 %v2951
        %2988 = vmatprep.subr.bf16.mxu0 0
        %2989 = vmatpush1.bf16.msra.mxu0 %v2950
        %2990 = vmatprep.subr.bf16.mxu0 0
        %2991 = vmatpush2.bf16.msra.mxu0 0
        %2992 = vmatprep.subr.bf16.mxu0 0
        %2993 = vmatpush2.bf16.msra.mxu0 0
        %2994 = vmatprep.subr.bf16.mxu0 0
        %2995 = vmatpush2.bf16.msra.mxu0 0
        %2996 = vmatprep.subr.bf16.mxu0 0
        %2997 = vmatpush2.bf16.msra.mxu0 0
        %2998 = vmatprep.subr.bf16.mxu0 0
        %2999 = vmatpush2.bf16.msra.mxu0 0
        %3000 = vmatprep.subr.bf16.mxu0 0
        %3001 = vmatpush2.bf16.msra.mxu0 0
        %3002 = vmatprep.subr.bf16.mxu0 0
        %3003 = vmatpush2.bf16.msra.mxu0 0
        %3004 = vmatprep.subr.bf16.mxu0 0
        %3005 = vmatpush2.bf16.msra.mxu0 0
        %3006 = vmatprep.mubr.bf16.mxu0 0
        %3007 = vmatmul.mubr.bf16.gmra.mxu0 %v2963
        %v3008 = vpop.f32.mrf.mxu0
        %v3009 = vadd.f32 0.0, %v3008
        %v3010 = vpop.f32.mrf.mxu0
        %v3011 = vpop.f32.mrf.mxu0
        %v3012 = vadd.f32 0.0, %v3011
        %v3013 = vpop.f32.mrf.mxu0
        %3014 = vmatprep.mubr.bf16.mxu0 0
        %3015 = vmatmul.mubr.bf16.gmra.mxu0 %v2966
        %v3016 = vpop.f32.mrf.mxu0
        %v3017 = vadd.f32 0.0, %v3016
        %v3018 = vpop.f32.mrf.mxu0
        %v3019 = vpop.f32.mrf.mxu0
        %v3020 = vadd.f32 0.0, %v3019
        %v3021 = vpop.f32.mrf.mxu0
        %3022 = vmatprep.mubr.bf16.mxu0 0
        %3023 = vmatmul.mubr.bf16.gmra.mxu0 %v2969
        %v3024 = vpop.f32.mrf.mxu0
        %v3025 = vadd.f32 0.0, %v3024
        %v3026 = vpop.f32.mrf.mxu0
        %v3027 = vpop.f32.mrf.mxu0
        %v3028 = vadd.f32 0.0, %v3027
        %v3029 = vpop.f32.mrf.mxu0
        %3030 = vmatprep.mubr.bf16.mxu0 0
        %3031 = vmatmul.mubr.bf16.gmra.mxu0 %v2972
        %v3032 = vpop.f32.mrf.mxu0
        %v3033 = vadd.f32 0.0, %v3032
        %v3034 = vpop.f32.mrf.mxu0
        %v3035 = vpop.f32.mrf.mxu0
        %v3036 = vadd.f32 0.0, %v3035
        %v3037 = vpop.f32.mrf.mxu0
        %3038 = vdwg.mxu0
        %v3039 = vadd.f32 %v2520, %v3009
        %v3040 = vadd.f32 %v2521, %v3012
        %v3041 = vadd.f32 %v2522, %v3017
        %v3042 = vadd.f32 %v2523, %v3020
        %v3043 = vadd.f32 %v2524, %v3025
        %v3044 = vadd.f32 %v2525, %v3028
        %v3045 = vadd.f32 %v2526, %v3033
        %v3046 = vadd.f32 %v2527, %v3036
        %v3047 = vld [vmem:[%s2076] sm:$0xf]
        %v3048 = vld [vmem:[%s2076 + $0x4] sm:$0xf]
        %v3049 = vld [vmem:[%s2076 + $0x8] sm:$0xf]
        %v3050 = vld [vmem:[%s2076 + $0xc] sm:$0xf]
        %v3051 = vld [vmem:[%s2076 + $0x10] sm:$0xf]
        %v3052 = vld [vmem:[%s2076 + $0x14] sm:$0xf]
        %v3053 = vld [vmem:[%s2076 + $0x18] sm:$0xf]
        %v3054 = vld [vmem:[%s2076 + $0x1c] sm:$0xf]
        %s3055 = scalar_lea.vmem %s5, 192
        %v3056 = vld [vmem:[%s3055] sm:$0xf]
        %v3057 = vld [vmem:[%s3055 + $0x4] sm:$0xf]
        %v3058 = vld [vmem:[%s3055 + $0x8] sm:$0xf]
        %v3059 = vld [vmem:[%s3055 + $0xc] sm:$0xf]
        %v3060 = vld [vmem:[%s3055 + $0x10] sm:$0xf]
        %v3061 = vld [vmem:[%s3055 + $0x14] sm:$0xf]
        %v3062 = vld [vmem:[%s3055 + $0x18] sm:$0xf]
        %v3063 = vld [vmem:[%s3055 + $0x1c] sm:$0xf]
        %v3064 = vld [vmem:[%s3055 + $0x20] sm:$0xf]
        %v3065 = vld [vmem:[%s3055 + $0x24] sm:$0xf]
        %v3066 = vld [vmem:[%s3055 + $0x28] sm:$0xf]
        %v3067 = vld [vmem:[%s3055 + $0x2c] sm:$0xf]
        %v3076 = vunpack.c.l.b16 %v3047
        %v3077 = vunpack.c.l.b16 %v3048
        %v3078 = vunpack.c.l.b16 %v3049
        %v3079 = vunpack.c.l.b16 %v3050
        %v3080 = vunpack.c.l.b16 %v3051
        %v3081 = vunpack.c.l.b16 %v3052
        %v3082 = vunpack.c.l.b16 %v3053
        %v3083 = vunpack.c.l.b16 %v3054
        %v3084 = vpack.c.b16 %v3077, %v3076
        %v3085 = vpack.c.b16 %v3079, %v3078
        %v3086 = vpack.c.b16 %v3081, %v3080
        %v3087 = vpack.c.b16 %v3083, %v3082
        %v3100 = vunpack.c.l.b16 %v3056
        %v3101 = vunpack.c.l.b16 %v3057
        %v3102 = vunpack.c.l.b16 %v3058
        %v3103 = vunpack.c.l.b16 %v3059
        %v3104 = vunpack.c.l.b16 %v3060
        %v3105 = vunpack.c.l.b16 %v3061
        %v3106 = vunpack.c.l.b16 %v3062
        %v3107 = vunpack.c.l.b16 %v3063
        %v3108 = vunpack.c.l.b16 %v3064
        %v3109 = vunpack.c.l.b16 %v3065
        %v3110 = vunpack.c.l.b16 %v3066
        %v3111 = vunpack.c.l.b16 %v3067
        %v3112 = vpack.c.b16 %v3101, %v3100
        %v3113 = vpack.c.b16 %v3103, %v3102
        %v3114 = vpack.c.b16 %v3105, %v3104
        %v3115 = vpack.c.b16 %v3107, %v3106
        %v3116 = vpack.c.b16 %v3109, %v3108
        %v3117 = vpack.c.b16 %v3111, %v3110
        %v3125 = vsel %vm2154, %v3084, 0
        %v3128 = vsel %vm2154, %v3085, 0
        %v3131 = vsel %vm2154, %v3086, 0
        %v3134 = vsel %vm2154, %v3087, 0
        %3136 = vmatprep.subr.bf16.mxu0 0
        %3137 = vmatpush1.bf16.msra.mxu0 0
        %3138 = vmatprep.subr.bf16.mxu0 0
        %3139 = vmatpush1.bf16.msra.mxu0 0
        %3140 = vmatprep.subr.bf16.mxu0 0
        %3141 = vmatpush1.bf16.msra.mxu0 %v3117
        %3142 = vmatprep.subr.bf16.mxu0 0
        %3143 = vmatpush1.bf16.msra.mxu0 %v3116
        %3144 = vmatprep.subr.bf16.mxu0 0
        %3145 = vmatpush1.bf16.msra.mxu0 %v3115
        %3146 = vmatprep.subr.bf16.mxu0 0
        %3147 = vmatpush1.bf16.msra.mxu0 %v3114
        %3148 = vmatprep.subr.bf16.mxu0 0
        %3149 = vmatpush1.bf16.msra.mxu0 %v3113
        %3150 = vmatprep.subr.bf16.mxu0 0
        %3151 = vmatpush1.bf16.msra.mxu0 %v3112
        %3152 = vmatprep.subr.bf16.mxu0 0
        %3153 = vmatpush2.bf16.msra.mxu0 0
        %3154 = vmatprep.subr.bf16.mxu0 0
        %3155 = vmatpush2.bf16.msra.mxu0 0
        %3156 = vmatprep.subr.bf16.mxu0 0
        %3157 = vmatpush2.bf16.msra.mxu0 0
        %3158 = vmatprep.subr.bf16.mxu0 0
        %3159 = vmatpush2.bf16.msra.mxu0 0
        %3160 = vmatprep.subr.bf16.mxu0 0
        %3161 = vmatpush2.bf16.msra.mxu0 0
        %3162 = vmatprep.subr.bf16.mxu0 0
        %3163 = vmatpush2.bf16.msra.mxu0 0
        %3164 = vmatprep.subr.bf16.mxu0 0
        %3165 = vmatpush2.bf16.msra.mxu0 0
        %3166 = vmatprep.subr.bf16.mxu0 0
        %3167 = vmatpush2.bf16.msra.mxu0 0
        %3168 = vmatprep.mubr.bf16.mxu0 0
        %3169 = vmatmul.mubr.bf16.gmra.mxu0 %v3125
        %v3170 = vpop.f32.mrf.mxu0
        %v3171 = vadd.f32 0.0, %v3170
        %v3172 = vpop.f32.mrf.mxu0
        %v3173 = vpop.f32.mrf.mxu0
        %v3174 = vadd.f32 0.0, %v3173
        %v3175 = vpop.f32.mrf.mxu0
        %3176 = vmatprep.mubr.bf16.mxu0 0
        %3177 = vmatmul.mubr.bf16.gmra.mxu0 %v3128
        %v3178 = vpop.f32.mrf.mxu0
        %v3179 = vadd.f32 0.0, %v3178
        %v3180 = vpop.f32.mrf.mxu0
        %v3181 = vpop.f32.mrf.mxu0
        %v3182 = vadd.f32 0.0, %v3181
        %v3183 = vpop.f32.mrf.mxu0
        %3184 = vmatprep.mubr.bf16.mxu0 0
        %3185 = vmatmul.mubr.bf16.gmra.mxu0 %v3131
        %v3186 = vpop.f32.mrf.mxu0
        %v3187 = vadd.f32 0.0, %v3186
        %v3188 = vpop.f32.mrf.mxu0
        %v3189 = vpop.f32.mrf.mxu0
        %v3190 = vadd.f32 0.0, %v3189
        %v3191 = vpop.f32.mrf.mxu0
        %3192 = vmatprep.mubr.bf16.mxu0 0
        %3193 = vmatmul.mubr.bf16.gmra.mxu0 %v3134
        %v3194 = vpop.f32.mrf.mxu0
        %v3195 = vadd.f32 0.0, %v3194
        %v3196 = vpop.f32.mrf.mxu0
        %v3197 = vpop.f32.mrf.mxu0
        %v3198 = vadd.f32 0.0, %v3197
        %v3199 = vpop.f32.mrf.mxu0
        %3200 = vdwg.mxu0
        %v3201 = vadd.f32 %v3039, %v3171
        %v3202 = vadd.f32 %v3040, %v3174
        %v3203 = vadd.f32 %v3041, %v3179
        %v3204 = vadd.f32 %v3042, %v3182
        %v3205 = vadd.f32 %v3043, %v3187
        %v3206 = vadd.f32 %v3044, %v3190
        %v3207 = vadd.f32 %v3045, %v3195
        %v3208 = vadd.f32 %v3046, %v3198
        %v3209 = vld [vmem:[%s2365] sm:$0xf]
        %v3210 = vld [vmem:[%s2365 + $0x4] sm:$0xf]
        %v3211 = vld [vmem:[%s2365 + $0x8] sm:$0xf]
        %v3212 = vld [vmem:[%s2365 + $0xc] sm:$0xf]
        %v3213 = vld [vmem:[%s2365 + $0x10] sm:$0xf]
        %v3214 = vld [vmem:[%s2365 + $0x14] sm:$0xf]
        %v3215 = vld [vmem:[%s2365 + $0x18] sm:$0xf]
        %v3216 = vld [vmem:[%s2365 + $0x1c] sm:$0xf]
        %s3217 = scalar_lea.vmem %s5, 240
        %v3218 = vld [vmem:[%s3217] sm:$0xf]
        %v3219 = vld [vmem:[%s3217 + $0x4] sm:$0xf]
        %v3220 = vld [vmem:[%s3217 + $0x8] sm:$0xf]
        %v3221 = vld [vmem:[%s3217 + $0xc] sm:$0xf]
        %v3222 = vld [vmem:[%s3217 + $0x10] sm:$0xf]
        %v3223 = vld [vmem:[%s3217 + $0x14] sm:$0xf]
        %v3224 = vld [vmem:[%s3217 + $0x18] sm:$0xf]
        %v3225 = vld [vmem:[%s3217 + $0x1c] sm:$0xf]
        %v3226 = vld [vmem:[%s3217 + $0x20] sm:$0xf]
        %v3227 = vld [vmem:[%s3217 + $0x24] sm:$0xf]
        %v3228 = vld [vmem:[%s3217 + $0x28] sm:$0xf]
        %v3229 = vld [vmem:[%s3217 + $0x2c] sm:$0xf]
        %v3238 = vunpack.c.l.b16 %v3209
        %v3239 = vunpack.c.l.b16 %v3210
        %v3240 = vunpack.c.l.b16 %v3211
        %v3241 = vunpack.c.l.b16 %v3212
        %v3242 = vunpack.c.l.b16 %v3213
        %v3243 = vunpack.c.l.b16 %v3214
        %v3244 = vunpack.c.l.b16 %v3215
        %v3245 = vunpack.c.l.b16 %v3216
        %v3246 = vpack.c.b16 %v3239, %v3238
        %v3247 = vpack.c.b16 %v3241, %v3240
        %v3248 = vpack.c.b16 %v3243, %v3242
        %v3249 = vpack.c.b16 %v3245, %v3244
        %v3262 = vunpack.c.l.b16 %v3218
        %v3263 = vunpack.c.l.b16 %v3219
        %v3264 = vunpack.c.l.b16 %v3220
        %v3265 = vunpack.c.l.b16 %v3221
        %v3266 = vunpack.c.l.b16 %v3222
        %v3267 = vunpack.c.l.b16 %v3223
        %v3268 = vunpack.c.l.b16 %v3224
        %v3269 = vunpack.c.l.b16 %v3225
        %v3270 = vunpack.c.l.b16 %v3226
        %v3271 = vunpack.c.l.b16 %v3227
        %v3272 = vunpack.c.l.b16 %v3228
        %v3273 = vunpack.c.l.b16 %v3229
        %v3274 = vpack.c.b16 %v3263, %v3262
        %v3275 = vpack.c.b16 %v3265, %v3264
        %v3276 = vpack.c.b16 %v3267, %v3266
        %v3277 = vpack.c.b16 %v3269, %v3268
        %v3278 = vpack.c.b16 %v3271, %v3270
        %v3279 = vpack.c.b16 %v3273, %v3272
        %v3287 = vsel %vm2154, %v3246, 0
        %v3290 = vsel %vm2154, %v3247, 0
        %v3293 = vsel %vm2154, %v3248, 0
        %v3296 = vsel %vm2154, %v3249, 0
        %3298 = vmatprep.subr.bf16.mxu0 0
        %3299 = vmatpush1.bf16.msra.mxu0 0
        %3300 = vmatprep.subr.bf16.mxu0 0
        %3301 = vmatpush1.bf16.msra.mxu0 0
        %3302 = vmatprep.subr.bf16.mxu0 0
        %3303 = vmatpush1.bf16.msra.mxu0 %v3279
        %3304 = vmatprep.subr.bf16.mxu0 0
        %3305 = vmatpush1.bf16.msra.mxu0 %v3278
        %3306 = vmatprep.subr.bf16.mxu0 0
        %3307 = vmatpush1.bf16.msra.mxu0 %v3277
        %3308 = vmatprep.subr.bf16.mxu0 0
        %3309 = vmatpush1.bf16.msra.mxu0 %v3276
        %3310 = vmatprep.subr.bf16.mxu0 0
        %3311 = vmatpush1.bf16.msra.mxu0 %v3275
        %3312 = vmatprep.subr.bf16.mxu0 0
        %3313 = vmatpush1.bf16.msra.mxu0 %v3274
        %3314 = vmatprep.subr.bf16.mxu0 0
        %3315 = vmatpush2.bf16.msra.mxu0 0
        %3316 = vmatprep.subr.bf16.mxu0 0
        %3317 = vmatpush2.bf16.msra.mxu0 0
        %3318 = vmatprep.subr.bf16.mxu0 0
        %3319 = vmatpush2.bf16.msra.mxu0 0
        %3320 = vmatprep.subr.bf16.mxu0 0
        %3321 = vmatpush2.bf16.msra.mxu0 0
        %3322 = vmatprep.subr.bf16.mxu0 0
        %3323 = vmatpush2.bf16.msra.mxu0 0
        %3324 = vmatprep.subr.bf16.mxu0 0
        %3325 = vmatpush2.bf16.msra.mxu0 0
        %3326 = vmatprep.subr.bf16.mxu0 0
        %3327 = vmatpush2.bf16.msra.mxu0 0
        %3328 = vmatprep.subr.bf16.mxu0 0
        %3329 = vmatpush2.bf16.msra.mxu0 0
        %3330 = vmatprep.mubr.bf16.mxu0 0
        %3331 = vmatmul.mubr.bf16.gmra.mxu0 %v3287
        %v3332 = vpop.f32.mrf.mxu0
        %v3333 = vadd.f32 0.0, %v3332
        %v3334 = vpop.f32.mrf.mxu0
        %v3335 = vpop.f32.mrf.mxu0
        %v3336 = vadd.f32 0.0, %v3335
        %v3337 = vpop.f32.mrf.mxu0
        %3338 = vmatprep.mubr.bf16.mxu0 0
        %3339 = vmatmul.mubr.bf16.gmra.mxu0 %v3290
        %v3340 = vpop.f32.mrf.mxu0
        %v3341 = vadd.f32 0.0, %v3340
        %v3342 = vpop.f32.mrf.mxu0
        %v3343 = vpop.f32.mrf.mxu0
        %v3344 = vadd.f32 0.0, %v3343
        %v3345 = vpop.f32.mrf.mxu0
        %3346 = vmatprep.mubr.bf16.mxu0 0
        %3347 = vmatmul.mubr.bf16.gmra.mxu0 %v3293
        %v3348 = vpop.f32.mrf.mxu0
        %v3349 = vadd.f32 0.0, %v3348
        %v3350 = vpop.f32.mrf.mxu0
        %v3351 = vpop.f32.mrf.mxu0
        %v3352 = vadd.f32 0.0, %v3351
        %v3353 = vpop.f32.mrf.mxu0
        %3354 = vmatprep.mubr.bf16.mxu0 0
        %3355 = vmatmul.mubr.bf16.gmra.mxu0 %v3296
        %v3356 = vpop.f32.mrf.mxu0
        %v3357 = vadd.f32 0.0, %v3356
        %v3358 = vpop.f32.mrf.mxu0
        %v3359 = vpop.f32.mrf.mxu0
        %v3360 = vadd.f32 0.0, %v3359
        %v3361 = vpop.f32.mrf.mxu0
        %3362 = vdwg.mxu0
        %v3363 = vadd.f32 %v3201, %v3333
        %v3364 = vadd.f32 %v3202, %v3336
        %v3365 = vadd.f32 %v3203, %v3341
        %v3366 = vadd.f32 %v3204, %v3344
        %v3367 = vadd.f32 %v3205, %v3349
        %v3368 = vadd.f32 %v3206, %v3352
        %v3369 = vadd.f32 %v3207, %v3357
        %v3370 = vadd.f32 %v3208, %v3360
        %s3371 = sadd.s32 %s28, 2
        %p3372 = scmp.lt.s32.totalorder %s3371, 0
        %s3373 = ssub.s32 0, %s3371
        %s3374 = scalar_select %p3372, %s3373, %s3371
        %s3375 = sdiv.u32.pop %s3374, 3
        %s3376 = srem.u32.pop %s3374, 3
        %s3377 = ssub.s32 0, %s3376
        %s3378 = scalar_select %p3372, %s3377, %s3376
        %p3379 = scmp.ne.s32.totalorder %s3378, 0
        %p3380 = scmp.lt.s32.totalorder %s3378, 0
        %p3381 = pnand %p3380, %p3379
        %p3382 = pneg %p3381
        %s3383 = sadd.s32 %s3378, 3
        %s3384 = scalar_select %p3382, %s3383, %s3378
        %s3385 = smul.u32 %s3384, 20
        %s3386 = smul.addr %s3385, 4
        %s3387 = scalar_lea.vmem [#allocation2], %s3386
        %v3388 = vld [vmem:[%s3387] sm:$0xf]
        %v3389 = vld [vmem:[%s3387 + $0x8] sm:$0xf]
        %v3390 = vld [vmem:[%s3387 + $0x10] sm:$0xf]
        %v3391 = vld [vmem:[%s3387 + $0x18] sm:$0xf]
        %v3392 = vld [vmem:[%s3387 + $0x20] sm:$0xf]
        %v3393 = vld [vmem:[%s3387 + $0x28] sm:$0xf]
        %v3394 = vld [vmem:[%s3387 + $0x30] sm:$0xf]
        %v3395 = vld [vmem:[%s3387 + $0x38] sm:$0xf]
        %v3396 = vld [vmem:[%s3387 + $0x40] sm:$0xf]
        %v3397 = vld [vmem:[%s3387 + $0x48] sm:$0xf]
        %3398 = vst.msk [vmem:[#allocation3] sm:$0xf] %vm1717, %v3388
        %3399 = vst.msk [vmem:[#allocation3 + $0x4] sm:$0xf] %vm1717, %v3389
        %3400 = vst.msk [vmem:[#allocation3 + $0x8] sm:$0xf] %vm1717, %v3390
        %3401 = vst.msk [vmem:[#allocation3 + $0xc] sm:$0xf] %vm1717, %v3391
        %3402 = vst.msk [vmem:[#allocation3 + $0x10] sm:$0xf] %vm1717, %v3392
        %3403 = vst.msk [vmem:[#allocation3 + $0x14] sm:$0xf] %vm1717, %v3393
        %3404 = vst.msk [vmem:[#allocation3 + $0x18] sm:$0xf] %vm1717, %v3394
        %3405 = vst.msk [vmem:[#allocation3 + $0x1c] sm:$0xf] %vm1717, %v3395
        %3406 = vst.msk [vmem:[#allocation3 + $0x20] sm:$0xf] %vm1717, %v3396
        %3407 = vst.msk [vmem:[#allocation3 + $0x24] sm:$0xf] %vm1717, %v3397
        %v3408 = vld [vmem:[%s3387] sm:$0xf]
        %v3409 = vld [vmem:[%s3387 + $0x4] sm:$0x1]
        %v3410 = vld [vmem:[%s3387 + $0x8] sm:$0xf]
        %v3411 = vld [vmem:[%s3387 + $0xc] sm:$0x1]
        %v3412 = vld [vmem:[%s3387 + $0x10] sm:$0xf]
        %v3413 = vld [vmem:[%s3387 + $0x14] sm:$0x1]
        %v3414 = vld [vmem:[%s3387 + $0x18] sm:$0xf]
        %v3415 = vld [vmem:[%s3387 + $0x1c] sm:$0x1]
        %v3416 = vld [vmem:[%s3387 + $0x20] sm:$0xf]
        %v3417 = vld [vmem:[%s3387 + $0x24] sm:$0x1]
        %v3418 = vld [vmem:[%s3387 + $0x28] sm:$0xf]
        %v3419 = vld [vmem:[%s3387 + $0x2c] sm:$0x1]
        %v3420 = vld [vmem:[%s3387 + $0x30] sm:$0xf]
        %v3421 = vld [vmem:[%s3387 + $0x34] sm:$0x1]
        %v3422 = vld [vmem:[%s3387 + $0x38] sm:$0xf]
        %v3423 = vld [vmem:[%s3387 + $0x3c] sm:$0x1]
        %v3424 = vld [vmem:[%s3387 + $0x40] sm:$0xf]
        %v3425 = vld [vmem:[%s3387 + $0x44] sm:$0x1]
        %v3426 = vld [vmem:[%s3387 + $0x48] sm:$0xf]
        %v3427 = vld [vmem:[%s3387 + $0x4c] sm:$0x1]
        %v3429 = vshrl.u32 %v3408, 16
        %v3431 = vrot.slane %v3429, 4
        %v3432 = vshll.u32 %v3408, 16
        %v3434 = vrot.slane %v3432, 5
        %v3435 = vor.u32 %v3431, %v3434
        %v3436 = vrot.slane %v3435, 4
        %v3438 = vshll.u32 %v3409, 16
        %v3440 = vrot.slane %v3438, 5
        %v3441 = vsel %vm1750, %v3436, %v3440
        %v3443 = vshrl.u32 %v3410, 16
        %v3445 = vrot.slane %v3443, 4
        %v3446 = vshll.u32 %v3410, 16
        %v3448 = vrot.slane %v3446, 5
        %v3449 = vor.u32 %v3445, %v3448
        %v3450 = vrot.slane %v3449, 4
        %v3452 = vshll.u32 %v3411, 16
        %v3454 = vrot.slane %v3452, 5
        %v3455 = vsel %vm1750, %v3450, %v3454
        %v3457 = vshrl.u32 %v3412, 16
        %v3459 = vrot.slane %v3457, 4
        %v3460 = vshll.u32 %v3412, 16
        %v3462 = vrot.slane %v3460, 5
        %v3463 = vor.u32 %v3459, %v3462
        %v3464 = vrot.slane %v3463, 4
        %v3466 = vshll.u32 %v3413, 16
        %v3468 = vrot.slane %v3466, 5
        %v3469 = vsel %vm1750, %v3464, %v3468
        %v3471 = vshrl.u32 %v3414, 16
        %v3473 = vrot.slane %v3471, 4
        %v3474 = vshll.u32 %v3414, 16
        %v3476 = vrot.slane %v3474, 5
        %v3477 = vor.u32 %v3473, %v3476
        %v3478 = vrot.slane %v3477, 4
        %v3480 = vshll.u32 %v3415, 16
        %v3482 = vrot.slane %v3480, 5
        %v3483 = vsel %vm1750, %v3478, %v3482
        %v3485 = vshrl.u32 %v3416, 16
        %v3487 = vrot.slane %v3485, 4
        %v3488 = vshll.u32 %v3416, 16
        %v3490 = vrot.slane %v3488, 5
        %v3491 = vor.u32 %v3487, %v3490
        %v3492 = vrot.slane %v3491, 4
        %v3494 = vshll.u32 %v3417, 16
        %v3496 = vrot.slane %v3494, 5
        %v3497 = vsel %vm1750, %v3492, %v3496
        %v3499 = vshrl.u32 %v3418, 16
        %v3501 = vrot.slane %v3499, 4
        %v3502 = vshll.u32 %v3418, 16
        %v3504 = vrot.slane %v3502, 5
        %v3505 = vor.u32 %v3501, %v3504
        %v3506 = vrot.slane %v3505, 4
        %v3508 = vshll.u32 %v3419, 16
        %v3510 = vrot.slane %v3508, 5
        %v3511 = vsel %vm1750, %v3506, %v3510
        %v3513 = vshrl.u32 %v3420, 16
        %v3515 = vrot.slane %v3513, 4
        %v3516 = vshll.u32 %v3420, 16
        %v3518 = vrot.slane %v3516, 5
        %v3519 = vor.u32 %v3515, %v3518
        %v3520 = vrot.slane %v3519, 4
        %v3522 = vshll.u32 %v3421, 16
        %v3524 = vrot.slane %v3522, 5
        %v3525 = vsel %vm1750, %v3520, %v3524
        %v3527 = vshrl.u32 %v3422, 16
        %v3529 = vrot.slane %v3527, 4
        %v3530 = vshll.u32 %v3422, 16
        %v3532 = vrot.slane %v3530, 5
        %v3533 = vor.u32 %v3529, %v3532
        %v3534 = vrot.slane %v3533, 4
        %v3536 = vshll.u32 %v3423, 16
        %v3538 = vrot.slane %v3536, 5
        %v3539 = vsel %vm1750, %v3534, %v3538
        %v3541 = vshrl.u32 %v3424, 16
        %v3543 = vrot.slane %v3541, 4
        %v3544 = vshll.u32 %v3424, 16
        %v3546 = vrot.slane %v3544, 5
        %v3547 = vor.u32 %v3543, %v3546
        %v3548 = vrot.slane %v3547, 4
        %v3550 = vshll.u32 %v3425, 16
        %v3552 = vrot.slane %v3550, 5
        %v3553 = vsel %vm1750, %v3548, %v3552
        %v3555 = vshrl.u32 %v3426, 16
        %v3557 = vrot.slane %v3555, 4
        %v3558 = vshll.u32 %v3426, 16
        %v3560 = vrot.slane %v3558, 5
        %v3561 = vor.u32 %v3557, %v3560
        %v3562 = vrot.slane %v3561, 4
        %v3564 = vshll.u32 %v3427, 16
        %v3566 = vrot.slane %v3564, 5
        %v3567 = vsel %vm1750, %v3562, %v3566
        %3568 = vrot.lane.b32.xlu0 %v3441, 32
        %v3569 = vpop.permute.xlu0 %3568
        %3570 = vrot.lane.b32.xlu0 %v3455, 32
        %v3571 = vpop.permute.xlu0 %3570
        %3572 = vrot.lane.b32.xlu0 %v3469, 32
        %v3573 = vpop.permute.xlu0 %3572
        %3574 = vrot.lane.b32.xlu0 %v3483, 32
        %v3575 = vpop.permute.xlu0 %3574
        %3576 = vrot.lane.b32.xlu0 %v3497, 32
        %v3577 = vpop.permute.xlu0 %3576
        %3578 = vrot.lane.b32.xlu0 %v3511, 32
        %v3579 = vpop.permute.xlu0 %3578
        %3580 = vrot.lane.b32.xlu0 %v3525, 32
        %v3581 = vpop.permute.xlu0 %3580
        %3582 = vrot.lane.b32.xlu0 %v3539, 32
        %v3583 = vpop.permute.xlu0 %3582
        %3584 = vrot.lane.b32.xlu0 %v3553, 32
        %v3585 = vpop.permute.xlu0 %3584
        %3586 = vrot.lane.b32.xlu0 %v3567, 32
        %v3587 = vpop.permute.xlu0 %3586
        %3598 = vst.msk [vmem:[#allocation3] sm:$0xf] %vm1921, %v3569
        %3599 = vst.msk [vmem:[#allocation3 + $0x4] sm:$0xf] %vm1921, %v3571
        %3600 = vst.msk [vmem:[#allocation3 + $0x8] sm:$0xf] %vm1921, %v3573
        %3601 = vst.msk [vmem:[#allocation3 + $0xc] sm:$0xf] %vm1921, %v3575
        %3602 = vst.msk [vmem:[#allocation3 + $0x10] sm:$0xf] %vm1921, %v3577
        %3603 = vst.msk [vmem:[#allocation3 + $0x14] sm:$0xf] %vm1921, %v3579
        %3604 = vst.msk [vmem:[#allocation3 + $0x18] sm:$0xf] %vm1921, %v3581
        %3605 = vst.msk [vmem:[#allocation3 + $0x1c] sm:$0xf] %vm1921, %v3583
        %3606 = vst.msk [vmem:[#allocation3 + $0x20] sm:$0xf] %vm1921, %v3585
        %3607 = vst.msk [vmem:[#allocation3 + $0x24] sm:$0xf] %vm1921, %v3587
        %v3608 = vld [vmem:[%s3387] sm:$0xe]
        %v3609 = vld [vmem:[%s3387 + $0x4] sm:$0x1]
        %v3610 = vld [vmem:[%s3387 + $0x8] sm:$0xe]
        %v3611 = vld [vmem:[%s3387 + $0xc] sm:$0x1]
        %v3612 = vld [vmem:[%s3387 + $0x10] sm:$0xe]
        %v3613 = vld [vmem:[%s3387 + $0x14] sm:$0x1]
        %v3614 = vld [vmem:[%s3387 + $0x18] sm:$0xe]
        %v3615 = vld [vmem:[%s3387 + $0x1c] sm:$0x1]
        %v3616 = vld [vmem:[%s3387 + $0x20] sm:$0xe]
        %v3617 = vld [vmem:[%s3387 + $0x24] sm:$0x1]
        %v3618 = vld [vmem:[%s3387 + $0x28] sm:$0xe]
        %v3619 = vld [vmem:[%s3387 + $0x2c] sm:$0x1]
        %v3620 = vld [vmem:[%s3387 + $0x30] sm:$0xe]
        %v3621 = vld [vmem:[%s3387 + $0x34] sm:$0x1]
        %v3622 = vld [vmem:[%s3387 + $0x38] sm:$0xe]
        %v3623 = vld [vmem:[%s3387 + $0x3c] sm:$0x1]
        %v3624 = vld [vmem:[%s3387 + $0x40] sm:$0xe]
        %v3625 = vld [vmem:[%s3387 + $0x44] sm:$0x1]
        %v3626 = vld [vmem:[%s3387 + $0x48] sm:$0xe]
        %v3627 = vld [vmem:[%s3387 + $0x4c] sm:$0x1]
        %v3648 = vrot.slane %v3608, 5
        %v3649 = vrot.slane %v3648, 4
        %v3650 = vrot.slane %v3609, 5
        %v3651 = vsel %vm1974, %v3649, %v3650
        %v3652 = vrot.slane %v3610, 5
        %v3653 = vrot.slane %v3652, 4
        %v3654 = vrot.slane %v3611, 5
        %v3655 = vsel %vm1974, %v3653, %v3654
        %v3656 = vrot.slane %v3612, 5
        %v3657 = vrot.slane %v3656, 4
        %v3658 = vrot.slane %v3613, 5
        %v3659 = vsel %vm1974, %v3657, %v3658
        %v3660 = vrot.slane %v3614, 5
        %v3661 = vrot.slane %v3660, 4
        %v3662 = vrot.slane %v3615, 5
        %v3663 = vsel %vm1974, %v3661, %v3662
        %v3664 = vrot.slane %v3616, 5
        %v3665 = vrot.slane %v3664, 4
        %v3666 = vrot.slane %v3617, 5
        %v3667 = vsel %vm1974, %v3665, %v3666
        %v3668 = vrot.slane %v3618, 5
        %v3669 = vrot.slane %v3668, 4
        %v3670 = vrot.slane %v3619, 5
        %v3671 = vsel %vm1974, %v3669, %v3670
        %v3672 = vrot.slane %v3620, 5
        %v3673 = vrot.slane %v3672, 4
        %v3674 = vrot.slane %v3621, 5
        %v3675 = vsel %vm1974, %v3673, %v3674
        %v3676 = vrot.slane %v3622, 5
        %v3677 = vrot.slane %v3676, 4
        %v3678 = vrot.slane %v3623, 5
        %v3679 = vsel %vm1974, %v3677, %v3678
        %v3680 = vrot.slane %v3624, 5
        %v3681 = vrot.slane %v3680, 4
        %v3682 = vrot.slane %v3625, 5
        %v3683 = vsel %vm1974, %v3681, %v3682
        %v3684 = vrot.slane %v3626, 5
        %v3685 = vrot.slane %v3684, 4
        %v3686 = vrot.slane %v3627, 5
        %v3687 = vsel %vm1974, %v3685, %v3686
        %3688 = vrot.lane.b32.xlu0 %v3651, 64
        %v3689 = vpop.permute.xlu0 %3688
        %3690 = vrot.lane.b32.xlu0 %v3655, 64
        %v3691 = vpop.permute.xlu0 %3690
        %3692 = vrot.lane.b32.xlu0 %v3659, 64
        %v3693 = vpop.permute.xlu0 %3692
        %3694 = vrot.lane.b32.xlu0 %v3663, 64
        %v3695 = vpop.permute.xlu0 %3694
        %3696 = vrot.lane.b32.xlu0 %v3667, 64
        %v3697 = vpop.permute.xlu0 %3696
        %3698 = vrot.lane.b32.xlu0 %v3671, 64
        %v3699 = vpop.permute.xlu0 %3698
        %3700 = vrot.lane.b32.xlu0 %v3675, 64
        %v3701 = vpop.permute.xlu0 %3700
        %3702 = vrot.lane.b32.xlu0 %v3679, 64
        %v3703 = vpop.permute.xlu0 %3702
        %3704 = vrot.lane.b32.xlu0 %v3683, 64
        %v3705 = vpop.permute.xlu0 %3704
        %3706 = vrot.lane.b32.xlu0 %v3687, 64
        %v3707 = vpop.permute.xlu0 %3706
        %3718 = vst.msk [vmem:[#allocation3] sm:$0xf] %vm2045, %v3689
        %3719 = vst.msk [vmem:[#allocation3 + $0x4] sm:$0xf] %vm2045, %v3691
        %3720 = vst.msk [vmem:[#allocation3 + $0x8] sm:$0xf] %vm2045, %v3693
        %3721 = vst.msk [vmem:[#allocation3 + $0xc] sm:$0xf] %vm2045, %v3695
        %3722 = vst.msk [vmem:[#allocation3 + $0x10] sm:$0xf] %vm2045, %v3697
        %3723 = vst.msk [vmem:[#allocation3 + $0x14] sm:$0xf] %vm2045, %v3699
        %3724 = vst.msk [vmem:[#allocation3 + $0x18] sm:$0xf] %vm2045, %v3701
        %3725 = vst.msk [vmem:[#allocation3 + $0x1c] sm:$0xf] %vm2045, %v3703
        %3726 = vst.msk [vmem:[#allocation3 + $0x20] sm:$0xf] %vm2045, %v3705
        %3727 = vst.msk [vmem:[#allocation3 + $0x24] sm:$0xf] %vm2045, %v3707
        %v3728 = vld [vmem:[#allocation3] sm:$0xf]
        %v3729 = vld [vmem:[#allocation3 + $0x4] sm:$0xf]
        %v3730 = vld [vmem:[#allocation3 + $0x8] sm:$0xf]
        %v3731 = vld [vmem:[#allocation3 + $0xc] sm:$0xf]
        %v3732 = vld [vmem:[#allocation3 + $0x10] sm:$0xf]
        %v3733 = vld [vmem:[#allocation3 + $0x14] sm:$0xf]
        %v3734 = vld [vmem:[#allocation3 + $0x18] sm:$0xf]
        %v3735 = vld [vmem:[#allocation3 + $0x1c] sm:$0xf]
        %s3736 = scalar_lea.vmem %s5, 288
        %v3737 = vld [vmem:[%s3736] sm:$0xf]
        %v3738 = vld [vmem:[%s3736 + $0x4] sm:$0xf]
        %v3739 = vld [vmem:[%s3736 + $0x8] sm:$0xf]
        %v3740 = vld [vmem:[%s3736 + $0xc] sm:$0xf]
        %v3741 = vld [vmem:[%s3736 + $0x10] sm:$0xf]
        %v3742 = vld [vmem:[%s3736 + $0x14] sm:$0xf]
        %v3743 = vld [vmem:[%s3736 + $0x18] sm:$0xf]
        %v3744 = vld [vmem:[%s3736 + $0x1c] sm:$0xf]
        %v3745 = vld [vmem:[%s3736 + $0x20] sm:$0xf]
        %v3746 = vld [vmem:[%s3736 + $0x24] sm:$0xf]
        %v3747 = vld [vmem:[%s3736 + $0x28] sm:$0xf]
        %v3748 = vld [vmem:[%s3736 + $0x2c] sm:$0xf]
        %v3757 = vunpack.c.l.b16 %v3728
        %v3758 = vunpack.c.l.b16 %v3729
        %v3759 = vunpack.c.l.b16 %v3730
        %v3760 = vunpack.c.l.b16 %v3731
        %v3761 = vunpack.c.l.b16 %v3732
        %v3762 = vunpack.c.l.b16 %v3733
        %v3763 = vunpack.c.l.b16 %v3734
        %v3764 = vunpack.c.l.b16 %v3735
        %v3765 = vpack.c.b16 %v3758, %v3757
        %v3766 = vpack.c.b16 %v3760, %v3759
        %v3767 = vpack.c.b16 %v3762, %v3761
        %v3768 = vpack.c.b16 %v3764, %v3763
        %v3781 = vunpack.c.l.b16 %v3737
        %v3782 = vunpack.c.l.b16 %v3738
        %v3783 = vunpack.c.l.b16 %v3739
        %v3784 = vunpack.c.l.b16 %v3740
        %v3785 = vunpack.c.l.b16 %v3741
        %v3786 = vunpack.c.l.b16 %v3742
        %v3787 = vunpack.c.l.b16 %v3743
        %v3788 = vunpack.c.l.b16 %v3744
        %v3789 = vunpack.c.l.b16 %v3745
        %v3790 = vunpack.c.l.b16 %v3746
        %v3791 = vunpack.c.l.b16 %v3747
        %v3792 = vunpack.c.l.b16 %v3748
        %v3793 = vpack.c.b16 %v3782, %v3781
        %v3794 = vpack.c.b16 %v3784, %v3783
        %v3795 = vpack.c.b16 %v3786, %v3785
        %v3796 = vpack.c.b16 %v3788, %v3787
        %v3797 = vpack.c.b16 %v3790, %v3789
        %v3798 = vpack.c.b16 %v3792, %v3791
        %v3806 = vsel %vm2154, %v3765, 0
        %v3809 = vsel %vm2154, %v3766, 0
        %v3812 = vsel %vm2154, %v3767, 0
        %v3815 = vsel %vm2154, %v3768, 0
        %3817 = vmatprep.subr.bf16.mxu0 0
        %3818 = vmatpush1.bf16.msra.mxu0 0
        %3819 = vmatprep.subr.bf16.mxu0 0
        %3820 = vmatpush1.bf16.msra.mxu0 0
        %3821 = vmatprep.subr.bf16.mxu0 0
        %3822 = vmatpush1.bf16.msra.mxu0 %v3798
        %3823 = vmatprep.subr.bf16.mxu0 0
        %3824 = vmatpush1.bf16.msra.mxu0 %v3797
        %3825 = vmatprep.subr.bf16.mxu0 0
        %3826 = vmatpush1.bf16.msra.mxu0 %v3796
        %3827 = vmatprep.subr.bf16.mxu0 0
        %3828 = vmatpush1.bf16.msra.mxu0 %v3795
        %3829 = vmatprep.subr.bf16.mxu0 0
        %3830 = vmatpush1.bf16.msra.mxu0 %v3794
        %3831 = vmatprep.subr.bf16.mxu0 0
        %3832 = vmatpush1.bf16.msra.mxu0 %v3793
        %3833 = vmatprep.subr.bf16.mxu0 0
        %3834 = vmatpush2.bf16.msra.mxu0 0
        %3835 = vmatprep.subr.bf16.mxu0 0
        %3836 = vmatpush2.bf16.msra.mxu0 0
        %3837 = vmatprep.subr.bf16.mxu0 0
        %3838 = vmatpush2.bf16.msra.mxu0 0
        %3839 = vmatprep.subr.bf16.mxu0 0
        %3840 = vmatpush2.bf16.msra.mxu0 0
        %3841 = vmatprep.subr.bf16.mxu0 0
        %3842 = vmatpush2.bf16.msra.mxu0 0
        %3843 = vmatprep.subr.bf16.mxu0 0
        %3844 = vmatpush2.bf16.msra.mxu0 0
        %3845 = vmatprep.subr.bf16.mxu0 0
        %3846 = vmatpush2.bf16.msra.mxu0 0
        %3847 = vmatprep.subr.bf16.mxu0 0
        %3848 = vmatpush2.bf16.msra.mxu0 0
        %3849 = vmatprep.mubr.bf16.mxu0 0
        %3850 = vmatmul.mubr.bf16.gmra.mxu0 %v3806
        %v3851 = vpop.f32.mrf.mxu0
        %v3852 = vadd.f32 0.0, %v3851
        %v3853 = vpop.f32.mrf.mxu0
        %v3854 = vpop.f32.mrf.mxu0
        %v3855 = vadd.f32 0.0, %v3854
        %v3856 = vpop.f32.mrf.mxu0
        %3857 = vmatprep.mubr.bf16.mxu0 0
        %3858 = vmatmul.mubr.bf16.gmra.mxu0 %v3809
        %v3859 = vpop.f32.mrf.mxu0
        %v3860 = vadd.f32 0.0, %v3859
        %v3861 = vpop.f32.mrf.mxu0
        %v3862 = vpop.f32.mrf.mxu0
        %v3863 = vadd.f32 0.0, %v3862
        %v3864 = vpop.f32.mrf.mxu0
        %3865 = vmatprep.mubr.bf16.mxu0 0
        %3866 = vmatmul.mubr.bf16.gmra.mxu0 %v3812
        %v3867 = vpop.f32.mrf.mxu0
        %v3868 = vadd.f32 0.0, %v3867
        %v3869 = vpop.f32.mrf.mxu0
        %v3870 = vpop.f32.mrf.mxu0
        %v3871 = vadd.f32 0.0, %v3870
        %v3872 = vpop.f32.mrf.mxu0
        %3873 = vmatprep.mubr.bf16.mxu0 0
        %3874 = vmatmul.mubr.bf16.gmra.mxu0 %v3815
        %v3875 = vpop.f32.mrf.mxu0
        %v3876 = vadd.f32 0.0, %v3875
        %v3877 = vpop.f32.mrf.mxu0
        %v3878 = vpop.f32.mrf.mxu0
        %v3879 = vadd.f32 0.0, %v3878
        %v3880 = vpop.f32.mrf.mxu0
        %3881 = vdwg.mxu0
        %v3882 = vadd.f32 %v3363, %v3852
        %v3883 = vadd.f32 %v3364, %v3855
        %v3884 = vadd.f32 %v3365, %v3860
        %v3885 = vadd.f32 %v3366, %v3863
        %v3886 = vadd.f32 %v3367, %v3868
        %v3887 = vadd.f32 %v3368, %v3871
        %v3888 = vadd.f32 %v3369, %v3876
        %v3889 = vadd.f32 %v3370, %v3879
        %v3890 = vld [vmem:[%s2076] sm:$0xf]
        %v3891 = vld [vmem:[%s2076 + $0x4] sm:$0xf]
        %v3892 = vld [vmem:[%s2076 + $0x8] sm:$0xf]
        %v3893 = vld [vmem:[%s2076 + $0xc] sm:$0xf]
        %v3894 = vld [vmem:[%s2076 + $0x10] sm:$0xf]
        %v3895 = vld [vmem:[%s2076 + $0x14] sm:$0xf]
        %v3896 = vld [vmem:[%s2076 + $0x18] sm:$0xf]
        %v3897 = vld [vmem:[%s2076 + $0x1c] sm:$0xf]
        %s3898 = scalar_lea.vmem %s5, 336
        %v3899 = vld [vmem:[%s3898] sm:$0xf]
        %v3900 = vld [vmem:[%s3898 + $0x4] sm:$0xf]
        %v3901 = vld [vmem:[%s3898 + $0x8] sm:$0xf]
        %v3902 = vld [vmem:[%s3898 + $0xc] sm:$0xf]
        %v3903 = vld [vmem:[%s3898 + $0x10] sm:$0xf]
        %v3904 = vld [vmem:[%s3898 + $0x14] sm:$0xf]
        %v3905 = vld [vmem:[%s3898 + $0x18] sm:$0xf]
        %v3906 = vld [vmem:[%s3898 + $0x1c] sm:$0xf]
        %v3907 = vld [vmem:[%s3898 + $0x20] sm:$0xf]
        %v3908 = vld [vmem:[%s3898 + $0x24] sm:$0xf]
        %v3909 = vld [vmem:[%s3898 + $0x28] sm:$0xf]
        %v3910 = vld [vmem:[%s3898 + $0x2c] sm:$0xf]
        %v3919 = vunpack.c.l.b16 %v3890
        %v3920 = vunpack.c.l.b16 %v3891
        %v3921 = vunpack.c.l.b16 %v3892
        %v3922 = vunpack.c.l.b16 %v3893
        %v3923 = vunpack.c.l.b16 %v3894
        %v3924 = vunpack.c.l.b16 %v3895
        %v3925 = vunpack.c.l.b16 %v3896
        %v3926 = vunpack.c.l.b16 %v3897
        %v3927 = vpack.c.b16 %v3920, %v3919
        %v3928 = vpack.c.b16 %v3922, %v3921
        %v3929 = vpack.c.b16 %v3924, %v3923
        %v3930 = vpack.c.b16 %v3926, %v3925
        %v3943 = vunpack.c.l.b16 %v3899
        %v3944 = vunpack.c.l.b16 %v3900
        %v3945 = vunpack.c.l.b16 %v3901
        %v3946 = vunpack.c.l.b16 %v3902
        %v3947 = vunpack.c.l.b16 %v3903
        %v3948 = vunpack.c.l.b16 %v3904
        %v3949 = vunpack.c.l.b16 %v3905
        %v3950 = vunpack.c.l.b16 %v3906
        %v3951 = vunpack.c.l.b16 %v3907
        %v3952 = vunpack.c.l.b16 %v3908
        %v3953 = vunpack.c.l.b16 %v3909
        %v3954 = vunpack.c.l.b16 %v3910
        %v3955 = vpack.c.b16 %v3944, %v3943
        %v3956 = vpack.c.b16 %v3946, %v3945
        %v3957 = vpack.c.b16 %v3948, %v3947
        %v3958 = vpack.c.b16 %v3950, %v3949
        %v3959 = vpack.c.b16 %v3952, %v3951
        %v3960 = vpack.c.b16 %v3954, %v3953
        %v3968 = vsel %vm2154, %v3927, 0
        %v3971 = vsel %vm2154, %v3928, 0
        %v3974 = vsel %vm2154, %v3929, 0
        %v3977 = vsel %vm2154, %v3930, 0
        %3979 = vmatprep.subr.bf16.mxu0 0
        %3980 = vmatpush1.bf16.msra.mxu0 0
        %3981 = vmatprep.subr.bf16.mxu0 0
        %3982 = vmatpush1.bf16.msra.mxu0 0
        %3983 = vmatprep.subr.bf16.mxu0 0
        %3984 = vmatpush1.bf16.msra.mxu0 %v3960
        %3985 = vmatprep.subr.bf16.mxu0 0
        %3986 = vmatpush1.bf16.msra.mxu0 %v3959
        %3987 = vmatprep.subr.bf16.mxu0 0
        %3988 = vmatpush1.bf16.msra.mxu0 %v3958
        %3989 = vmatprep.subr.bf16.mxu0 0
        %3990 = vmatpush1.bf16.msra.mxu0 %v3957
        %3991 = vmatprep.subr.bf16.mxu0 0
        %3992 = vmatpush1.bf16.msra.mxu0 %v3956
        %3993 = vmatprep.subr.bf16.mxu0 0
        %3994 = vmatpush1.bf16.msra.mxu0 %v3955
        %3995 = vmatprep.subr.bf16.mxu0 0
        %3996 = vmatpush2.bf16.msra.mxu0 0
        %3997 = vmatprep.subr.bf16.mxu0 0
        %3998 = vmatpush2.bf16.msra.mxu0 0
        %3999 = vmatprep.subr.bf16.mxu0 0
        %4000 = vmatpush2.bf16.msra.mxu0 0
        %4001 = vmatprep.subr.bf16.mxu0 0
        %4002 = vmatpush2.bf16.msra.mxu0 0
        %4003 = vmatprep.subr.bf16.mxu0 0
        %4004 = vmatpush2.bf16.msra.mxu0 0
        %4005 = vmatprep.subr.bf16.mxu0 0
        %4006 = vmatpush2.bf16.msra.mxu0 0
        %4007 = vmatprep.subr.bf16.mxu0 0
        %4008 = vmatpush2.bf16.msra.mxu0 0
        %4009 = vmatprep.subr.bf16.mxu0 0
        %4010 = vmatpush2.bf16.msra.mxu0 0
        %4011 = vmatprep.mubr.bf16.mxu0 0
        %4012 = vmatmul.mubr.bf16.gmra.mxu0 %v3968
        %v4013 = vpop.f32.mrf.mxu0
        %v4014 = vadd.f32 0.0, %v4013
        %v4015 = vpop.f32.mrf.mxu0
        %v4016 = vpop.f32.mrf.mxu0
        %v4017 = vadd.f32 0.0, %v4016
        %v4018 = vpop.f32.mrf.mxu0
        %4019 = vmatprep.mubr.bf16.mxu0 0
        %4020 = vmatmul.mubr.bf16.gmra.mxu0 %v3971
        %v4021 = vpop.f32.mrf.mxu0
        %v4022 = vadd.f32 0.0, %v4021
        %v4023 = vpop.f32.mrf.mxu0
        %v4024 = vpop.f32.mrf.mxu0
        %v4025 = vadd.f32 0.0, %v4024
        %v4026 = vpop.f32.mrf.mxu0
        %4027 = vmatprep.mubr.bf16.mxu0 0
        %4028 = vmatmul.mubr.bf16.gmra.mxu0 %v3974
        %v4029 = vpop.f32.mrf.mxu0
        %v4030 = vadd.f32 0.0, %v4029
        %v4031 = vpop.f32.mrf.mxu0
        %v4032 = vpop.f32.mrf.mxu0
        %v4033 = vadd.f32 0.0, %v4032
        %v4034 = vpop.f32.mrf.mxu0
        %4035 = vmatprep.mubr.bf16.mxu0 0
        %4036 = vmatmul.mubr.bf16.gmra.mxu0 %v3977
        %v4037 = vpop.f32.mrf.mxu0
        %v4038 = vadd.f32 0.0, %v4037
        %v4039 = vpop.f32.mrf.mxu0
        %v4040 = vpop.f32.mrf.mxu0
        %v4041 = vadd.f32 0.0, %v4040
        %v4042 = vpop.f32.mrf.mxu0
        %4043 = vdwg.mxu0
        %v4044 = vadd.f32 %v3882, %v4014
        %v4045 = vadd.f32 %v3883, %v4017
        %v4046 = vadd.f32 %v3884, %v4022
        %v4047 = vadd.f32 %v3885, %v4025
        %v4048 = vadd.f32 %v3886, %v4030
        %v4049 = vadd.f32 %v3887, %v4033
        %v4050 = vadd.f32 %v3888, %v4038
        %v4051 = vadd.f32 %v3889, %v4041
        %v4052 = vld [vmem:[%s2365] sm:$0xf]
        %v4053 = vld [vmem:[%s2365 + $0x4] sm:$0xf]
        %v4054 = vld [vmem:[%s2365 + $0x8] sm:$0xf]
        %v4055 = vld [vmem:[%s2365 + $0xc] sm:$0xf]
        %v4056 = vld [vmem:[%s2365 + $0x10] sm:$0xf]
        %v4057 = vld [vmem:[%s2365 + $0x14] sm:$0xf]
        %v4058 = vld [vmem:[%s2365 + $0x18] sm:$0xf]
        %v4059 = vld [vmem:[%s2365 + $0x1c] sm:$0xf]
        %s4060 = scalar_lea.vmem %s5, 384
        %v4061 = vld [vmem:[%s4060] sm:$0xf]
        %v4062 = vld [vmem:[%s4060 + $0x4] sm:$0xf]
        %v4063 = vld [vmem:[%s4060 + $0x8] sm:$0xf]
        %v4064 = vld [vmem:[%s4060 + $0xc] sm:$0xf]
        %v4065 = vld [vmem:[%s4060 + $0x10] sm:$0xf]
        %v4066 = vld [vmem:[%s4060 + $0x14] sm:$0xf]
        %v4067 = vld [vmem:[%s4060 + $0x18] sm:$0xf]
        %v4068 = vld [vmem:[%s4060 + $0x1c] sm:$0xf]
        %v4069 = vld [vmem:[%s4060 + $0x20] sm:$0xf]
        %v4070 = vld [vmem:[%s4060 + $0x24] sm:$0xf]
        %v4071 = vld [vmem:[%s4060 + $0x28] sm:$0xf]
        %v4072 = vld [vmem:[%s4060 + $0x2c] sm:$0xf]
        %v4081 = vunpack.c.l.b16 %v4052
        %v4082 = vunpack.c.l.b16 %v4053
        %v4083 = vunpack.c.l.b16 %v4054
        %v4084 = vunpack.c.l.b16 %v4055
        %v4085 = vunpack.c.l.b16 %v4056
        %v4086 = vunpack.c.l.b16 %v4057
        %v4087 = vunpack.c.l.b16 %v4058
        %v4088 = vunpack.c.l.b16 %v4059
        %v4089 = vpack.c.b16 %v4082, %v4081
        %v4090 = vpack.c.b16 %v4084, %v4083
        %v4091 = vpack.c.b16 %v4086, %v4085
        %v4092 = vpack.c.b16 %v4088, %v4087
        %v4105 = vunpack.c.l.b16 %v4061
        %v4106 = vunpack.c.l.b16 %v4062
        %v4107 = vunpack.c.l.b16 %v4063
        %v4108 = vunpack.c.l.b16 %v4064
        %v4109 = vunpack.c.l.b16 %v4065
        %v4110 = vunpack.c.l.b16 %v4066
        %v4111 = vunpack.c.l.b16 %v4067
        %v4112 = vunpack.c.l.b16 %v4068
        %v4113 = vunpack.c.l.b16 %v4069
        %v4114 = vunpack.c.l.b16 %v4070
        %v4115 = vunpack.c.l.b16 %v4071
        %v4116 = vunpack.c.l.b16 %v4072
        %v4117 = vpack.c.b16 %v4106, %v4105
        %v4118 = vpack.c.b16 %v4108, %v4107
        %v4119 = vpack.c.b16 %v4110, %v4109
        %v4120 = vpack.c.b16 %v4112, %v4111
        %v4121 = vpack.c.b16 %v4114, %v4113
        %v4122 = vpack.c.b16 %v4116, %v4115
        %v4130 = vsel %vm2154, %v4089, 0
        %v4133 = vsel %vm2154, %v4090, 0
        %v4136 = vsel %vm2154, %v4091, 0
        %v4139 = vsel %vm2154, %v4092, 0
        %4141 = vmatprep.subr.bf16.mxu0 0
        %4142 = vmatpush1.bf16.msra.mxu0 0
        %4143 = vmatprep.subr.bf16.mxu0 0
        %4144 = vmatpush1.bf16.msra.mxu0 0
        %4145 = vmatprep.subr.bf16.mxu0 0
        %4146 = vmatpush1.bf16.msra.mxu0 %v4122
        %4147 = vmatprep.subr.bf16.mxu0 0
        %4148 = vmatpush1.bf16.msra.mxu0 %v4121
        %4149 = vmatprep.subr.bf16.mxu0 0
        %4150 = vmatpush1.bf16.msra.mxu0 %v4120
        %4151 = vmatprep.subr.bf16.mxu0 0
        %4152 = vmatpush1.bf16.msra.mxu0 %v4119
        %4153 = vmatprep.subr.bf16.mxu0 0
        %4154 = vmatpush1.bf16.msra.mxu0 %v4118
        %4155 = vmatprep.subr.bf16.mxu0 0
        %4156 = vmatpush1.bf16.msra.mxu0 %v4117
        %4157 = vmatprep.subr.bf16.mxu0 0
        %4158 = vmatpush2.bf16.msra.mxu0 0
        %4159 = vmatprep.subr.bf16.mxu0 0
        %4160 = vmatpush2.bf16.msra.mxu0 0
        %4161 = vmatprep.subr.bf16.mxu0 0
        %4162 = vmatpush2.bf16.msra.mxu0 0
        %4163 = vmatprep.subr.bf16.mxu0 0
        %4164 = vmatpush2.bf16.msra.mxu0 0
        %4165 = vmatprep.subr.bf16.mxu0 0
        %4166 = vmatpush2.bf16.msra.mxu0 0
        %4167 = vmatprep.subr.bf16.mxu0 0
        %4168 = vmatpush2.bf16.msra.mxu0 0
        %4169 = vmatprep.subr.bf16.mxu0 0
        %4170 = vmatpush2.bf16.msra.mxu0 0
        %4171 = vmatprep.subr.bf16.mxu0 0
        %4172 = vmatpush2.bf16.msra.mxu0 0
        %4173 = vmatprep.mubr.bf16.mxu0 0
        %4174 = vmatmul.mubr.bf16.gmra.mxu0 %v4130
        %v4175 = vpop.f32.mrf.mxu0
        %v4176 = vadd.f32 0.0, %v4175
        %v4177 = vpop.f32.mrf.mxu0
        %v4178 = vpop.f32.mrf.mxu0
        %v4179 = vadd.f32 0.0, %v4178
        %v4180 = vpop.f32.mrf.mxu0
        %4181 = vmatprep.mubr.bf16.mxu0 0
        %4182 = vmatmul.mubr.bf16.gmra.mxu0 %v4133
        %v4183 = vpop.f32.mrf.mxu0
        %v4184 = vadd.f32 0.0, %v4183
        %v4185 = vpop.f32.mrf.mxu0
        %v4186 = vpop.f32.mrf.mxu0
        %v4187 = vadd.f32 0.0, %v4186
        %v4188 = vpop.f32.mrf.mxu0
        %4189 = vmatprep.mubr.bf16.mxu0 0
        %4190 = vmatmul.mubr.bf16.gmra.mxu0 %v4136
        %v4191 = vpop.f32.mrf.mxu0
        %v4192 = vadd.f32 0.0, %v4191
        %v4193 = vpop.f32.mrf.mxu0
        %v4194 = vpop.f32.mrf.mxu0
        %v4195 = vadd.f32 0.0, %v4194
        %v4196 = vpop.f32.mrf.mxu0
        %4197 = vmatprep.mubr.bf16.mxu0 0
        %4198 = vmatmul.mubr.bf16.gmra.mxu0 %v4139
        %v4199 = vpop.f32.mrf.mxu0
        %v4200 = vadd.f32 0.0, %v4199
        %v4201 = vpop.f32.mrf.mxu0
        %v4202 = vpop.f32.mrf.mxu0
        %v4203 = vadd.f32 0.0, %v4202
        %v4204 = vpop.f32.mrf.mxu0
        %4205 = vdwg.mxu0
        %v4206 = vadd.f32 %v4044, %v4176
        %v4207 = vadd.f32 %v4045, %v4179
        %v4208 = vadd.f32 %v4046, %v4184
        %v4209 = vadd.f32 %v4047, %v4187
        %v4210 = vadd.f32 %v4048, %v4192
        %v4211 = vadd.f32 %v4049, %v4195
        %v4212 = vadd.f32 %v4050, %v4200
        %v4213 = vadd.f32 %v4051, %v4203
        %v4214 = vld [vmem:[%s6] sm:$0x1]
        %v4216 = vlaneseq
        %v4217 = vshrl.u32 %v4216, 7
        %v4218 = vsub.s32 0, %v4217
        %v4219 = vrot.slane %v4214, %v4218
        %v4221 = vadd.f32 %v4206, %v4219
        %v4222 = vadd.f32 %v4207, %v4219
        %v4223 = vadd.f32 %v4208, %v4219
        %v4224 = vadd.f32 %v4209, %v4219
        %v4225 = vadd.f32 %v4210, %v4219
        %v4226 = vadd.f32 %v4211, %v4219
        %v4227 = vadd.f32 %v4212, %v4219
        %v4228 = vadd.f32 %v4213, %v4219
        %v4229 = vld [vmem:[%s7] sm:$0x1]
        %v4230 = vmul.f32 %v4221, %v4221
        %v4231 = vmul.f32 %v4222, %v4222
        %v4232 = vmul.f32 %v4223, %v4223
        %v4233 = vmul.f32 %v4224, %v4224
        %v4234 = vmul.f32 %v4225, %v4225
        %v4235 = vmul.f32 %v4226, %v4226
        %v4236 = vmul.f32 %v4227, %v4227
        %v4237 = vmul.f32 %v4228, %v4228
        %vm4238 = vcmask 261120
        %v4239 = vsel %vm4238, %v4230, 0.0
        %4240 = vadd.xlane.f32.xlu0 %v4239
        %v4241 = vpop.xlane.xlu0 %4240
        %v4242 = vsel %vm4238, %v4231, 0.0
        %4243 = vadd.xlane.f32.xlu0 %v4242
        %v4244 = vpop.xlane.xlu0 %4243
        %v4245 = vsel %vm4238, %v4232, 0.0
        %4246 = vadd.xlane.f32.xlu0 %v4245
        %v4247 = vpop.xlane.xlu0 %4246
        %v4248 = vsel %vm4238, %v4233, 0.0
        %4249 = vadd.xlane.f32.xlu0 %v4248
        %v4250 = vpop.xlane.xlu0 %4249
        %v4251 = vsel %vm4238, %v4234, 0.0
        %4252 = vadd.xlane.f32.xlu0 %v4251
        %v4253 = vpop.xlane.xlu0 %4252
        %v4254 = vsel %vm4238, %v4235, 0.0
        %4255 = vadd.xlane.f32.xlu0 %v4254
        %v4256 = vpop.xlane.xlu0 %4255
        %v4257 = vsel %vm4238, %v4236, 0.0
        %4258 = vadd.xlane.f32.xlu0 %v4257
        %v4259 = vpop.xlane.xlu0 %4258
        %v4260 = vsel %vm4238, %v4237, 0.0
        %4261 = vadd.xlane.f32.xlu0 %v4260
        %v4262 = vpop.xlane.xlu0 %4261
        %v4263 = vrcp.pop 32.0
        %v4264 = vmul.f32 %v4241, %v4263
        %v4265 = vmul.f32 %v4244, %v4263
        %v4266 = vmul.f32 %v4247, %v4263
        %v4267 = vmul.f32 %v4250, %v4263
        %v4268 = vmul.f32 %v4253, %v4263
        %v4269 = vmul.f32 %v4256, %v4263
        %v4270 = vmul.f32 %v4259, %v4263
        %v4271 = vmul.f32 %v4262, %v4263
        %v4272 = vadd.f32 %v4264, 1e-06
        %v4273 = vadd.f32 %v4265, 1e-06
        %v4274 = vadd.f32 %v4266, 1e-06
        %v4275 = vadd.f32 %v4267, 1e-06
        %v4276 = vadd.f32 %v4268, 1e-06
        %v4277 = vadd.f32 %v4269, 1e-06
        %v4278 = vadd.f32 %v4270, 1e-06
        %v4279 = vadd.f32 %v4271, 1e-06
        %v4280 = vrsqrt.pop %v4272
        %v4281 = vrsqrt.pop %v4273
        %v4282 = vrsqrt.pop %v4274
        %v4283 = vrsqrt.pop %v4275
        %v4284 = vrsqrt.pop %v4276
        %v4285 = vrsqrt.pop %v4277
        %v4286 = vrsqrt.pop %v4278
        %v4287 = vrsqrt.pop %v4279
        %v4288 = vmul.f32 %v4221, %v4280
        %v4289 = vmul.f32 %v4222, %v4281
        %v4290 = vmul.f32 %v4223, %v4282
        %v4291 = vmul.f32 %v4224, %v4283
        %v4292 = vmul.f32 %v4225, %v4284
        %v4293 = vmul.f32 %v4226, %v4285
        %v4294 = vmul.f32 %v4227, %v4286
        %v4295 = vmul.f32 %v4228, %v4287
        %v4297 = vlaneseq
        %v4298 = vshrl.u32 %v4297, 7
        %v4299 = vsub.s32 0, %v4298
        %v4300 = vrot.slane %v4229, %v4299
        %v4302 = vmul.f32 %v4288, %v4300
        %v4303 = vmul.f32 %v4289, %v4300
        %v4304 = vmul.f32 %v4290, %v4300
        %v4305 = vmul.f32 %v4291, %v4300
        %v4306 = vmul.f32 %v4292, %v4300
        %v4307 = vmul.f32 %v4293, %v4300
        %v4308 = vmul.f32 %v4294, %v4300
        %v4309 = vmul.f32 %v4295, %v4300
        %vm4310 = vcmp.ge.f32.partialorder %v4302, 0.0
        %vm4311 = vcmp.ge.f32.partialorder %v4303, 0.0
        %vm4312 = vcmp.ge.f32.partialorder %v4304, 0.0
        %vm4313 = vcmp.ge.f32.partialorder %v4305, 0.0
        %vm4314 = vcmp.ge.f32.partialorder %v4306, 0.0
        %vm4315 = vcmp.ge.f32.partialorder %v4307, 0.0
        %vm4316 = vcmp.ge.f32.partialorder %v4308, 0.0
        %vm4317 = vcmp.ge.f32.partialorder %v4309, 0.0
        %v4318 = vmul.f32 %v4302, 0.01
        %v4319 = vmul.f32 %v4303, 0.01
        %v4320 = vmul.f32 %v4304, 0.01
        %v4321 = vmul.f32 %v4305, 0.01
        %v4322 = vmul.f32 %v4306, 0.01
        %v4323 = vmul.f32 %v4307, 0.01
        %v4324 = vmul.f32 %v4308, 0.01
        %v4325 = vmul.f32 %v4309, 0.01
        %v4326 = vsel %vm4310, %v4302, %v4318
        %v4327 = vsel %vm4311, %v4303, %v4319
        %v4328 = vsel %vm4312, %v4304, %v4320
        %v4329 = vsel %vm4313, %v4305, %v4321
        %v4330 = vsel %vm4314, %v4306, %v4322
        %v4331 = vsel %vm4315, %v4307, %v4323
        %v4332 = vsel %vm4316, %v4308, %v4324
        %v4333 = vsel %vm4317, %v4309, %v4325
        %v4334 = vpack.c.bf16 %v4327, %v4326
        %v4335 = vpack.c.bf16 %v4329, %v4328
        %v4336 = vpack.c.bf16 %v4331, %v4330
        %v4337 = vpack.c.bf16 %v4333, %v4332
        %v4338 = vld [vmem:[%s8] sm:$0xf]
        %v4339 = vld [vmem:[%s8 + $0x4] sm:$0xf]
        %v4340 = vld [vmem:[%s8 + $0x8] sm:$0xf]
        %v4341 = vld [vmem:[%s8 + $0xc] sm:$0xf]
        %v4342 = vld [vmem:[%s398] sm:$0xff]
        %v4343 = vld [vmem:[%s398 + $0x8] sm:$0xff]
        %v4344 = vld [vmem:[%s398 + $0x10] sm:$0xff]
        %v4345 = vld [vmem:[%s398 + $0x18] sm:$0xff]
        %v4346 = vld [vmem:[%s398 + $0x20] sm:$0xff]
        %v4347 = vld [vmem:[%s398 + $0x28] sm:$0xff]
        %v4348 = vld [vmem:[%s398 + $0x30] sm:$0xff]
        %v4349 = vld [vmem:[%s398 + $0x38] sm:$0xff]
        %v4354 = vunpack.c.l.b16 %v4338
        %v4355 = vunpack.c.l.b16 %v4339
        %v4356 = vunpack.c.l.b16 %v4340
        %v4357 = vunpack.c.l.b16 %v4341
        %v4358 = vpack.c.b16 %v4355, %v4354
        %v4359 = vpack.c.b16 %v4357, %v4356
        %v4363 = vsel %vm4238, %v4334, 0
        %v4366 = vsel %vm4238, %v4335, 0
        %v4369 = vsel %vm4238, %v4336, 0
        %v4372 = vsel %vm4238, %v4337, 0
        %4374 = vmatprep.subr.bf16.mxu0 0
        %4375 = vmatpush1.bf16.msra.mxu0 0
        %4376 = vmatprep.subr.bf16.mxu0 0
        %4377 = vmatpush1.bf16.msra.mxu0 0
        %4378 = vmatprep.subr.bf16.mxu0 0
        %4379 = vmatpush1.bf16.msra.mxu0 0
        %4380 = vmatprep.subr.bf16.mxu0 0
        %4381 = vmatpush1.bf16.msra.mxu0 0
        %4382 = vmatprep.subr.bf16.mxu0 0
        %4383 = vmatpush1.bf16.msra.mxu0 0
        %4384 = vmatprep.subr.bf16.mxu0 0
        %4385 = vmatpush1.bf16.msra.mxu0 0
        %4386 = vmatprep.subr.bf16.mxu0 0
        %4387 = vmatpush1.bf16.msra.mxu0 %v4359
        %4388 = vmatprep.subr.bf16.mxu0 0
        %4389 = vmatpush1.bf16.msra.mxu0 %v4358
        %4390 = vmatprep.subr.bf16.mxu0 0
        %4391 = vmatpush2.bf16.msra.mxu0 0
        %4392 = vmatprep.subr.bf16.mxu0 0
        %4393 = vmatpush2.bf16.msra.mxu0 0
        %4394 = vmatprep.subr.bf16.mxu0 0
        %4395 = vmatpush2.bf16.msra.mxu0 0
        %4396 = vmatprep.subr.bf16.mxu0 0
        %4397 = vmatpush2.bf16.msra.mxu0 0
        %4398 = vmatprep.subr.bf16.mxu0 0
        %4399 = vmatpush2.bf16.msra.mxu0 0
        %4400 = vmatprep.subr.bf16.mxu0 0
        %4401 = vmatpush2.bf16.msra.mxu0 0
        %4402 = vmatprep.subr.bf16.mxu0 0
        %4403 = vmatpush2.bf16.msra.mxu0 0
        %4404 = vmatprep.subr.bf16.mxu0 0
        %4405 = vmatpush2.bf16.msra.mxu0 0
        %4406 = vmatprep.mubr.bf16.mxu0 0
        %4407 = vmatmul.mubr.bf16.gmra.mxu0 %v4363
        %v4408 = vpop.f32.mrf.mxu0
        %v4409 = vadd.f32 %v4342, %v4408
        %v4410 = vpop.f32.mrf.mxu0
        %v4411 = vpop.f32.mrf.mxu0
        %v4412 = vadd.f32 %v4343, %v4411
        %v4413 = vpop.f32.mrf.mxu0
        %4414 = vmatprep.mubr.bf16.mxu0 0
        %4415 = vmatmul.mubr.bf16.gmra.mxu0 %v4366
        %v4416 = vpop.f32.mrf.mxu0
        %v4417 = vadd.f32 %v4344, %v4416
        %v4418 = vpop.f32.mrf.mxu0
        %v4419 = vpop.f32.mrf.mxu0
        %v4420 = vadd.f32 %v4345, %v4419
        %v4421 = vpop.f32.mrf.mxu0
        %4422 = vmatprep.mubr.bf16.mxu0 0
        %4423 = vmatmul.mubr.bf16.gmra.mxu0 %v4369
        %v4424 = vpop.f32.mrf.mxu0
        %v4425 = vadd.f32 %v4346, %v4424
        %v4426 = vpop.f32.mrf.mxu0
        %v4427 = vpop.f32.mrf.mxu0
        %v4428 = vadd.f32 %v4347, %v4427
        %v4429 = vpop.f32.mrf.mxu0
        %4430 = vmatprep.mubr.bf16.mxu0 0
        %4431 = vmatmul.mubr.bf16.gmra.mxu0 %v4372
        %v4432 = vpop.f32.mrf.mxu0
        %v4433 = vadd.f32 %v4348, %v4432
        %v4434 = vpop.f32.mrf.mxu0
        %v4435 = vpop.f32.mrf.mxu0
        %v4436 = vadd.f32 %v4349, %v4435
        %v4437 = vpop.f32.mrf.mxu0
        %4438 = vdwg.mxu0
        %vm4439 = vcmask 130048
        %4440 = vst.msk [vmem:[%s389] sm:$0xff] %vm4439, %v4409
        %4441 = vst.msk [vmem:[%s389 + $0x8] sm:$0xff] %vm4439, %v4412
        %4442 = vst.msk [vmem:[%s389 + $0x10] sm:$0xff] %vm4439, %v4417
        %4443 = vst.msk [vmem:[%s389 + $0x18] sm:$0xff] %vm4439, %v4420
        %4444 = vst.msk [vmem:[%s389 + $0x20] sm:$0xff] %vm4439, %v4425
        %4445 = vst.msk [vmem:[%s389 + $0x28] sm:$0xff] %vm4439, %v4428
        %4446 = vst.msk [vmem:[%s389 + $0x30] sm:$0xff] %vm4439, %v4433
        %4447 = vst.msk [vmem:[%s389 + $0x38] sm:$0xff] %vm4439, %v4436
        %s4448 = sand.u32 %s254, 1
        %s4449 = scalar_lea.sflag [#allocation5], %s4448
        %s4450 = sand.u32 %s254, 1
        %s4451 = smul.addr %s4450, 64
        %s4452 = scalar_lea.vmem [#allocation4], %s4451
        // Predicated region
        $region73: #{resblock3d_forward.1} parent=55 // pred_check
          %p4453 = pneg %p264
        $region74: #{resblock3d_forward.1} parent=55 // pred_check_branch
          %4455 = sbr.rel (%p4453) target = $region76
        $region75: #{resblock3d_forward.1} parent=55 // pred_region
          %s4457 = ssub.s32 1024, 1024
          %4458 = vsyncadd %s4449, %s4457
          %s4459 = smul.addr %s28, 8
          %s4460 = smul.addr %s27, 32
          %s4461 = sadd.s32 %s4459, %s4460
          %s4462 = smul.addr %s4461, 128
          %s4463 = scalar_lea.hbm %s9, %s4462
          %s4464 = sshll.u32 %s4452, 4
          %s4465 = int_to_ptr.vmem [resolvable:$true] %s4464
          %4470 = dma.vmem_to_hbm [thread:$0]  %s4465, 1024, %s4463, %s4449, 128, 128, 8
        $region76: #{resblock3d_forward.1} parent=55 // pred_fallthru
          _
      $region56: #{resblock3d_forward.1} parent=5 // pred_fallthru
        _
      %p4471 = scmp.le.s32.totalorder 2, %s18
      // Predicated region
      $region77: #{resblock3d_forward.1} parent=5 // pred_check
        %p4472 = pneg %p4471
      $region78: #{resblock3d_forward.1} parent=5 // pred_check_branch
        %4474 = sbr.rel (%p4472) target = $region80
      $region79: #{resblock3d_forward.1} parent=5 // pred_region
        %s4475 = ssub.s32 %s18, 2
        // Predicated region
        $region81: #{resblock3d_forward.1} parent=79 // pred_check
          %p4476 = pneg %p270
        $region82: #{resblock3d_forward.1} parent=79 // pred_check_branch
          %4478 = sbr.rel (%p4476) target = $region84
        $region83: #{resblock3d_forward.1} parent=79 // pred_region
          %s4479 = sand.u32 %s255, 1
          %s4480 = scalar_lea.sflag [#allocation5], %s4479
          %s4481 = sand.u32 %s255, 1
          %s4482 = smul.addr %s4481, 64
          %s4483 = scalar_lea.vmem [#allocation4], %s4482
          %4484 = dma.done %s4480, 1024
        $region84: #{resblock3d_forward.1} parent=79 // pred_fallthru
          _
      $region80: #{resblock3d_forward.1} parent=5 // pred_fallthru
        _
    $region6: #{resblock3d_forward.1} parent=1 // loop_footer
      %s22 = sadd.s32 1, %s18
    $region7: #{resblock3d_forward.1} parent=1 // loop_footer_branch
      %17 = sbr.rel target = $region3
    $region8: #{resblock3d_forward.1} parent=1 // loop_exit
      _
    %4485 = vsyncpa [#allocation5], 1
    %s4486 = scalar_lea.sflag [#allocation5], 1
    %4487 = vsyncpa %s4486, 1

</llo_original>
